<compile_context>
chip_gen: v7x
topology: tpu7x:2x2x1
jax: 0.10.0
libtpu: 0.0.40
codegen_flags: <defaults>
</compile_context>

<pallas_src>
import functools

import jax
import jax.numpy as jnp
from jax import lax
from jax.experimental import pallas as pl
from jax.experimental.pallas import tpu as pltpu

NEG_SLOPE = 0.01    # nn.LeakyReLU / F.leaky_relu default
BN_EPS = 1e-5       # nn.BatchNorm2d default


def _leaky_relu(x, slope=NEG_SLOPE):
    return jnp.where(x >= 0, x, slope * x)


def _vmem_limit(nbytes):
    # generous margin, clamped to a range safe on v5e/v6e/v7x
    return int(min(max(4 * nbytes, 16 * 1024 * 1024), 48 * 1024 * 1024))


# ---------------------------------------------------------------------------
# Kernel A: fused conv3(+LeakyReLU) -> conv5(stride r) + residual 1x1(stride r)
#           + per-batch BN partial statistics.  One batch image per grid step.
# ---------------------------------------------------------------------------
def conv_block_kernel(x_ref, w1_ref, b1_ref, w2_ref, b2_ref, wres_ref, bres_ref,
                      y2_ref, res_ref, stats_ref, xpad_ref, y1pad_ref, *, r):
    # x_ref:    (1, H, W, Ci)
    # w1_ref:   (9*Ci, Co)    b1_ref: (1, Co)
    # w2_ref:   (25*Co, Co)   b2_ref: (1, Co)
    # wres_ref: (Ci, Co)      bres_ref: (1, Co)
    # y2_ref:   (1, Ho, Wo, Co)   pre-BN conv-branch output at stride r
    # res_ref:  (1, Ho, Wo, Co)   residual-branch output
    # stats_ref:(1, 2, Co)        [sum, sum-of-squares] of y2 over (Ho, Wo)
    # xpad_ref:  VMEM (H+2, W+2, Ci)   y1pad_ref: VMEM (H+4, W+4, Co)
    H, W = x_ref.shape[1], x_ref.shape[2]
    Ho, Wo, Co = y2_ref.shape[1], y2_ref.shape[2], y2_ref.shape[3]

    # ---- zero-padded copy of x into VMEM (padding handled in-kernel) --------
    xpad_ref[...] = jnp.zeros_like(xpad_ref)
    xpad_ref[1:1 + H, 1:1 + W, :] = x_ref[0]

    # ---- 3x3 conv (pad=1, stride=1) + bias + LeakyReLU, kept in VMEM --------
    # tap-concatenated im2col: one (H*W, 9*Ci) @ (9*Ci, Co) matmul.
    cols1 = [xpad_ref[kh:kh + H, kw:kw + W, :]
             for kh in range(3) for kw in range(3)]
    p1 = jnp.concatenate(cols1, axis=-1)                        # (H, W, 9*Ci)
    y1 = jnp.dot(p1, w1_ref[...], preferred_element_type=jnp.float32)
    y1 = _leaky_relu(y1 + b1_ref[...][None])                    # (H, W, Co)

    # y1 stays on-chip: write into a 2-halo VMEM scratch for the 5x5 conv.
    y1pad_ref[...] = jnp.zeros_like(y1pad_ref)
    y1pad_ref[2:2 + H, 2:2 + W, :] = y1

    # ---- 5x5 conv (pad=2), computed directly at stride r --------------------
    cols2 = [y1pad_ref[pl.ds(kh, Ho, stride=r), pl.ds(kw, Wo, stride=r), :]
             for kh in range(5) for kw in range(5)]
    p2 = jnp.concatenate(cols2, axis=-1)                        # (Ho, Wo, 25*Co)
    y2 = jnp.dot(p2, w2_ref[...], preferred_element_type=jnp.float32)
    y2 = y2 + b2_ref[...][None]                                 # pre-BN
    y2_ref[...] = y2[None]

    # ---- per-batch BN partial statistics -------------------------------------
    y2f = y2.reshape(Ho * Wo, Co)
    s = jnp.sum(y2f, axis=0, keepdims=True)                     # (1, Co)
    ss = jnp.sum(y2f * y2f, axis=0, keepdims=True)              # (1, Co)
    stats_ref[...] = jnp.concatenate([s, ss], axis=0)[None]     # (1, 2, Co)

    # ---- residual 1x1 conv, stride r: sample x straight from the VMEM copy --
    xs = xpad_ref[pl.ds(1, Ho, stride=r), pl.ds(1, Wo, stride=r), :]  # x[::r,::r]
    res = jnp.dot(xs, wres_ref[...], preferred_element_type=jnp.float32)
    res_ref[...] = (res + bres_ref[...][None])[None]


# ---------------------------------------------------------------------------
# Kernel B: BN finalize (training-mode batch stats from per-batch partials)
#           + residual add + ReLU.  Parallel over batch.
# ---------------------------------------------------------------------------
def bn_residual_kernel(y2_ref, res_ref, stats_ref, gamma_ref, beta_ref, o_ref, *,
                       count):
    # y2_ref/res_ref: (1, Ho, Wo, Co)   stats_ref: (N, 2, Co) full
    stats = stats_ref[...]                                      # (N, 2, Co)
    tot = jnp.sum(stats, axis=0)                                # (2, Co)
    mean = tot[0:1, :] * (1.0 / count)                          # (1, Co)
    var = tot[1:2, :] * (1.0 / count) - mean * mean
    inv = lax.rsqrt(var + BN_EPS)
    scale = inv * gamma_ref[...]                                # (1, Co)
    shift = beta_ref[...] - mean * scale                        # (1, Co)
    out = y2_ref[0] * scale[None] + shift[None] + res_ref[0]
    # .relu_(); the module's trailing F.leaky_relu is identity on >= 0 inputs.
    o_ref[...] = jnp.maximum(out, 0.0)[None]


# ---------------------------------------------------------------------------
# Wrapper
# ---------------------------------------------------------------------------
def down_conv_block(x_nchw, params, r):
    x = jnp.transpose(x_nchw, (0, 2, 3, 1)).astype(jnp.float32)  # NCHW -> NHWC
    N, H, W, Ci = x.shape
    Co = params["b1"].shape[-1]
    Ho = (H - 1) // r + 1
    Wo = (W - 1) // r + 1

    # tap-concatenated weights: (kh, kw, cin) flattened, matching the in-kernel
    # patch concatenation order.
    w1 = params["w1"].reshape(9 * Ci, Co)
    w2 = params["w2"].reshape(25 * Co, Co)

    # ---- pass 1: fused conv3 + conv5(stride r) + residual + BN partials -----
    blk_a_bytes = 4 * (2 * H * W * Ci
                       + 4 * Ho * Wo * Co + 4 * Co
                       + (9 * Ci + 25 * Co + Ci + 3) * Co
                       + (H + 2) * (W + 2) * Ci
                       + (H + 4) * (W + 4) * Co)
    flops_a = 2 * N * (H * W * 9 * Ci * Co + Ho * Wo * 25 * Co * Co
                       + Ho * Wo * Ci * Co)
    bytes_a = 4 * (N * H * W * Ci + 2 * N * Ho * Wo * Co + 2 * N * Co
                   + (9 * Ci + 25 * Co + Ci + 3) * Co)

    y2pre, res, stats = pl.pallas_call(
        functools.partial(conv_block_kernel, r=r),
        out_shape=(jax.ShapeDtypeStruct((N, Ho, Wo, Co), jnp.float32),
                   jax.ShapeDtypeStruct((N, Ho, Wo, Co), jnp.float32),
                   jax.ShapeDtypeStruct((N, 2, Co), jnp.float32)),
        grid=(N,),
        in_specs=[pl.BlockSpec((1, H, W, Ci), lambda n: (n, 0, 0, 0)),
                  pl.BlockSpec((9 * Ci, Co), lambda n: (0, 0)),
                  pl.BlockSpec((1, Co), lambda n: (0, 0)),
                  pl.BlockSpec((25 * Co, Co), lambda n: (0, 0)),
                  pl.BlockSpec((1, Co), lambda n: (0, 0)),
                  pl.BlockSpec((Ci, Co), lambda n: (0, 0)),
                  pl.BlockSpec((1, Co), lambda n: (0, 0))],
        out_specs=(pl.BlockSpec((1, Ho, Wo, Co), lambda n: (n, 0, 0, 0)),
                   pl.BlockSpec((1, Ho, Wo, Co), lambda n: (n, 0, 0, 0)),
                   pl.BlockSpec((1, 2, Co), lambda n: (n, 0, 0))),
        scratch_shapes=[pltpu.VMEM((H + 2, W + 2, Ci), jnp.float32),
                        pltpu.VMEM((H + 4, W + 4, Co), jnp.float32)],
        compiler_params=pltpu.CompilerParams(
            dimension_semantics=("parallel",),
            vmem_limit_bytes=_vmem_limit(blk_a_bytes)),
        cost_estimate=pl.CostEstimate(flops=flops_a, transcendentals=0,
                                      bytes_accessed=bytes_a),
    )(x, w1, params["b1"], w2, params["b2"], params["wres"], params["bres"])

    # ---- pass 2: BN finalize + residual add + ReLU, parallel over batch -----
    blk_b_bytes = 4 * (6 * Ho * Wo * Co + N * 2 * Co + 2 * Co)
    flops_b = 4 * N * Ho * Wo * Co
    bytes_b = 4 * (3 * N * Ho * Wo * Co + N * 2 * Co + 2 * Co)

    out = pl.pallas_call(
        functools.partial(bn_residual_kernel, count=N * Ho * Wo),
        out_shape=jax.ShapeDtypeStruct((N, Ho, Wo, Co), jnp.float32),
        grid=(N,),
        in_specs=[pl.BlockSpec((1, Ho, Wo, Co), lambda n: (n, 0, 0, 0)),
                  pl.BlockSpec((1, Ho, Wo, Co), lambda n: (n, 0, 0, 0)),
                  pl.BlockSpec((N, 2, Co), lambda n: (0, 0, 0)),
                  pl.BlockSpec((1, Co), lambda n: (0, 0)),
                  pl.BlockSpec((1, Co), lambda n: (0, 0))],
        out_specs=pl.BlockSpec((1, Ho, Wo, Co), lambda n: (n, 0, 0, 0)),
        compiler_params=pltpu.CompilerParams(
            dimension_semantics=("parallel",),
            vmem_limit_bytes=_vmem_limit(blk_b_bytes)),
        cost_estimate=pl.CostEstimate(flops=flops_b, transcendentals=int(Co),
                                      bytes_accessed=bytes_b),
    )(y2pre, res, stats, params["gamma"], params["beta"])

    return jnp.transpose(out, (0, 3, 1, 2))   # NHWC -> NCHW


# ---------------------------------------------------------------------------
# Pure-JAX reference (NCHW, lax.conv) for a correctness check
# ---------------------------------------------------------------------------
def ref_forward(x, params, r):
    dn = ("NCHW", "OIHW", "NCHW")
    w1 = jnp.transpose(params["w1"], (3, 2, 0, 1))
    w2 = jnp.transpose(params["w2"], (3, 2, 0, 1))
    wres = jnp.transpose(params["wres"], (1, 0))[:, :, None, None]

    res = lax.conv_general_dilated(x, wres, (r, r), "VALID",
                                   dimension_numbers=dn)
    res = res + params["bres"][0][None, :, None, None]

    h = lax.conv_general_dilated(x, w1, (1, 1), ((1, 1), (1, 1)),
                                 dimension_numbers=dn)
    h = h + params["b1"][0][None, :, None, None]
    h = _leaky_relu(h)
    h = lax.conv_general_dilated(h, w2, (r, r), ((2, 2), (2, 2)),
                                 dimension_numbers=dn)
    h = h + params["b2"][0][None, :, None, None]

    mean = jnp.mean(h, axis=(0, 2, 3), keepdims=True)
    var = jnp.var(h, axis=(0, 2, 3), keepdims=True)
    h = (h - mean) * lax.rsqrt(var + BN_EPS)
    h = h * params["gamma"][0][None, :, None, None] \
        + params["beta"][0][None, :, None, None]

    out = jnp.maximum(h + res, 0.0)
    return _leaky_relu(out)


# ---------------------------------------------------------------------------
if __name__ == "__main__":
    N, C_I, C_O, H, W, R = 2, 4, 8, 16, 16, 2

    key = jax.random.PRNGKey(0)
    ks = jax.random.split(key, 9)
    params = {
        "w1":    0.1 * jax.random.normal(ks[0], (3, 3, C_I, C_O), jnp.float32),
        "b1":    0.1 * jax.random.normal(ks[1], (1, C_O), jnp.float32),
        "w2":    0.1 * jax.random.normal(ks[2], (5, 5, C_O, C_O), jnp.float32),
        "b2":    0.1 * jax.random.normal(ks[3], (1, C_O), jnp.float32),
        "wres":  0.1 * jax.random.normal(ks[4], (C_I, C_O), jnp.float32),
        "bres":  0.1 * jax.random.normal(ks[5], (1, C_O), jnp.float32),
        "gamma": 1.0 + 0.1 * jax.random.normal(ks[6], (1, C_O), jnp.float32),
        "beta":  0.1 * jax.random.normal(ks[7], (1, C_O), jnp.float32),
    }
    x = jax.random.normal(ks[8], (N, C_I, H, W), jnp.float32)   # PyTorch NCHW

    out = jax.block_until_ready(down_conv_block(x, params, R))
    ref = jax.block_until_ready(ref_forward(x, params, R))

    assert out.shape == (N, C_O, H // R, W // R), out.shape
    assert jnp.allclose(out, ref, rtol=1e-4, atol=1e-4), \
        float(jnp.max(jnp.abs(out - ref)))

    print("KERNEL_OK")
</pallas_src>

<mosaic_0001>
module attributes {stable_mosaic.version = 11 : i64} {
  func.func @conv_block_kernel(%arg0: i32, %arg1: memref<1x16x16x4xf32, #tpu.memory_space<vmem>>, %arg2: memref<36x8xf32, #tpu.memory_space<vmem>>, %arg3: memref<1x8xf32, #tpu.memory_space<vmem>>, %arg4: memref<200x8xf32, #tpu.memory_space<vmem>>, %arg5: memref<1x8xf32, #tpu.memory_space<vmem>>, %arg6: memref<4x8xf32, #tpu.memory_space<vmem>>, %arg7: memref<1x8xf32, #tpu.memory_space<vmem>>, %arg8: memref<1x8x8x8xf32, #tpu.memory_space<vmem>>, %arg9: memref<1x8x8x8xf32, #tpu.memory_space<vmem>>, %arg10: memref<1x2x8xf32, #tpu.memory_space<vmem>>, %arg11: memref<18x18x4xf32, #tpu.memory_space<vmem>>, %arg12: memref<20x20x8xf32, #tpu.memory_space<vmem>>) attributes {dimension_semantics = [#tpu.dimension_semantics<parallel>], iteration_bounds = array<i64: 2>, scalar_prefetch = 0 : i64, scratch_operands = 2 : i64, tpu.core_type = #tpu.core_type<tc>, window_params = [{transform_indices = @transform_0, window_bounds = array<i64: 1, 16, 16, 4>}, {pipeline_mode = #tpu.pipeline_mode<synchronous>, transform_indices = @transform_1, window_bounds = array<i64: 36, 8>}, {pipeline_mode = #tpu.pipeline_mode<synchronous>, transform_indices = @transform_2, window_bounds = array<i64: 1, 8>}, {pipeline_mode = #tpu.pipeline_mode<synchronous>, transform_indices = @transform_3, window_bounds = array<i64: 200, 8>}, {pipeline_mode = #tpu.pipeline_mode<synchronous>, transform_indices = @transform_4, window_bounds = array<i64: 1, 8>}, {pipeline_mode = #tpu.pipeline_mode<synchronous>, transform_indices = @transform_5, window_bounds = array<i64: 4, 8>}, {pipeline_mode = #tpu.pipeline_mode<synchronous>, transform_indices = @transform_6, window_bounds = array<i64: 1, 8>}, {transform_indices = @transform_7, window_bounds = array<i64: 1, 8, 8, 8>}, {transform_indices = @transform_8, window_bounds = array<i64: 1, 8, 8, 8>}, {transform_indices = @transform_9, window_bounds = array<i64: 1, 2, 8>}]} {
    %cst = arith.constant 0.000000e+00 : f32
    %0 = vector.broadcast %cst : f32 to vector<18x18x4xf32>
    %c0 = arith.constant 0 : index
    %c0_0 = arith.constant 0 : index
    %c0_1 = arith.constant 0 : index
    %1 = vector.load %arg11[%c0, %c0_0, %c0_1] : memref<18x18x4xf32, #tpu.memory_space<vmem>>, vector<18x18x4xf32>
    tpu.vector_store %arg11[%c0, %c0_0, %c0_1], %0 {strides = array<i32>} : memref<18x18x4xf32, #tpu.memory_space<vmem>>, vector<18x18x4xf32>,
    %c0_2 = arith.constant 0 : index
    %c0_3 = arith.constant 0 : index
    %c0_4 = arith.constant 0 : index
    %c0_5 = arith.constant 0 : index
    %2 = vector.load %arg1[%c0_2, %c0_3, %c0_4, %c0_5] : memref<1x16x16x4xf32, #tpu.memory_space<vmem>>, vector<1x16x16x4xf32>
    %3 = vector.shape_cast %2 : vector<1x16x16x4xf32> to vector<16x16x4xf32>
    %c1 = arith.constant 1 : index
    %c1_6 = arith.constant 1 : index
    %c0_7 = arith.constant 0 : index
    %4 = vector.load %arg11[%c1, %c1_6, %c0_7] : memref<18x18x4xf32, #tpu.memory_space<vmem>>, vector<16x16x4xf32>
    tpu.vector_store %arg11[%c1, %c1_6, %c0_7], %3 {strides = array<i32>} : memref<18x18x4xf32, #tpu.memory_space<vmem>>, vector<16x16x4xf32>,
    %c0_8 = arith.constant 0 : index
    %c0_9 = arith.constant 0 : index
    %c0_10 = arith.constant 0 : index
    %5 = vector.load %arg11[%c0_8, %c0_9, %c0_10] : memref<18x18x4xf32, #tpu.memory_space<vmem>>, vector<16x16x4xf32>
    %c0_11 = arith.constant 0 : index
    %c1_12 = arith.constant 1 : index
    %c0_13 = arith.constant 0 : index
    %6 = vector.load %arg11[%c0_11, %c1_12, %c0_13] : memref<18x18x4xf32, #tpu.memory_space<vmem>>, vector<16x16x4xf32>
    %c0_14 = arith.constant 0 : index
    %c2 = arith.constant 2 : index
    %c0_15 = arith.constant 0 : index
    %7 = vector.load %arg11[%c0_14, %c2, %c0_15] : memref<18x18x4xf32, #tpu.memory_space<vmem>>, vector<16x16x4xf32>
    %c1_16 = arith.constant 1 : index
    %c0_17 = arith.constant 0 : index
    %c0_18 = arith.constant 0 : index
    %8 = vector.load %arg11[%c1_16, %c0_17, %c0_18] : memref<18x18x4xf32, #tpu.memory_space<vmem>>, vector<16x16x4xf32>
    %c1_19 = arith.constant 1 : index
    %c1_20 = arith.constant 1 : index
    %c0_21 = arith.constant 0 : index
    %9 = vector.load %arg11[%c1_19, %c1_20, %c0_21] : memref<18x18x4xf32, #tpu.memory_space<vmem>>, vector<16x16x4xf32>
    %c1_22 = arith.constant 1 : index
    %c2_23 = arith.constant 2 : index
    %c0_24 = arith.constant 0 : index
    %10 = vector.load %arg11[%c1_22, %c2_23, %c0_24] : memref<18x18x4xf32, #tpu.memory_space<vmem>>, vector<16x16x4xf32>
    %c2_25 = arith.constant 2 : index
    %c0_26 = arith.constant 0 : index
    %c0_27 = arith.constant 0 : index
    %11 = vector.load %arg11[%c2_25, %c0_26, %c0_27] : memref<18x18x4xf32, #tpu.memory_space<vmem>>, vector<16x16x4xf32>
    %c2_28 = arith.constant 2 : index
    %c1_29 = arith.constant 1 : index
    %c0_30 = arith.constant 0 : index
    %12 = vector.load %arg11[%c2_28, %c1_29, %c0_30] : memref<18x18x4xf32, #tpu.memory_space<vmem>>, vector<16x16x4xf32>
    %c2_31 = arith.constant 2 : index
    %c2_32 = arith.constant 2 : index
    %c0_33 = arith.constant 0 : index
    %13 = vector.load %arg11[%c2_31, %c2_32, %c0_33] : memref<18x18x4xf32, #tpu.memory_space<vmem>>, vector<16x16x4xf32>
    %14 = tpu.concatenate %5, %6, %7, %8, %9, %10, %11, %12, %13 in 2 : vector<16x16x4xf32>, vector<16x16x4xf32>, vector<16x16x4xf32>, vector<16x16x4xf32>, vector<16x16x4xf32>, vector<16x16x4xf32>, vector<16x16x4xf32>, vector<16x16x4xf32>, vector<16x16x4xf32> -> vector<16x16x36xf32>
    %c0_34 = arith.constant 0 : index
    %c0_35 = arith.constant 0 : index
    %15 = vector.load %arg2[%c0_34, %c0_35] : memref<36x8xf32, #tpu.memory_space<vmem>>, vector<36x8xf32>
    %cst_36 = arith.constant dense<0.000000e+00> : vector<16x16x8xf32>
    %16 = tpu.matmul %14, %15, %cst_36 {dimension_numbers = #tpu.dot_dimension_numbers<[2], [0], [0, 1], [1], [0, 0, 0, 1, 1, 1], [], []>} : vector<16x16x36xf32>, vector<36x8xf32>, vector<16x16x8xf32> -> vector<16x16x8xf32>
    %c0_37 = arith.constant 0 : index
    %c0_38 = arith.constant 0 : index
    %17 = vector.load %arg3[%c0_37, %c0_38] : memref<1x8xf32, #tpu.memory_space<vmem>>, vector<1x8xf32>
    %18 = vector.shape_cast %17 : vector<1x8xf32> to vector<1x1x8xf32>
    %19 = vector.broadcast %18 : vector<1x1x8xf32> to vector<16x16x8xf32>
    %20 = arith.addf %16, %19 : vector<16x16x8xf32>
    %cst_39 = arith.constant 0.000000e+00 : f32
    %21 = vector.broadcast %cst_39 : f32 to vector<16x16x8xf32>
    %22 = arith.cmpf oge, %20, %21 : vector<16x16x8xf32>
    %cst_40 = arith.constant 0.00999999977 : f32
    %23 = vector.broadcast %cst_40 : f32 to vector<16x16x8xf32>
    %24 = arith.mulf %23, %20 : vector<16x16x8xf32>
    %25 = arith.select %22, %20, %24 : vector<16x16x8xi1>, vector<16x16x8xf32>
    %cst_41 = arith.constant 0.000000e+00 : f32
    %26 = vector.broadcast %cst_41 : f32 to vector<20x20x8xf32>
    %c0_42 = arith.constant 0 : index
    %c0_43 = arith.constant 0 : index
    %c0_44 = arith.constant 0 : index
    %27 = vector.load %arg12[%c0_42, %c0_43, %c0_44] : memref<20x20x8xf32, #tpu.memory_space<vmem>>, vector<20x20x8xf32>
    tpu.vector_store %arg12[%c0_42, %c0_43, %c0_44], %26 {strides = array<i32>} : memref<20x20x8xf32, #tpu.memory_space<vmem>>, vector<20x20x8xf32>,
    %c2_45 = arith.constant 2 : index
    %c2_46 = arith.constant 2 : index
    %c0_47 = arith.constant 0 : index
    %28 = vector.load %arg12[%c2_45, %c2_46, %c0_47] : memref<20x20x8xf32, #tpu.memory_space<vmem>>, vector<16x16x8xf32>
    tpu.vector_store %arg12[%c2_45, %c2_46, %c0_47], %25 {strides = array<i32>} : memref<20x20x8xf32, #tpu.memory_space<vmem>>, vector<16x16x8xf32>,
    %c0_48 = arith.constant 0 : index
    %c0_49 = arith.constant 0 : index
    %c0_50 = arith.constant 0 : index
    %29 = tpu.strided_load %arg12[%c0_48, %c0_49, %c0_50] {strides = array<i32: 2, 2, 1>} : memref<20x20x8xf32, #tpu.memory_space<vmem>>, vector<8x8x8xf32>
    %c0_51 = arith.constant 0 : index
    %c1_52 = arith.constant 1 : index
    %c0_53 = arith.constant 0 : index
    %30 = tpu.strided_load %arg12[%c0_51, %c1_52, %c0_53] {strides = array<i32: 2, 2, 1>} : memref<20x20x8xf32, #tpu.memory_space<vmem>>, vector<8x8x8xf32>
    %c0_54 = arith.constant 0 : index
    %c2_55 = arith.constant 2 : index
    %c0_56 = arith.constant 0 : index
    %31 = tpu.strided_load %arg12[%c0_54, %c2_55, %c0_56] {strides = array<i32: 2, 2, 1>} : memref<20x20x8xf32, #tpu.memory_space<vmem>>, vector<8x8x8xf32>
    %c0_57 = arith.constant 0 : index
    %c3 = arith.constant 3 : index
    %c0_58 = arith.constant 0 : index
    %32 = tpu.strided_load %arg12[%c0_57, %c3, %c0_58] {strides = array<i32: 2, 2, 1>} : memref<20x20x8xf32, #tpu.memory_space<vmem>>, vector<8x8x8xf32>
    %c0_59 = arith.constant 0 : index
    %c4 = arith.constant 4 : index
    %c0_60 = arith.constant 0 : index
    %33 = tpu.strided_load %arg12[%c0_59, %c4, %c0_60] {strides = array<i32: 2, 2, 1>} : memref<20x20x8xf32, #tpu.memory_space<vmem>>, vector<8x8x8xf32>
    %c1_61 = arith.constant 1 : index
    %c0_62 = arith.constant 0 : index
    %c0_63 = arith.constant 0 : index
    %34 = tpu.strided_load %arg12[%c1_61, %c0_62, %c0_63] {strides = array<i32: 2, 2, 1>} : memref<20x20x8xf32, #tpu.memory_space<vmem>>, vector<8x8x8xf32>
    %c1_64 = arith.constant 1 : index
    %c1_65 = arith.constant 1 : index
    %c0_66 = arith.constant 0 : index
    %35 = tpu.strided_load %arg12[%c1_64, %c1_65, %c0_66] {strides = array<i32: 2, 2, 1>} : memref<20x20x8xf32, #tpu.memory_space<vmem>>, vector<8x8x8xf32>
    %c1_67 = arith.constant 1 : index
    %c2_68 = arith.constant 2 : index
    %c0_69 = arith.constant 0 : index
    %36 = tpu.strided_load %arg12[%c1_67, %c2_68, %c0_69] {strides = array<i32: 2, 2, 1>} : memref<20x20x8xf32, #tpu.memory_space<vmem>>, vector<8x8x8xf32>
    %c1_70 = arith.constant 1 : index
    %c3_71 = arith.constant 3 : index
    %c0_72 = arith.constant 0 : index
    %37 = tpu.strided_load %arg12[%c1_70, %c3_71, %c0_72] {strides = array<i32: 2, 2, 1>} : memref<20x20x8xf32, #tpu.memory_space<vmem>>, vector<8x8x8xf32>
    %c1_73 = arith.constant 1 : index
    %c4_74 = arith.constant 4 : index
    %c0_75 = arith.constant 0 : index
    %38 = tpu.strided_load %arg12[%c1_73, %c4_74, %c0_75] {strides = array<i32: 2, 2, 1>} : memref<20x20x8xf32, #tpu.memory_space<vmem>>, vector<8x8x8xf32>
    %c2_76 = arith.constant 2 : index
    %c0_77 = arith.constant 0 : index
    %c0_78 = arith.constant 0 : index
    %39 = tpu.strided_load %arg12[%c2_76, %c0_77, %c0_78] {strides = array<i32: 2, 2, 1>} : memref<20x20x8xf32, #tpu.memory_space<vmem>>, vector<8x8x8xf32>
    %c2_79 = arith.constant 2 : index
    %c1_80 = arith.constant 1 : index
    %c0_81 = arith.constant 0 : index
    %40 = tpu.strided_load %arg12[%c2_79, %c1_80, %c0_81] {strides = array<i32: 2, 2, 1>} : memref<20x20x8xf32, #tpu.memory_space<vmem>>, vector<8x8x8xf32>
    %c2_82 = arith.constant 2 : index
    %c2_83 = arith.constant 2 : index
    %c0_84 = arith.constant 0 : index
    %41 = tpu.strided_load %arg12[%c2_82, %c2_83, %c0_84] {strides = array<i32: 2, 2, 1>} : memref<20x20x8xf32, #tpu.memory_space<vmem>>, vector<8x8x8xf32>
    %c2_85 = arith.constant 2 : index
    %c3_86 = arith.constant 3 : index
    %c0_87 = arith.constant 0 : index
    %42 = tpu.strided_load %arg12[%c2_85, %c3_86, %c0_87] {strides = array<i32: 2, 2, 1>} : memref<20x20x8xf32, #tpu.memory_space<vmem>>, vector<8x8x8xf32>
    %c2_88 = arith.constant 2 : index
    %c4_89 = arith.constant 4 : index
    %c0_90 = arith.constant 0 : index
    %43 = tpu.strided_load %arg12[%c2_88, %c4_89, %c0_90] {strides = array<i32: 2, 2, 1>} : memref<20x20x8xf32, #tpu.memory_space<vmem>>, vector<8x8x8xf32>
    %c3_91 = arith.constant 3 : index
    %c0_92 = arith.constant 0 : index
    %c0_93 = arith.constant 0 : index
    %44 = tpu.strided_load %arg12[%c3_91, %c0_92, %c0_93] {strides = array<i32: 2, 2, 1>} : memref<20x20x8xf32, #tpu.memory_space<vmem>>, vector<8x8x8xf32>
    %c3_94 = arith.constant 3 : index
    %c1_95 = arith.constant 1 : index
    %c0_96 = arith.constant 0 : index
    %45 = tpu.strided_load %arg12[%c3_94, %c1_95, %c0_96] {strides = array<i32: 2, 2, 1>} : memref<20x20x8xf32, #tpu.memory_space<vmem>>, vector<8x8x8xf32>
    %c3_97 = arith.constant 3 : index
    %c2_98 = arith.constant 2 : index
    %c0_99 = arith.constant 0 : index
    %46 = tpu.strided_load %arg12[%c3_97, %c2_98, %c0_99] {strides = array<i32: 2, 2, 1>} : memref<20x20x8xf32, #tpu.memory_space<vmem>>, vector<8x8x8xf32>
    %c3_100 = arith.constant 3 : index
    %c3_101 = arith.constant 3 : index
    %c0_102 = arith.constant 0 : index
    %47 = tpu.strided_load %arg12[%c3_100, %c3_101, %c0_102] {strides = array<i32: 2, 2, 1>} : memref<20x20x8xf32, #tpu.memory_space<vmem>>, vector<8x8x8xf32>
    %c3_103 = arith.constant 3 : index
    %c4_104 = arith.constant 4 : index
    %c0_105 = arith.constant 0 : index
    %48 = tpu.strided_load %arg12[%c3_103, %c4_104, %c0_105] {strides = array<i32: 2, 2, 1>} : memref<20x20x8xf32, #tpu.memory_space<vmem>>, vector<8x8x8xf32>
    %c4_106 = arith.constant 4 : index
    %c0_107 = arith.constant 0 : index
    %c0_108 = arith.constant 0 : index
    %49 = tpu.strided_load %arg12[%c4_106, %c0_107, %c0_108] {strides = array<i32: 2, 2, 1>} : memref<20x20x8xf32, #tpu.memory_space<vmem>>, vector<8x8x8xf32>
    %c4_109 = arith.constant 4 : index
    %c1_110 = arith.constant 1 : index
    %c0_111 = arith.constant 0 : index
    %50 = tpu.strided_load %arg12[%c4_109, %c1_110, %c0_111] {strides = array<i32: 2, 2, 1>} : memref<20x20x8xf32, #tpu.memory_space<vmem>>, vector<8x8x8xf32>
    %c4_112 = arith.constant 4 : index
    %c2_113 = arith.constant 2 : index
    %c0_114 = arith.constant 0 : index
    %51 = tpu.strided_load %arg12[%c4_112, %c2_113, %c0_114] {strides = array<i32: 2, 2, 1>} : memref<20x20x8xf32, #tpu.memory_space<vmem>>, vector<8x8x8xf32>
    %c4_115 = arith.constant 4 : index
    %c3_116 = arith.constant 3 : index
    %c0_117 = arith.constant 0 : index
    %52 = tpu.strided_load %arg12[%c4_115, %c3_116, %c0_117] {strides = array<i32: 2, 2, 1>} : memref<20x20x8xf32, #tpu.memory_space<vmem>>, vector<8x8x8xf32>
    %c4_118 = arith.constant 4 : index
    %c4_119 = arith.constant 4 : index
    %c0_120 = arith.constant 0 : index
    %53 = tpu.strided_load %arg12[%c4_118, %c4_119, %c0_120] {strides = array<i32: 2, 2, 1>} : memref<20x20x8xf32, #tpu.memory_space<vmem>>, vector<8x8x8xf32>
    %54 = tpu.concatenate %29, %30, %31, %32, %33, %34, %35, %36, %37, %38, %39, %40, %41, %42, %43, %44 in 2 : vector<8x8x8xf32>, vector<8x8x8xf32>, vector<8x8x8xf32>, vector<8x8x8xf32>, vector<8x8x8xf32>, vector<8x8x8xf32>, vector<8x8x8xf32>, vector<8x8x8xf32>, vector<8x8x8xf32>, vector<8x8x8xf32>, vector<8x8x8xf32>, vector<8x8x8xf32>, vector<8x8x8xf32>, vector<8x8x8xf32>, vector<8x8x8xf32>, vector<8x8x8xf32> -> vector<8x8x128xf32>
    %55 = tpu.concatenate %45, %46, %47, %48, %49, %50, %51, %52, %53 in 2 : vector<8x8x8xf32>, vector<8x8x8xf32>, vector<8x8x8xf32>, vector<8x8x8xf32>, vector<8x8x8xf32>, vector<8x8x8xf32>, vector<8x8x8xf32>, vector<8x8x8xf32>, vector<8x8x8xf32> -> vector<8x8x72xf32>
    %56 = tpu.concatenate %54, %55 in 2 : vector<8x8x128xf32>, vector<8x8x72xf32> -> vector<8x8x200xf32>
    %c0_121 = arith.constant 0 : index
    %c0_122 = arith.constant 0 : index
    %57 = vector.load %arg4[%c0_121, %c0_122] : memref<200x8xf32, #tpu.memory_space<vmem>>, vector<200x8xf32>
    %cst_123 = arith.constant dense<0.000000e+00> : vector<8x8x8xf32>
    %58 = tpu.matmul %56, %57, %cst_123 {dimension_numbers = #tpu.dot_dimension_numbers<[2], [0], [0, 1], [1], [0, 0, 0, 1, 1, 1], [], []>} : vector<8x8x200xf32>, vector<200x8xf32>, vector<8x8x8xf32> -> vector<8x8x8xf32>
    %c0_124 = arith.constant 0 : index
    %c0_125 = arith.constant 0 : index
    %59 = vector.load %arg5[%c0_124, %c0_125] : memref<1x8xf32, #tpu.memory_space<vmem>>, vector<1x8xf32>
    %60 = vector.shape_cast %59 : vector<1x8xf32> to vector<1x1x8xf32>
    %61 = vector.broadcast %60 : vector<1x1x8xf32> to vector<8x8x8xf32>
    %62 = arith.addf %58, %61 : vector<8x8x8xf32>
    %63 = vector.shape_cast %62 : vector<8x8x8xf32> to vector<1x8x8x8xf32>
    %c0_126 = arith.constant 0 : index
    %c0_127 = arith.constant 0 : index
    %c0_128 = arith.constant 0 : index
    %c0_129 = arith.constant 0 : index
    %64 = vector.load %arg8[%c0_126, %c0_127, %c0_128, %c0_129] : memref<1x8x8x8xf32, #tpu.memory_space<vmem>>, vector<1x8x8x8xf32>
    tpu.vector_store %arg8[%c0_126, %c0_127, %c0_128, %c0_129], %63 {strides = array<i32>} : memref<1x8x8x8xf32, #tpu.memory_space<vmem>>, vector<1x8x8x8xf32>,
    %65 = vector.shape_cast %62 : vector<8x8x8xf32> to vector<64x8xf32>
    %cst_130 = arith.constant dense<0.000000e+00> : vector<8xf32>
    %66 = vector.multi_reduction <add>, %65, %cst_130 [0] : vector<64x8xf32> to vector<8xf32>
    %67 = vector.shape_cast %66 : vector<8xf32> to vector<1x8xf32>
    %68 = arith.mulf %65, %65 : vector<64x8xf32>
    %cst_131 = arith.constant dense<0.000000e+00> : vector<8xf32>
    %69 = vector.multi_reduction <add>, %68, %cst_131 [0] : vector<64x8xf32> to vector<8xf32>
    %70 = vector.shape_cast %69 : vector<8xf32> to vector<1x8xf32>
    %71 = tpu.concatenate %67, %70 in 0 : vector<1x8xf32>, vector<1x8xf32> -> vector<2x8xf32>
    %72 = vector.shape_cast %71 : vector<2x8xf32> to vector<1x2x8xf32>
    %c0_132 = arith.constant 0 : index
    %c0_133 = arith.constant 0 : index
    %c0_134 = arith.constant 0 : index
    %73 = vector.load %arg10[%c0_132, %c0_133, %c0_134] : memref<1x2x8xf32, #tpu.memory_space<vmem>>, vector<1x2x8xf32>
    tpu.vector_store %arg10[%c0_132, %c0_133, %c0_134], %72 {strides = array<i32>} : memref<1x2x8xf32, #tpu.memory_space<vmem>>, vector<1x2x8xf32>,
    %c1_135 = arith.constant 1 : index
    %c1_136 = arith.constant 1 : index
    %c0_137 = arith.constant 0 : index
    %74 = tpu.strided_load %arg11[%c1_135, %c1_136, %c0_137] {strides = array<i32: 2, 2, 1>} : memref<18x18x4xf32, #tpu.memory_space<vmem>>, vector<8x8x4xf32>
    %c0_138 = arith.constant 0 : index
    %c0_139 = arith.constant 0 : index
    %75 = vector.load %arg6[%c0_138, %c0_139] : memref<4x8xf32, #tpu.memory_space<vmem>>, vector<4x8xf32>
    %cst_140 = arith.constant dense<0.000000e+00> : vector<8x8x8xf32>
    %76 = tpu.matmul %74, %75, %cst_140 {dimension_numbers = #tpu.dot_dimension_numbers<[2], [0], [0, 1], [1], [0, 0, 0, 1, 1, 1], [], []>} : vector<8x8x4xf32>, vector<4x8xf32>, vector<8x8x8xf32> -> vector<8x8x8xf32>
    %c0_141 = arith.constant 0 : index
    %c0_142 = arith.constant 0 : index
    %77 = vector.load %arg7[%c0_141, %c0_142] : memref<1x8xf32, #tpu.memory_space<vmem>>, vector<1x8xf32>
    %78 = vector.shape_cast %77 : vector<1x8xf32> to vector<1x1x8xf32>
    %79 = vector.broadcast %78 : vector<1x1x8xf32> to vector<8x8x8xf32>
    %80 = arith.addf %76, %79 : vector<8x8x8xf32>
    %81 = vector.shape_cast %80 : vector<8x8x8xf32> to vector<1x8x8x8xf32>
    %c0_143 = arith.constant 0 : index
    %c0_144 = arith.constant 0 : index
    %c0_145 = arith.constant 0 : index
    %c0_146 = arith.constant 0 : index
    %82 = vector.load %arg9[%c0_143, %c0_144, %c0_145, %c0_146] : memref<1x8x8x8xf32, #tpu.memory_space<vmem>>, vector<1x8x8x8xf32>
    tpu.vector_store %arg9[%c0_143, %c0_144, %c0_145, %c0_146], %81 {strides = array<i32>} : memref<1x8x8x8xf32, #tpu.memory_space<vmem>>, vector<1x8x8x8xf32>,
    return
  }
  func.func @transform_0(%arg0: i32) -> (i32, i32, i32, i32) {
    %c0_i32 = arith.constant 0 : i32
    %c0_i32_0 = arith.constant 0 : i32
    %c0_i32_1 = arith.constant 0 : i32
    %c0_i32_2 = arith.constant 0 : i32
    return %arg0, %c0_i32, %c0_i32_0, %c0_i32_1 : i32, i32, i32, i32
  }
  func.func @transform_1(%arg0: i32) -> (i32, i32) {
    %c0_i32 = arith.constant 0 : i32
    %c0_i32_0 = arith.constant 0 : i32
    %c0_i32_1 = arith.constant 0 : i32
    return %c0_i32, %c0_i32_0 : i32, i32
  }
  func.func @transform_2(%arg0: i32) -> (i32, i32) {
    %c0_i32 = arith.constant 0 : i32
    %c0_i32_0 = arith.constant 0 : i32
    %c0_i32_1 = arith.constant 0 : i32
    return %c0_i32, %c0_i32_0 : i32, i32
  }
  func.func @transform_3(%arg0: i32) -> (i32, i32) {
    %c0_i32 = arith.constant 0 : i32
    %c0_i32_0 = arith.constant 0 : i32
    %c0_i32_1 = arith.constant 0 : i32
    return %c0_i32, %c0_i32_0 : i32, i32
  }
  func.func @transform_4(%arg0: i32) -> (i32, i32) {
    %c0_i32 = arith.constant 0 : i32
    %c0_i32_0 = arith.constant 0 : i32
    %c0_i32_1 = arith.constant 0 : i32
    return %c0_i32, %c0_i32_0 : i32, i32
  }
  func.func @transform_5(%arg0: i32) -> (i32, i32) {
    %c0_i32 = arith.constant 0 : i32
    %c0_i32_0 = arith.constant 0 : i32
    %c0_i32_1 = arith.constant 0 : i32
    return %c0_i32, %c0_i32_0 : i32, i32
  }
  func.func @transform_6(%arg0: i32) -> (i32, i32) {
    %c0_i32 = arith.constant 0 : i32
    %c0_i32_0 = arith.constant 0 : i32
    %c0_i32_1 = arith.constant 0 : i32
    return %c0_i32, %c0_i32_0 : i32, i32
  }
  func.func @transform_7(%arg0: i32) -> (i32, i32, i32, i32) {
    %c0_i32 = arith.constant 0 : i32
    %c0_i32_0 = arith.constant 0 : i32
    %c0_i32_1 = arith.constant 0 : i32
    %c0_i32_2 = arith.constant 0 : i32
    return %arg0, %c0_i32, %c0_i32_0, %c0_i32_1 : i32, i32, i32, i32
  }
  func.func @transform_8(%arg0: i32) -> (i32, i32, i32, i32) {
    %c0_i32 = arith.constant 0 : i32
    %c0_i32_0 = arith.constant 0 : i32
    %c0_i32_1 = arith.constant 0 : i32
    %c0_i32_2 = arith.constant 0 : i32
    return %arg0, %c0_i32, %c0_i32_0, %c0_i32_1 : i32, i32, i32, i32
  }
  func.func @transform_9(%arg0: i32) -> (i32, i32, i32) {
    %c0_i32 = arith.constant 0 : i32
    %c0_i32_0 = arith.constant 0 : i32
    %c0_i32_1 = arith.constant 0 : i32
    return %arg0, %c0_i32, %c0_i32_0 : i32, i32, i32
  }
}

</mosaic_0001>

<llo_original>
// kernel: tpu_custom_call.1
$region0: #{tpu_custom_call.1}
  #allocation0 [shape = 'u32[]', space=smem, size = 0x4, offset = 0x4, fixed_abs, tag = 'smem constant byte address 0x4 - core index']
  #allocation1 [shape = 'u32[144,128]{1,0:T(1,128)}', space=vmem, size = 0x12000, scoped, tag = 'internal scratch']
  #allocation2 [shape = 'f32[18,18,4]{2,1,0:T(8,128)}', space=vmem, size = 0x36000, scoped, tag = 'scratch operand']
  #allocation3 [shape = 'f32[20,20,8]{2,1,0:T(8,128)}', space=vmem, size = 0x3c000, scoped, tag = 'scratch operand']
  %s0 = inlined_call_operand.vmem [shape: f32[2,16,16,4], index: 0, kind: input, shape index: {}]
  %s1 = inlined_call_operand.vmem [shape: f32[36,8], index: 1, kind: input, shape index: {}]
  %s2 = inlined_call_operand.vmem [shape: f32[1,8], index: 2, kind: input, shape index: {}]
  %s3 = inlined_call_operand.vmem [shape: f32[200,8], index: 3, kind: input, shape index: {}]
  %s4 = inlined_call_operand.vmem [shape: f32[1,8], index: 4, kind: input, shape index: {}]
  %s5 = inlined_call_operand.vmem [shape: f32[4,8], index: 5, kind: input, shape index: {}]
  %s6 = inlined_call_operand.vmem [shape: f32[1,8], index: 6, kind: input, shape index: {}]
  %s7 = inlined_call_operand.hbm [shape: f32[2,8,8,8], index: 7, kind: output, shape index: {0}]
  %s8 = inlined_call_operand.hbm [shape: f32[2,8,8,8], index: 8, kind: output, shape index: {1}]
  %s9 = inlined_call_operand.hbm [shape: f32[2,2,8], index: 9, kind: output, shape index: {2}]
  %10 = xla_tuple %s7, %s8, %s9
  %s11 = sld [smem:[#allocation0]]
  $region77: #{tpu_custom_call.1} parent=0
    _
  %s13 = ssub.s32 1, %s11
  %s14 = scalar_select 0, %s13, %s11
  $region1: #{tpu_custom_call.1} parent=0
    #allocation4 [shape = 'u8[65536]{0}', space=vmem, size = 0x10000, scoped, tag = 'output window, operand 0']
    #allocation5 [shape = 's32[2]{0}', space=sflag, size = 0x8, scoped, tag = 'scoped memory for tpu_custom_call.1']
    #allocation6 [shape = 'u8[65536]{0}', space=vmem, size = 0x10000, scoped, tag = 'output window, operand 1']
    #allocation7 [shape = 's32[2]{0}', space=sflag, size = 0x8, scoped, tag = 'scoped memory for tpu_custom_call.1']
    #allocation8 [shape = 'u8[2048]{0}', space=vmem, size = 0x800, scoped, tag = 'output window, operand 2']
    %15 = vsyncpa [#allocation5], 0
    %s16 = scalar_lea.sflag [#allocation5], 1
    %17 = vsyncpa %s16, 0
    %18 = vsyncpa [#allocation7], 0
    %s19 = scalar_lea.sflag [#allocation7], 1
    %20 = vsyncpa %s19, 0
    loop: start=0, step=1, limit=4
    $region2: #{tpu_custom_call.1} parent=1 // loop_pre_header
      _
    $region3: #{tpu_custom_call.1} parent=1 // loop_header
      %s22 = sphi 0, %s26
      %p23 = scmp.ge.s32.totalorder %s22, 4
      %s32 = sphi 0, %s34
      %s35 = sphi 0, %s32
      %s36 = sphi 0, %s35
      %s52 = sphi 0, %s36
      %s56 = sphi 0, %s56
      %s58 = sphi 0, %s56
      %s59 = sphi 0, %s58
      %s73 = sphi 0, %s59
      %s77 = sphi 0, %s77
      %s79 = sphi 0, %s77
      %s80 = sphi 0, %s79
      %s94 = sphi 0, %s80
      %s98 = sphi 0, %s98
      %s100 = sphi 0, %s98
      %s101 = sphi 0, %s100
      %s115 = sphi 0, %s101
      %s119 = sphi 0, %s119
      %s121 = sphi 0, %s119
      %s122 = sphi 0, %s121
      %s136 = sphi 0, %s122
      %s140 = sphi 0, %s140
      %s142 = sphi 0, %s140
      %s143 = sphi 0, %s142
      %s157 = sphi 0, %s143
      %s161 = sphi 0, %s161
      %s163 = sphi 0, %s161
      %s164 = sphi 0, %s163
      %s178 = sphi 0, %s164
      %s184 = sphi 0, %s186
      %s187 = sphi 0, %s184
      %s188 = sphi 0, %s187
      %s204 = sphi 0, %s188
      %s210 = sphi 0, %s212
      %s213 = sphi 0, %s210
      %s214 = sphi 0, %s213
      %s230 = sphi 0, %s214
      %s236 = sphi 0, %s238
      %s239 = sphi 0, %s236
      %s240 = sphi 0, %s239
      %s256 = sphi 0, %s240
    $region4: #{tpu_custom_call.1} parent=1 // loop_header_branch
      %25 = sbr.rel (%p23) target = $region8
    $region5: #{tpu_custom_call.1} parent=1 // loop_body
      %s27 = ssub.s32 %s22, 1
      %s28 = ssub.s32 %s22, 2
      %s29 = sadd.s32 %s22, 1
      %s30 = ssub.s32 %s22, %s29
      %p31 = scmp.eq.s32.totalorder %s30, 0
      %s33 = sadd.s32 %s32, 1
      %s34 = scalar_select %p31, %s32, %s33
      %p37 = pneg %p31
      %p38 = scmp.eq.s32.totalorder %s22, 1
      %p39 = por %p37, %p38
      %p40 = scmp.ne.s32.totalorder %s32, %s35
      %p41 = scmp.eq.s32.totalorder %s22, 0
      %p42 = por %p40, %p41
      %p43 = scmp.ne.s32.totalorder %s32, %s35
      %p44 = scmp.eq.s32.totalorder %s27, 1
      %p45 = por %p43, %p44
      %p46 = scmp.ne.s32.totalorder %s35, %s36
      %p47 = scmp.eq.s32.totalorder %s27, 0
      %p48 = por %p46, %p47
      %p49 = scmp.ne.s32.totalorder %s35, %s36
      %p50 = scmp.eq.s32.totalorder %s28, 1
      %p51 = por %p49, %p50
      %p53 = scmp.ne.s32.totalorder %s36, %s52
      %p54 = scmp.eq.s32.totalorder %s28, 0
      %p55 = por %p53, %p54
      %s57 = sadd.s32 %s56, 1
      %p60 = scmp.eq.s32.totalorder %s22, 1
      %p61 = scmp.ne.s32.totalorder %s56, %s58
      %p62 = scmp.eq.s32.totalorder %s22, 0
      %p63 = por %p61, %p62
      %p64 = scmp.ne.s32.totalorder %s56, %s58
      %p65 = scmp.eq.s32.totalorder %s27, 1
      %p66 = por %p64, %p65
      %p67 = scmp.ne.s32.totalorder %s58, %s59
      %p68 = scmp.eq.s32.totalorder %s27, 0
      %p69 = por %p67, %p68
      %p70 = scmp.ne.s32.totalorder %s58, %s59
      %p71 = scmp.eq.s32.totalorder %s28, 1
      %p72 = por %p70, %p71
      %p74 = scmp.ne.s32.totalorder %s59, %s73
      %p75 = scmp.eq.s32.totalorder %s28, 0
      %p76 = por %p74, %p75
      %s78 = sadd.s32 %s77, 1
      %p81 = scmp.eq.s32.totalorder %s22, 1
      %p82 = scmp.ne.s32.totalorder %s77, %s79
      %p83 = scmp.eq.s32.totalorder %s22, 0
      %p84 = por %p82, %p83
      %p85 = scmp.ne.s32.totalorder %s77, %s79
      %p86 = scmp.eq.s32.totalorder %s27, 1
      %p87 = por %p85, %p86
      %p88 = scmp.ne.s32.totalorder %s79, %s80
      %p89 = scmp.eq.s32.totalorder %s27, 0
      %p90 = por %p88, %p89
      %p91 = scmp.ne.s32.totalorder %s79, %s80
      %p92 = scmp.eq.s32.totalorder %s28, 1
      %p93 = por %p91, %p92
      %p95 = scmp.ne.s32.totalorder %s80, %s94
      %p96 = scmp.eq.s32.totalorder %s28, 0
      %p97 = por %p95, %p96
      %s99 = sadd.s32 %s98, 1
      %p102 = scmp.eq.s32.totalorder %s22, 1
      %p103 = scmp.ne.s32.totalorder %s98, %s100
      %p104 = scmp.eq.s32.totalorder %s22, 0
      %p105 = por %p103, %p104
      %p106 = scmp.ne.s32.totalorder %s98, %s100
      %p107 = scmp.eq.s32.totalorder %s27, 1
      %p108 = por %p106, %p107
      %p109 = scmp.ne.s32.totalorder %s100, %s101
      %p110 = scmp.eq.s32.totalorder %s27, 0
      %p111 = por %p109, %p110
      %p112 = scmp.ne.s32.totalorder %s100, %s101
      %p113 = scmp.eq.s32.totalorder %s28, 1
      %p114 = por %p112, %p113
      %p116 = scmp.ne.s32.totalorder %s101, %s115
      %p117 = scmp.eq.s32.totalorder %s28, 0
      %p118 = por %p116, %p117
      %s120 = sadd.s32 %s119, 1
      %p123 = scmp.eq.s32.totalorder %s22, 1
      %p124 = scmp.ne.s32.totalorder %s119, %s121
      %p125 = scmp.eq.s32.totalorder %s22, 0
      %p126 = por %p124, %p125
      %p127 = scmp.ne.s32.totalorder %s119, %s121
      %p128 = scmp.eq.s32.totalorder %s27, 1
      %p129 = por %p127, %p128
      %p130 = scmp.ne.s32.totalorder %s121, %s122
      %p131 = scmp.eq.s32.totalorder %s27, 0
      %p132 = por %p130, %p131
      %p133 = scmp.ne.s32.totalorder %s121, %s122
      %p134 = scmp.eq.s32.totalorder %s28, 1
      %p135 = por %p133, %p134
      %p137 = scmp.ne.s32.totalorder %s122, %s136
      %p138 = scmp.eq.s32.totalorder %s28, 0
      %p139 = por %p137, %p138
      %s141 = sadd.s32 %s140, 1
      %p144 = scmp.eq.s32.totalorder %s22, 1
      %p145 = scmp.ne.s32.totalorder %s140, %s142
      %p146 = scmp.eq.s32.totalorder %s22, 0
      %p147 = por %p145, %p146
      %p148 = scmp.ne.s32.totalorder %s140, %s142
      %p149 = scmp.eq.s32.totalorder %s27, 1
      %p150 = por %p148, %p149
      %p151 = scmp.ne.s32.totalorder %s142, %s143
      %p152 = scmp.eq.s32.totalorder %s27, 0
      %p153 = por %p151, %p152
      %p154 = scmp.ne.s32.totalorder %s142, %s143
      %p155 = scmp.eq.s32.totalorder %s28, 1
      %p156 = por %p154, %p155
      %p158 = scmp.ne.s32.totalorder %s143, %s157
      %p159 = scmp.eq.s32.totalorder %s28, 0
      %p160 = por %p158, %p159
      %s162 = sadd.s32 %s161, 1
      %p165 = scmp.eq.s32.totalorder %s22, 1
      %p166 = scmp.ne.s32.totalorder %s161, %s163
      %p167 = scmp.eq.s32.totalorder %s22, 0
      %p168 = por %p166, %p167
      %p169 = scmp.ne.s32.totalorder %s161, %s163
      %p170 = scmp.eq.s32.totalorder %s27, 1
      %p171 = por %p169, %p170
      %p172 = scmp.ne.s32.totalorder %s163, %s164
      %p173 = scmp.eq.s32.totalorder %s27, 0
      %p174 = por %p172, %p173
      %p175 = scmp.ne.s32.totalorder %s163, %s164
      %p176 = scmp.eq.s32.totalorder %s28, 1
      %p177 = por %p175, %p176
      %p179 = scmp.ne.s32.totalorder %s164, %s178
      %p180 = scmp.eq.s32.totalorder %s28, 0
      %p181 = por %p179, %p180
      %s182 = ssub.s32 %s22, %s29
      %p183 = scmp.eq.s32.totalorder %s182, 0
      %s185 = sadd.s32 %s184, 1
      %s186 = scalar_select %p183, %s184, %s185
      %p189 = pneg %p183
      %p190 = scmp.eq.s32.totalorder %s22, 1
      %p191 = por %p189, %p190
      %p192 = scmp.ne.s32.totalorder %s184, %s187
      %p193 = scmp.eq.s32.totalorder %s22, 0
      %p194 = por %p192, %p193
      %p195 = scmp.ne.s32.totalorder %s184, %s187
      %p196 = scmp.eq.s32.totalorder %s27, 1
      %p197 = por %p195, %p196
      %p198 = scmp.ne.s32.totalorder %s187, %s188
      %p199 = scmp.eq.s32.totalorder %s27, 0
      %p200 = por %p198, %p199
      %p201 = scmp.ne.s32.totalorder %s187, %s188
      %p202 = scmp.eq.s32.totalorder %s28, 1
      %p203 = por %p201, %p202
      %p205 = scmp.ne.s32.totalorder %s188, %s204
      %p206 = scmp.eq.s32.totalorder %s28, 0
      %p207 = por %p205, %p206
      %s208 = ssub.s32 %s22, %s29
      %p209 = scmp.eq.s32.totalorder %s208, 0
      %s211 = sadd.s32 %s210, 1
      %s212 = scalar_select %p209, %s210, %s211
      %p215 = pneg %p209
      %p216 = scmp.eq.s32.totalorder %s22, 1
      %p217 = por %p215, %p216
      %p218 = scmp.ne.s32.totalorder %s210, %s213
      %p219 = scmp.eq.s32.totalorder %s22, 0
      %p220 = por %p218, %p219
      %p221 = scmp.ne.s32.totalorder %s210, %s213
      %p222 = scmp.eq.s32.totalorder %s27, 1
      %p223 = por %p221, %p222
      %p224 = scmp.ne.s32.totalorder %s213, %s214
      %p225 = scmp.eq.s32.totalorder %s27, 0
      %p226 = por %p224, %p225
      %p227 = scmp.ne.s32.totalorder %s213, %s214
      %p228 = scmp.eq.s32.totalorder %s28, 1
      %p229 = por %p227, %p228
      %p231 = scmp.ne.s32.totalorder %s214, %s230
      %p232 = scmp.eq.s32.totalorder %s28, 0
      %p233 = por %p231, %p232
      %s234 = ssub.s32 %s22, %s29
      %p235 = scmp.eq.s32.totalorder %s234, 0
      %s237 = sadd.s32 %s236, 1
      %s238 = scalar_select %p235, %s236, %s237
      %p241 = pneg %p235
      %p242 = scmp.eq.s32.totalorder %s22, 1
      %p243 = por %p241, %p242
      %p244 = scmp.ne.s32.totalorder %s236, %s239
      %p245 = scmp.eq.s32.totalorder %s22, 0
      %p246 = por %p244, %p245
      %p247 = scmp.ne.s32.totalorder %s236, %s239
      %p248 = scmp.eq.s32.totalorder %s27, 1
      %p249 = por %p247, %p248
      %p250 = scmp.ne.s32.totalorder %s239, %s240
      %p251 = scmp.eq.s32.totalorder %s27, 0
      %p252 = por %p250, %p251
      %p253 = scmp.ne.s32.totalorder %s239, %s240
      %p254 = scmp.eq.s32.totalorder %s28, 1
      %p255 = por %p253, %p254
      %p257 = scmp.ne.s32.totalorder %s240, %s256
      %p258 = scmp.eq.s32.totalorder %s28, 0
      %p259 = por %p257, %p258
      %p260 = scmp.le.s32.totalorder 1, %s22
      %p261 = scmp.lt.s32.totalorder %s22, 3
      %p262 = pnand %p260, %p261
      %p263 = pneg %p262
      // Predicated region
      $region9: #{tpu_custom_call.1} parent=5 // pred_check
        _
      $region10: #{tpu_custom_call.1} parent=5 // pred_check_branch
        %265 = sbr.rel (%p262) target = $region12
      $region11: #{tpu_custom_call.1} parent=5 // pred_region
        %s266 = ssub.s32 %s22, 1
        // Predicated region
        $region13: #{tpu_custom_call.1} parent=11 // pred_check
          %p267 = pneg %p69
        $region14: #{tpu_custom_call.1} parent=11 // pred_check_branch
          %269 = sbr.rel (%p267) target = $region16
        $region15: #{tpu_custom_call.1} parent=11 // pred_region
          _
        $region16: #{tpu_custom_call.1} parent=11 // pred_fallthru
          _
        // Predicated region
        $region17: #{tpu_custom_call.1} parent=11 // pred_check
          %p270 = pneg %p90
        $region18: #{tpu_custom_call.1} parent=11 // pred_check_branch
          %272 = sbr.rel (%p270) target = $region20
        $region19: #{tpu_custom_call.1} parent=11 // pred_region
          _
        $region20: #{tpu_custom_call.1} parent=11 // pred_fallthru
          _
        // Predicated region
        $region21: #{tpu_custom_call.1} parent=11 // pred_check
          %p273 = pneg %p111
        $region22: #{tpu_custom_call.1} parent=11 // pred_check_branch
          %275 = sbr.rel (%p273) target = $region24
        $region23: #{tpu_custom_call.1} parent=11 // pred_region
          _
        $region24: #{tpu_custom_call.1} parent=11 // pred_fallthru
          _
        // Predicated region
        $region25: #{tpu_custom_call.1} parent=11 // pred_check
          %p276 = pneg %p132
        $region26: #{tpu_custom_call.1} parent=11 // pred_check_branch
          %278 = sbr.rel (%p276) target = $region28
        $region27: #{tpu_custom_call.1} parent=11 // pred_region
          _
        $region28: #{tpu_custom_call.1} parent=11 // pred_fallthru
          _
        // Predicated region
        $region29: #{tpu_custom_call.1} parent=11 // pred_check
          %p279 = pneg %p153
        $region30: #{tpu_custom_call.1} parent=11 // pred_check_branch
          %281 = sbr.rel (%p279) target = $region32
        $region31: #{tpu_custom_call.1} parent=11 // pred_region
          _
        $region32: #{tpu_custom_call.1} parent=11 // pred_fallthru
          _
        // Predicated region
        $region33: #{tpu_custom_call.1} parent=11 // pred_check
          %p282 = pneg %p174
        $region34: #{tpu_custom_call.1} parent=11 // pred_check_branch
          %284 = sbr.rel (%p282) target = $region36
        $region35: #{tpu_custom_call.1} parent=11 // pred_region
          _
        $region36: #{tpu_custom_call.1} parent=11 // pred_fallthru
          _
      $region12: #{tpu_custom_call.1} parent=5 // pred_fallthru
        _
      %p285 = scmp.lt.s32.totalorder %s22, 2
      // Predicated region
      $region37: #{tpu_custom_call.1} parent=5 // pred_check
        %p286 = pneg %p285
      $region38: #{tpu_custom_call.1} parent=5 // pred_check_branch
        %288 = sbr.rel (%p286) target = $region40
      $region39: #{tpu_custom_call.1} parent=5 // pred_region
        // Predicated region
        $region41: #{tpu_custom_call.1} parent=39 // pred_check
          %p289 = pneg %p42
        $region42: #{tpu_custom_call.1} parent=39 // pred_check_branch
          %291 = sbr.rel (%p289) target = $region44
        $region43: #{tpu_custom_call.1} parent=39 // pred_region
          %p292 = scmp.lt.s32.totalorder %s22, 1
          %s293 = scalar_select %p292, %s22, 1
          %s294 = smul.addr %s293, 32
          %s295 = smul.addr %s294, 8
          %s296 = scalar_lea.vmem %s0, %s295
        $region44: #{tpu_custom_call.1} parent=39 // pred_fallthru
          _
      $region40: #{tpu_custom_call.1} parent=5 // pred_fallthru
        _
      %p297 = scmp.le.s32.totalorder 1, %s22
      %p298 = scmp.lt.s32.totalorder %s22, 3
      %p299 = pnand %p297, %p298
      %p300 = pneg %p299
      // Predicated region
      $region45: #{tpu_custom_call.1} parent=5 // pred_check
        _
      $region46: #{tpu_custom_call.1} parent=5 // pred_check_branch
        %302 = sbr.rel (%p299) target = $region48
      $region47: #{tpu_custom_call.1} parent=5 // pred_region
        %s303 = ssub.s32 %s22, 1
        %p304 = scmp.lt.s32.totalorder %s27, 1
        %s305 = scalar_select %p304, %s27, 1
        %s306 = smul.addr %s305, 32
        %s307 = smul.addr %s306, 8
        %s308 = scalar_lea.vmem %s0, %s307
        %p309 = pneg %p48
        %p310 = pneg %p45
        %p311 = pneg %p69
        %p312 = pneg %p66
        %p313 = pneg %p90
        %p314 = pneg %p87
        %p315 = pneg %p111
        %p316 = pneg %p108
        %p317 = pneg %p132
        %p318 = pneg %p129
        %p319 = pneg %p153
        %p320 = pneg %p150
        %p321 = pneg %p174
        %p322 = pneg %p171
        %p323 = pneg %p200
        %p324 = pneg %p197
        %s325 = sand.u32 %s187, 1
        %s326 = scalar_lea.sflag [#allocation5], %s325
        %s327 = sand.u32 %s187, 1
        %s328 = smul.addr %s327, 64
        %s329 = scalar_lea.vmem [#allocation4], %s328
        %p330 = pneg %p226
        %p331 = pneg %p223
        %s332 = sand.u32 %s27, 1
        %s333 = scalar_lea.sflag [#allocation7], %s332
        %s334 = sand.u32 %s213, 1
        %s335 = smul.addr %s334, 64
        %s336 = scalar_lea.vmem [#allocation6], %s335
        %p337 = pneg %p252
        %p338 = pneg %p249
        %s339 = sand.u32 %s27, 1
        %s340 = scalar_lea.sflag [#allocation7], %s339
        %s341 = sand.u32 %s239, 1
        %s342 = smul.addr %s341, 2
        %s343 = scalar_lea.vmem [#allocation8], %s342
        %p344 = scmp.lt.s32.totalorder %s27, 1
        %s345 = scalar_select %p344, %s27, 1
        %s346 = smul.addr %s345, 32
        %s347 = smul.addr %s346, 8
        %s348 = scalar_lea.vmem %s0, %s347
        %vm349 = vcmask 31744
        %350 = vst.msk [vmem:[#allocation2] sm:$0xff] %vm349, 0.0
        %351 = vst.msk [vmem:[#allocation2 + $0x8] sm:$0xff] %vm349, 0.0
        %vm352 = vcmask 25600
        %353 = vst.msk [vmem:[#allocation2 + $0x10] sm:$0x3] %vm352, 0.0
        %354 = vst.msk [vmem:[#allocation2 + $0x18] sm:$0xff] %vm349, 0.0
        %355 = vst.msk [vmem:[#allocation2 + $0x20] sm:$0xff] %vm349, 0.0
        %356 = vst.msk [vmem:[#allocation2 + $0x28] sm:$0x3] %vm352, 0.0
        %357 = vst.msk [vmem:[#allocation2 + $0x30] sm:$0xff] %vm349, 0.0
        %358 = vst.msk [vmem:[#allocation2 + $0x38] sm:$0xff] %vm349, 0.0
        %359 = vst.msk [vmem:[#allocation2 + $0x40] sm:$0x3] %vm352, 0.0
        %360 = vst.msk [vmem:[#allocation2 + $0x48] sm:$0xff] %vm349, 0.0
        %361 = vst.msk [vmem:[#allocation2 + $0x50] sm:$0xff] %vm349, 0.0
        %362 = vst.msk [vmem:[#allocation2 + $0x58] sm:$0x3] %vm352, 0.0
        %363 = vst.msk [vmem:[#allocation2 + $0x60] sm:$0xff] %vm349, 0.0
        %364 = vst.msk [vmem:[#allocation2 + $0x68] sm:$0xff] %vm349, 0.0
        %365 = vst.msk [vmem:[#allocation2 + $0x70] sm:$0x3] %vm352, 0.0
        %366 = vst.msk [vmem:[#allocation2 + $0x78] sm:$0xff] %vm349, 0.0
        %367 = vst.msk [vmem:[#allocation2 + $0x80] sm:$0xff] %vm349, 0.0
        %368 = vst.msk [vmem:[#allocation2 + $0x88] sm:$0x3] %vm352, 0.0
        %369 = vst.msk [vmem:[#allocation2 + $0x90] sm:$0xff] %vm349, 0.0
        %370 = vst.msk [vmem:[#allocation2 + $0x98] sm:$0xff] %vm349, 0.0
        %371 = vst.msk [vmem:[#allocation2 + $0xa0] sm:$0x3] %vm352, 0.0
        %372 = vst.msk [vmem:[#allocation2 + $0xa8] sm:$0xff] %vm349, 0.0
        %373 = vst.msk [vmem:[#allocation2 + $0xb0] sm:$0xff] %vm349, 0.0
        %374 = vst.msk [vmem:[#allocation2 + $0xb8] sm:$0x3] %vm352, 0.0
        %375 = vst.msk [vmem:[#allocation2 + $0xc0] sm:$0xff] %vm349, 0.0
        %376 = vst.msk [vmem:[#allocation2 + $0xc8] sm:$0xff] %vm349, 0.0
        %377 = vst.msk [vmem:[#allocation2 + $0xd0] sm:$0x3] %vm352, 0.0
        %378 = vst.msk [vmem:[#allocation2 + $0xd8] sm:$0xff] %vm349, 0.0
        %379 = vst.msk [vmem:[#allocation2 + $0xe0] sm:$0xff] %vm349, 0.0
        %380 = vst.msk [vmem:[#allocation2 + $0xe8] sm:$0x3] %vm352, 0.0
        %381 = vst.msk [vmem:[#allocation2 + $0xf0] sm:$0xff] %vm349, 0.0
        %382 = vst.msk [vmem:[#allocation2 + $0xf8] sm:$0xff] %vm349, 0.0
        %383 = vst.msk [vmem:[#allocation2 + $0x100] sm:$0x3] %vm352, 0.0
        %384 = vst.msk [vmem:[#allocation2 + $0x108] sm:$0xff] %vm349, 0.0
        %385 = vst.msk [vmem:[#allocation2 + $0x110] sm:$0xff] %vm349, 0.0
        %386 = vst.msk [vmem:[#allocation2 + $0x118] sm:$0x3] %vm352, 0.0
        %387 = vst.msk [vmem:[#allocation2 + $0x120] sm:$0xff] %vm349, 0.0
        %388 = vst.msk [vmem:[#allocation2 + $0x128] sm:$0xff] %vm349, 0.0
        %389 = vst.msk [vmem:[#allocation2 + $0x130] sm:$0x3] %vm352, 0.0
        %390 = vst.msk [vmem:[#allocation2 + $0x138] sm:$0xff] %vm349, 0.0
        %391 = vst.msk [vmem:[#allocation2 + $0x140] sm:$0xff] %vm349, 0.0
        %392 = vst.msk [vmem:[#allocation2 + $0x148] sm:$0x3] %vm352, 0.0
        %393 = vst.msk [vmem:[#allocation2 + $0x150] sm:$0xff] %vm349, 0.0
        %394 = vst.msk [vmem:[#allocation2 + $0x158] sm:$0xff] %vm349, 0.0
        %395 = vst.msk [vmem:[#allocation2 + $0x160] sm:$0x3] %vm352, 0.0
        %396 = vst.msk [vmem:[#allocation2 + $0x168] sm:$0xff] %vm349, 0.0
        %397 = vst.msk [vmem:[#allocation2 + $0x170] sm:$0xff] %vm349, 0.0
        %398 = vst.msk [vmem:[#allocation2 + $0x178] sm:$0x3] %vm352, 0.0
        %399 = vst.msk [vmem:[#allocation2 + $0x180] sm:$0xff] %vm349, 0.0
        %400 = vst.msk [vmem:[#allocation2 + $0x188] sm:$0xff] %vm349, 0.0
        %401 = vst.msk [vmem:[#allocation2 + $0x190] sm:$0x3] %vm352, 0.0
        %402 = vst.msk [vmem:[#allocation2 + $0x198] sm:$0xff] %vm349, 0.0
        %403 = vst.msk [vmem:[#allocation2 + $0x1a0] sm:$0xff] %vm349, 0.0
        %404 = vst.msk [vmem:[#allocation2 + $0x1a8] sm:$0x3] %vm352, 0.0
        %v405 = vld [vmem:[%s348] sm:$0xff]
        %v406 = vld [vmem:[%s348 + $0x8] sm:$0xff]
        %v407 = vld [vmem:[%s348 + $0x10] sm:$0xff]
        %v408 = vld [vmem:[%s348 + $0x18] sm:$0xff]
        %v409 = vld [vmem:[%s348 + $0x20] sm:$0xff]
        %v410 = vld [vmem:[%s348 + $0x28] sm:$0xff]
        %v411 = vld [vmem:[%s348 + $0x30] sm:$0xff]
        %v412 = vld [vmem:[%s348 + $0x38] sm:$0xff]
        %v413 = vld [vmem:[%s348 + $0x40] sm:$0xff]
        %v414 = vld [vmem:[%s348 + $0x48] sm:$0xff]
        %v415 = vld [vmem:[%s348 + $0x50] sm:$0xff]
        %v416 = vld [vmem:[%s348 + $0x58] sm:$0xff]
        %v417 = vld [vmem:[%s348 + $0x60] sm:$0xff]
        %v418 = vld [vmem:[%s348 + $0x68] sm:$0xff]
        %v419 = vld [vmem:[%s348 + $0x70] sm:$0xff]
        %v420 = vld [vmem:[%s348 + $0x78] sm:$0xff]
        %v421 = vld [vmem:[%s348 + $0x80] sm:$0xff]
        %v422 = vld [vmem:[%s348 + $0x88] sm:$0xff]
        %v423 = vld [vmem:[%s348 + $0x90] sm:$0xff]
        %v424 = vld [vmem:[%s348 + $0x98] sm:$0xff]
        %v425 = vld [vmem:[%s348 + $0xa0] sm:$0xff]
        %v426 = vld [vmem:[%s348 + $0xa8] sm:$0xff]
        %v427 = vld [vmem:[%s348 + $0xb0] sm:$0xff]
        %v428 = vld [vmem:[%s348 + $0xb8] sm:$0xff]
        %v429 = vld [vmem:[%s348 + $0xc0] sm:$0xff]
        %v430 = vld [vmem:[%s348 + $0xc8] sm:$0xff]
        %v431 = vld [vmem:[%s348 + $0xd0] sm:$0xff]
        %v432 = vld [vmem:[%s348 + $0xd8] sm:$0xff]
        %v433 = vld [vmem:[%s348 + $0xe0] sm:$0xff]
        %v434 = vld [vmem:[%s348 + $0xe8] sm:$0xff]
        %v435 = vld [vmem:[%s348 + $0xf0] sm:$0xff]
        %v436 = vld [vmem:[%s348 + $0xf8] sm:$0xff]
        %s437 = scalar_lea.vmem [#allocation2], 24
        %438 = vst.msk [vmem:[%s437 + $0x1] sm:$0xff] %vm349, %v405
        %439 = vst.msk [vmem:[%s437 + $0x9] sm:$0xff] %vm349, %v406
        %440 = vst.msk [vmem:[%s437 + $0x19] sm:$0xff] %vm349, %v407
        %441 = vst.msk [vmem:[%s437 + $0x21] sm:$0xff] %vm349, %v408
        %442 = vst.msk [vmem:[%s437 + $0x31] sm:$0xff] %vm349, %v409
        %443 = vst.msk [vmem:[%s437 + $0x39] sm:$0xff] %vm349, %v410
        %444 = vst.msk [vmem:[%s437 + $0x49] sm:$0xff] %vm349, %v411
        %445 = vst.msk [vmem:[%s437 + $0x51] sm:$0xff] %vm349, %v412
        %446 = vst.msk [vmem:[%s437 + $0x61] sm:$0xff] %vm349, %v413
        %447 = vst.msk [vmem:[%s437 + $0x69] sm:$0xff] %vm349, %v414
        %448 = vst.msk [vmem:[%s437 + $0x79] sm:$0xff] %vm349, %v415
        %449 = vst.msk [vmem:[%s437 + $0x81] sm:$0xff] %vm349, %v416
        %450 = vst.msk [vmem:[%s437 + $0x91] sm:$0xff] %vm349, %v417
        %451 = vst.msk [vmem:[%s437 + $0x99] sm:$0xff] %vm349, %v418
        %452 = vst.msk [vmem:[%s437 + $0xa9] sm:$0xff] %vm349, %v419
        %453 = vst.msk [vmem:[%s437 + $0xb1] sm:$0xff] %vm349, %v420
        %454 = vst.msk [vmem:[%s437 + $0xc1] sm:$0xff] %vm349, %v421
        %455 = vst.msk [vmem:[%s437 + $0xc9] sm:$0xff] %vm349, %v422
        %456 = vst.msk [vmem:[%s437 + $0xd9] sm:$0xff] %vm349, %v423
        %457 = vst.msk [vmem:[%s437 + $0xe1] sm:$0xff] %vm349, %v424
        %458 = vst.msk [vmem:[%s437 + $0xf1] sm:$0xff] %vm349, %v425
        %459 = vst.msk [vmem:[%s437 + $0xf9] sm:$0xff] %vm349, %v426
        %460 = vst.msk [vmem:[%s437 + $0x109] sm:$0xff] %vm349, %v427
        %461 = vst.msk [vmem:[%s437 + $0x111] sm:$0xff] %vm349, %v428
        %462 = vst.msk [vmem:[%s437 + $0x121] sm:$0xff] %vm349, %v429
        %463 = vst.msk [vmem:[%s437 + $0x129] sm:$0xff] %vm349, %v430
        %464 = vst.msk [vmem:[%s437 + $0x139] sm:$0xff] %vm349, %v431
        %465 = vst.msk [vmem:[%s437 + $0x141] sm:$0xff] %vm349, %v432
        %466 = vst.msk [vmem:[%s437 + $0x151] sm:$0xff] %vm349, %v433
        %467 = vst.msk [vmem:[%s437 + $0x159] sm:$0xff] %vm349, %v434
        %468 = vst.msk [vmem:[%s437 + $0x169] sm:$0xff] %vm349, %v435
        %469 = vst.msk [vmem:[%s437 + $0x171] sm:$0xff] %vm349, %v436
        %v470 = vld [vmem:[#allocation2] sm:$0xff]
        %v471 = vld [vmem:[#allocation2 + $0x8] sm:$0xff]
        %v472 = vld [vmem:[#allocation2 + $0x18] sm:$0xff]
        %v473 = vld [vmem:[#allocation2 + $0x20] sm:$0xff]
        %v474 = vld [vmem:[#allocation2 + $0x30] sm:$0xff]
        %v475 = vld [vmem:[#allocation2 + $0x38] sm:$0xff]
        %v476 = vld [vmem:[#allocation2 + $0x48] sm:$0xff]
        %v477 = vld [vmem:[#allocation2 + $0x50] sm:$0xff]
        %v478 = vld [vmem:[#allocation2 + $0x60] sm:$0xff]
        %v479 = vld [vmem:[#allocation2 + $0x68] sm:$0xff]
        %v480 = vld [vmem:[#allocation2 + $0x78] sm:$0xff]
        %v481 = vld [vmem:[#allocation2 + $0x80] sm:$0xff]
        %v482 = vld [vmem:[#allocation2 + $0x90] sm:$0xff]
        %v483 = vld [vmem:[#allocation2 + $0x98] sm:$0xff]
        %v484 = vld [vmem:[#allocation2 + $0xa8] sm:$0xff]
        %v485 = vld [vmem:[#allocation2 + $0xb0] sm:$0xff]
        %v486 = vld [vmem:[#allocation2 + $0xc0] sm:$0xff]
        %v487 = vld [vmem:[#allocation2 + $0xc8] sm:$0xff]
        %v488 = vld [vmem:[#allocation2 + $0xd8] sm:$0xff]
        %v489 = vld [vmem:[#allocation2 + $0xe0] sm:$0xff]
        %v490 = vld [vmem:[#allocation2 + $0xf0] sm:$0xff]
        %v491 = vld [vmem:[#allocation2 + $0xf8] sm:$0xff]
        %v492 = vld [vmem:[#allocation2 + $0x108] sm:$0xff]
        %v493 = vld [vmem:[#allocation2 + $0x110] sm:$0xff]
        %v494 = vld [vmem:[#allocation2 + $0x120] sm:$0xff]
        %v495 = vld [vmem:[#allocation2 + $0x128] sm:$0xff]
        %v496 = vld [vmem:[#allocation2 + $0x138] sm:$0xff]
        %v497 = vld [vmem:[#allocation2 + $0x140] sm:$0xff]
        %v498 = vld [vmem:[#allocation2 + $0x150] sm:$0xff]
        %v499 = vld [vmem:[#allocation2 + $0x158] sm:$0xff]
        %v500 = vld [vmem:[#allocation2 + $0x168] sm:$0xff]
        %v501 = vld [vmem:[#allocation2 + $0x170] sm:$0xff]
        %v502 = vld [vmem:[#allocation2 + $0x1] sm:$0xff]
        %v503 = vld [vmem:[#allocation2 + $0x9] sm:$0xff]
        %v504 = vld [vmem:[#allocation2 + $0x19] sm:$0xff]
        %v505 = vld [vmem:[#allocation2 + $0x21] sm:$0xff]
        %v506 = vld [vmem:[#allocation2 + $0x31] sm:$0xff]
        %v507 = vld [vmem:[#allocation2 + $0x39] sm:$0xff]
        %v508 = vld [vmem:[#allocation2 + $0x49] sm:$0xff]
        %v509 = vld [vmem:[#allocation2 + $0x51] sm:$0xff]
        %v510 = vld [vmem:[#allocation2 + $0x61] sm:$0xff]
        %v511 = vld [vmem:[#allocation2 + $0x69] sm:$0xff]
        %v512 = vld [vmem:[#allocation2 + $0x79] sm:$0xff]
        %v513 = vld [vmem:[#allocation2 + $0x81] sm:$0xff]
        %v514 = vld [vmem:[#allocation2 + $0x91] sm:$0xff]
        %v515 = vld [vmem:[#allocation2 + $0x99] sm:$0xff]
        %v516 = vld [vmem:[#allocation2 + $0xa9] sm:$0xff]
        %v517 = vld [vmem:[#allocation2 + $0xb1] sm:$0xff]
        %v518 = vld [vmem:[#allocation2 + $0xc1] sm:$0xff]
        %v519 = vld [vmem:[#allocation2 + $0xc9] sm:$0xff]
        %v520 = vld [vmem:[#allocation2 + $0xd9] sm:$0xff]
        %v521 = vld [vmem:[#allocation2 + $0xe1] sm:$0xff]
        %v522 = vld [vmem:[#allocation2 + $0xf1] sm:$0xff]
        %v523 = vld [vmem:[#allocation2 + $0xf9] sm:$0xff]
        %v524 = vld [vmem:[#allocation2 + $0x109] sm:$0xff]
        %v525 = vld [vmem:[#allocation2 + $0x111] sm:$0xff]
        %v526 = vld [vmem:[#allocation2 + $0x121] sm:$0xff]
        %v527 = vld [vmem:[#allocation2 + $0x129] sm:$0xff]
        %v528 = vld [vmem:[#allocation2 + $0x139] sm:$0xff]
        %v529 = vld [vmem:[#allocation2 + $0x141] sm:$0xff]
        %v530 = vld [vmem:[#allocation2 + $0x151] sm:$0xff]
        %v531 = vld [vmem:[#allocation2 + $0x159] sm:$0xff]
        %v532 = vld [vmem:[#allocation2 + $0x169] sm:$0xff]
        %v533 = vld [vmem:[#allocation2 + $0x171] sm:$0xff]
        %v534 = vld [vmem:[#allocation2 + $0x2] sm:$0xff]
        %v535 = vld [vmem:[#allocation2 + $0xa] sm:$0xff]
        %v536 = vld [vmem:[#allocation2 + $0x1a] sm:$0xff]
        %v537 = vld [vmem:[#allocation2 + $0x22] sm:$0xff]
        %v538 = vld [vmem:[#allocation2 + $0x32] sm:$0xff]
        %v539 = vld [vmem:[#allocation2 + $0x3a] sm:$0xff]
        %v540 = vld [vmem:[#allocation2 + $0x4a] sm:$0xff]
        %v541 = vld [vmem:[#allocation2 + $0x52] sm:$0xff]
        %v542 = vld [vmem:[#allocation2 + $0x62] sm:$0xff]
        %v543 = vld [vmem:[#allocation2 + $0x6a] sm:$0xff]
        %v544 = vld [vmem:[#allocation2 + $0x7a] sm:$0xff]
        %v545 = vld [vmem:[#allocation2 + $0x82] sm:$0xff]
        %v546 = vld [vmem:[#allocation2 + $0x92] sm:$0xff]
        %v547 = vld [vmem:[#allocation2 + $0x9a] sm:$0xff]
        %v548 = vld [vmem:[#allocation2 + $0xaa] sm:$0xff]
        %v549 = vld [vmem:[#allocation2 + $0xb2] sm:$0xff]
        %v550 = vld [vmem:[#allocation2 + $0xc2] sm:$0xff]
        %v551 = vld [vmem:[#allocation2 + $0xca] sm:$0xff]
        %v552 = vld [vmem:[#allocation2 + $0xda] sm:$0xff]
        %v553 = vld [vmem:[#allocation2 + $0xe2] sm:$0xff]
        %v554 = vld [vmem:[#allocation2 + $0xf2] sm:$0xff]
        %v555 = vld [vmem:[#allocation2 + $0xfa] sm:$0xff]
        %v556 = vld [vmem:[#allocation2 + $0x10a] sm:$0xff]
        %v557 = vld [vmem:[#allocation2 + $0x112] sm:$0xff]
        %v558 = vld [vmem:[#allocation2 + $0x122] sm:$0xff]
        %v559 = vld [vmem:[#allocation2 + $0x12a] sm:$0xff]
        %v560 = vld [vmem:[#allocation2 + $0x13a] sm:$0xff]
        %v561 = vld [vmem:[#allocation2 + $0x142] sm:$0xff]
        %v562 = vld [vmem:[#allocation2 + $0x152] sm:$0xff]
        %v563 = vld [vmem:[#allocation2 + $0x15a] sm:$0xff]
        %v564 = vld [vmem:[#allocation2 + $0x16a] sm:$0xff]
        %v565 = vld [vmem:[#allocation2 + $0x172] sm:$0xff]
        %v566 = vld [vmem:[%s437] sm:$0xff]
        %v567 = vld [vmem:[%s437 + $0x8] sm:$0xff]
        %v568 = vld [vmem:[%s437 + $0x18] sm:$0xff]
        %v569 = vld [vmem:[%s437 + $0x20] sm:$0xff]
        %v570 = vld [vmem:[%s437 + $0x30] sm:$0xff]
        %v571 = vld [vmem:[%s437 + $0x38] sm:$0xff]
        %v572 = vld [vmem:[%s437 + $0x48] sm:$0xff]
        %v573 = vld [vmem:[%s437 + $0x50] sm:$0xff]
        %v574 = vld [vmem:[%s437 + $0x60] sm:$0xff]
        %v575 = vld [vmem:[%s437 + $0x68] sm:$0xff]
        %v576 = vld [vmem:[%s437 + $0x78] sm:$0xff]
        %v577 = vld [vmem:[%s437 + $0x80] sm:$0xff]
        %v578 = vld [vmem:[%s437 + $0x90] sm:$0xff]
        %v579 = vld [vmem:[%s437 + $0x98] sm:$0xff]
        %v580 = vld [vmem:[%s437 + $0xa8] sm:$0xff]
        %v581 = vld [vmem:[%s437 + $0xb0] sm:$0xff]
        %v582 = vld [vmem:[%s437 + $0xc0] sm:$0xff]
        %v583 = vld [vmem:[%s437 + $0xc8] sm:$0xff]
        %v584 = vld [vmem:[%s437 + $0xd8] sm:$0xff]
        %v585 = vld [vmem:[%s437 + $0xe0] sm:$0xff]
        %v586 = vld [vmem:[%s437 + $0xf0] sm:$0xff]
        %v587 = vld [vmem:[%s437 + $0xf8] sm:$0xff]
        %v588 = vld [vmem:[%s437 + $0x108] sm:$0xff]
        %v589 = vld [vmem:[%s437 + $0x110] sm:$0xff]
        %v590 = vld [vmem:[%s437 + $0x120] sm:$0xff]
        %v591 = vld [vmem:[%s437 + $0x128] sm:$0xff]
        %v592 = vld [vmem:[%s437 + $0x138] sm:$0xff]
        %v593 = vld [vmem:[%s437 + $0x140] sm:$0xff]
        %v594 = vld [vmem:[%s437 + $0x150] sm:$0xff]
        %v595 = vld [vmem:[%s437 + $0x158] sm:$0xff]
        %v596 = vld [vmem:[%s437 + $0x168] sm:$0xff]
        %v597 = vld [vmem:[%s437 + $0x170] sm:$0xff]
        %v598 = vld [vmem:[%s437 + $0x1] sm:$0xff]
        %v599 = vld [vmem:[%s437 + $0x9] sm:$0xff]
        %v600 = vld [vmem:[%s437 + $0x19] sm:$0xff]
        %v601 = vld [vmem:[%s437 + $0x21] sm:$0xff]
        %v602 = vld [vmem:[%s437 + $0x31] sm:$0xff]
        %v603 = vld [vmem:[%s437 + $0x39] sm:$0xff]
        %v604 = vld [vmem:[%s437 + $0x49] sm:$0xff]
        %v605 = vld [vmem:[%s437 + $0x51] sm:$0xff]
        %v606 = vld [vmem:[%s437 + $0x61] sm:$0xff]
        %v607 = vld [vmem:[%s437 + $0x69] sm:$0xff]
        %v608 = vld [vmem:[%s437 + $0x79] sm:$0xff]
        %v609 = vld [vmem:[%s437 + $0x81] sm:$0xff]
        %v610 = vld [vmem:[%s437 + $0x91] sm:$0xff]
        %v611 = vld [vmem:[%s437 + $0x99] sm:$0xff]
        %v612 = vld [vmem:[%s437 + $0xa9] sm:$0xff]
        %v613 = vld [vmem:[%s437 + $0xb1] sm:$0xff]
        %v614 = vld [vmem:[%s437 + $0xc1] sm:$0xff]
        %v615 = vld [vmem:[%s437 + $0xc9] sm:$0xff]
        %v616 = vld [vmem:[%s437 + $0xd9] sm:$0xff]
        %v617 = vld [vmem:[%s437 + $0xe1] sm:$0xff]
        %v618 = vld [vmem:[%s437 + $0xf1] sm:$0xff]
        %v619 = vld [vmem:[%s437 + $0xf9] sm:$0xff]
        %v620 = vld [vmem:[%s437 + $0x109] sm:$0xff]
        %v621 = vld [vmem:[%s437 + $0x111] sm:$0xff]
        %v622 = vld [vmem:[%s437 + $0x121] sm:$0xff]
        %v623 = vld [vmem:[%s437 + $0x129] sm:$0xff]
        %v624 = vld [vmem:[%s437 + $0x139] sm:$0xff]
        %v625 = vld [vmem:[%s437 + $0x141] sm:$0xff]
        %v626 = vld [vmem:[%s437 + $0x151] sm:$0xff]
        %v627 = vld [vmem:[%s437 + $0x159] sm:$0xff]
        %v628 = vld [vmem:[%s437 + $0x169] sm:$0xff]
        %v629 = vld [vmem:[%s437 + $0x171] sm:$0xff]
        %v630 = vld [vmem:[%s437 + $0x2] sm:$0xff]
        %v631 = vld [vmem:[%s437 + $0xa] sm:$0xff]
        %v632 = vld [vmem:[%s437 + $0x1a] sm:$0xff]
        %v633 = vld [vmem:[%s437 + $0x22] sm:$0xff]
        %v634 = vld [vmem:[%s437 + $0x32] sm:$0xff]
        %v635 = vld [vmem:[%s437 + $0x3a] sm:$0xff]
        %v636 = vld [vmem:[%s437 + $0x4a] sm:$0xff]
        %v637 = vld [vmem:[%s437 + $0x52] sm:$0xff]
        %v638 = vld [vmem:[%s437 + $0x62] sm:$0xff]
        %v639 = vld [vmem:[%s437 + $0x6a] sm:$0xff]
        %v640 = vld [vmem:[%s437 + $0x7a] sm:$0xff]
        %v641 = vld [vmem:[%s437 + $0x82] sm:$0xff]
        %v642 = vld [vmem:[%s437 + $0x92] sm:$0xff]
        %v643 = vld [vmem:[%s437 + $0x9a] sm:$0xff]
        %v644 = vld [vmem:[%s437 + $0xaa] sm:$0xff]
        %v645 = vld [vmem:[%s437 + $0xb2] sm:$0xff]
        %v646 = vld [vmem:[%s437 + $0xc2] sm:$0xff]
        %v647 = vld [vmem:[%s437 + $0xca] sm:$0xff]
        %v648 = vld [vmem:[%s437 + $0xda] sm:$0xff]
        %v649 = vld [vmem:[%s437 + $0xe2] sm:$0xff]
        %v650 = vld [vmem:[%s437 + $0xf2] sm:$0xff]
        %v651 = vld [vmem:[%s437 + $0xfa] sm:$0xff]
        %v652 = vld [vmem:[%s437 + $0x10a] sm:$0xff]
        %v653 = vld [vmem:[%s437 + $0x112] sm:$0xff]
        %v654 = vld [vmem:[%s437 + $0x122] sm:$0xff]
        %v655 = vld [vmem:[%s437 + $0x12a] sm:$0xff]
        %v656 = vld [vmem:[%s437 + $0x13a] sm:$0xff]
        %v657 = vld [vmem:[%s437 + $0x142] sm:$0xff]
        %v658 = vld [vmem:[%s437 + $0x152] sm:$0xff]
        %v659 = vld [vmem:[%s437 + $0x15a] sm:$0xff]
        %v660 = vld [vmem:[%s437 + $0x16a] sm:$0xff]
        %v661 = vld [vmem:[%s437 + $0x172] sm:$0xff]
        %s662 = scalar_lea.vmem [#allocation2], 48
        %v663 = vld [vmem:[%s662] sm:$0xff]
        %v664 = vld [vmem:[%s662 + $0x8] sm:$0xff]
        %v665 = vld [vmem:[%s662 + $0x18] sm:$0xff]
        %v666 = vld [vmem:[%s662 + $0x20] sm:$0xff]
        %v667 = vld [vmem:[%s662 + $0x30] sm:$0xff]
        %v668 = vld [vmem:[%s662 + $0x38] sm:$0xff]
        %v669 = vld [vmem:[%s662 + $0x48] sm:$0xff]
        %v670 = vld [vmem:[%s662 + $0x50] sm:$0xff]
        %v671 = vld [vmem:[%s662 + $0x60] sm:$0xff]
        %v672 = vld [vmem:[%s662 + $0x68] sm:$0xff]
        %v673 = vld [vmem:[%s662 + $0x78] sm:$0xff]
        %v674 = vld [vmem:[%s662 + $0x80] sm:$0xff]
        %v675 = vld [vmem:[%s662 + $0x90] sm:$0xff]
        %v676 = vld [vmem:[%s662 + $0x98] sm:$0xff]
        %v677 = vld [vmem:[%s662 + $0xa8] sm:$0xff]
        %v678 = vld [vmem:[%s662 + $0xb0] sm:$0xff]
        %v679 = vld [vmem:[%s662 + $0xc0] sm:$0xff]
        %v680 = vld [vmem:[%s662 + $0xc8] sm:$0xff]
        %v681 = vld [vmem:[%s662 + $0xd8] sm:$0xff]
        %v682 = vld [vmem:[%s662 + $0xe0] sm:$0xff]
        %v683 = vld [vmem:[%s662 + $0xf0] sm:$0xff]
        %v684 = vld [vmem:[%s662 + $0xf8] sm:$0xff]
        %v685 = vld [vmem:[%s662 + $0x108] sm:$0xff]
        %v686 = vld [vmem:[%s662 + $0x110] sm:$0xff]
        %v687 = vld [vmem:[%s662 + $0x120] sm:$0xff]
        %v688 = vld [vmem:[%s662 + $0x128] sm:$0xff]
        %v689 = vld [vmem:[%s662 + $0x138] sm:$0xff]
        %v690 = vld [vmem:[%s662 + $0x140] sm:$0xff]
        %v691 = vld [vmem:[%s662 + $0x150] sm:$0xff]
        %v692 = vld [vmem:[%s662 + $0x158] sm:$0xff]
        %v693 = vld [vmem:[%s662 + $0x168] sm:$0xff]
        %v694 = vld [vmem:[%s662 + $0x170] sm:$0xff]
        %v695 = vld [vmem:[%s662 + $0x1] sm:$0xff]
        %v696 = vld [vmem:[%s662 + $0x9] sm:$0xff]
        %v697 = vld [vmem:[%s662 + $0x19] sm:$0xff]
        %v698 = vld [vmem:[%s662 + $0x21] sm:$0xff]
        %v699 = vld [vmem:[%s662 + $0x31] sm:$0xff]
        %v700 = vld [vmem:[%s662 + $0x39] sm:$0xff]
        %v701 = vld [vmem:[%s662 + $0x49] sm:$0xff]
        %v702 = vld [vmem:[%s662 + $0x51] sm:$0xff]
        %v703 = vld [vmem:[%s662 + $0x61] sm:$0xff]
        %v704 = vld [vmem:[%s662 + $0x69] sm:$0xff]
        %v705 = vld [vmem:[%s662 + $0x79] sm:$0xff]
        %v706 = vld [vmem:[%s662 + $0x81] sm:$0xff]
        %v707 = vld [vmem:[%s662 + $0x91] sm:$0xff]
        %v708 = vld [vmem:[%s662 + $0x99] sm:$0xff]
        %v709 = vld [vmem:[%s662 + $0xa9] sm:$0xff]
        %v710 = vld [vmem:[%s662 + $0xb1] sm:$0xff]
        %v711 = vld [vmem:[%s662 + $0xc1] sm:$0xff]
        %v712 = vld [vmem:[%s662 + $0xc9] sm:$0xff]
        %v713 = vld [vmem:[%s662 + $0xd9] sm:$0xff]
        %v714 = vld [vmem:[%s662 + $0xe1] sm:$0xff]
        %v715 = vld [vmem:[%s662 + $0xf1] sm:$0xff]
        %v716 = vld [vmem:[%s662 + $0xf9] sm:$0xff]
        %v717 = vld [vmem:[%s662 + $0x109] sm:$0xff]
        %v718 = vld [vmem:[%s662 + $0x111] sm:$0xff]
        %v719 = vld [vmem:[%s662 + $0x121] sm:$0xff]
        %v720 = vld [vmem:[%s662 + $0x129] sm:$0xff]
        %v721 = vld [vmem:[%s662 + $0x139] sm:$0xff]
        %v722 = vld [vmem:[%s662 + $0x141] sm:$0xff]
        %v723 = vld [vmem:[%s662 + $0x151] sm:$0xff]
        %v724 = vld [vmem:[%s662 + $0x159] sm:$0xff]
        %v725 = vld [vmem:[%s662 + $0x169] sm:$0xff]
        %v726 = vld [vmem:[%s662 + $0x171] sm:$0xff]
        %v727 = vld [vmem:[%s662 + $0x2] sm:$0xff]
        %v728 = vld [vmem:[%s662 + $0xa] sm:$0xff]
        %v729 = vld [vmem:[%s662 + $0x1a] sm:$0xff]
        %v730 = vld [vmem:[%s662 + $0x22] sm:$0xff]
        %v731 = vld [vmem:[%s662 + $0x32] sm:$0xff]
        %v732 = vld [vmem:[%s662 + $0x3a] sm:$0xff]
        %v733 = vld [vmem:[%s662 + $0x4a] sm:$0xff]
        %v734 = vld [vmem:[%s662 + $0x52] sm:$0xff]
        %v735 = vld [vmem:[%s662 + $0x62] sm:$0xff]
        %v736 = vld [vmem:[%s662 + $0x6a] sm:$0xff]
        %v737 = vld [vmem:[%s662 + $0x7a] sm:$0xff]
        %v738 = vld [vmem:[%s662 + $0x82] sm:$0xff]
        %v739 = vld [vmem:[%s662 + $0x92] sm:$0xff]
        %v740 = vld [vmem:[%s662 + $0x9a] sm:$0xff]
        %v741 = vld [vmem:[%s662 + $0xaa] sm:$0xff]
        %v742 = vld [vmem:[%s662 + $0xb2] sm:$0xff]
        %v743 = vld [vmem:[%s662 + $0xc2] sm:$0xff]
        %v744 = vld [vmem:[%s662 + $0xca] sm:$0xff]
        %v745 = vld [vmem:[%s662 + $0xda] sm:$0xff]
        %v746 = vld [vmem:[%s662 + $0xe2] sm:$0xff]
        %v747 = vld [vmem:[%s662 + $0xf2] sm:$0xff]
        %v748 = vld [vmem:[%s662 + $0xfa] sm:$0xff]
        %v749 = vld [vmem:[%s662 + $0x10a] sm:$0xff]
        %v750 = vld [vmem:[%s662 + $0x112] sm:$0xff]
        %v751 = vld [vmem:[%s662 + $0x122] sm:$0xff]
        %v752 = vld [vmem:[%s662 + $0x12a] sm:$0xff]
        %v753 = vld [vmem:[%s662 + $0x13a] sm:$0xff]
        %v754 = vld [vmem:[%s662 + $0x142] sm:$0xff]
        %v755 = vld [vmem:[%s662 + $0x152] sm:$0xff]
        %v756 = vld [vmem:[%s662 + $0x15a] sm:$0xff]
        %v757 = vld [vmem:[%s662 + $0x16a] sm:$0xff]
        %v758 = vld [vmem:[%s662 + $0x172] sm:$0xff]
        %791 = vrot.lane.b32.xlu0 %v502, 4
        %v792 = vpop.permute.xlu0 %791
        %793 = vrot.lane.b32.xlu0 %v503, 4
        %v794 = vpop.permute.xlu0 %793
        %795 = vrot.lane.b32.xlu0 %v504, 4
        %v796 = vpop.permute.xlu0 %795
        %797 = vrot.lane.b32.xlu0 %v505, 4
        %v798 = vpop.permute.xlu0 %797
        %799 = vrot.lane.b32.xlu0 %v506, 4
        %v800 = vpop.permute.xlu0 %799
        %801 = vrot.lane.b32.xlu0 %v507, 4
        %v802 = vpop.permute.xlu0 %801
        %803 = vrot.lane.b32.xlu0 %v508, 4
        %v804 = vpop.permute.xlu0 %803
        %805 = vrot.lane.b32.xlu0 %v509, 4
        %v806 = vpop.permute.xlu0 %805
        %807 = vrot.lane.b32.xlu0 %v510, 4
        %v808 = vpop.permute.xlu0 %807
        %809 = vrot.lane.b32.xlu0 %v511, 4
        %v810 = vpop.permute.xlu0 %809
        %811 = vrot.lane.b32.xlu0 %v512, 4
        %v812 = vpop.permute.xlu0 %811
        %813 = vrot.lane.b32.xlu0 %v513, 4
        %v814 = vpop.permute.xlu0 %813
        %815 = vrot.lane.b32.xlu0 %v514, 4
        %v816 = vpop.permute.xlu0 %815
        %817 = vrot.lane.b32.xlu0 %v515, 4
        %v818 = vpop.permute.xlu0 %817
        %819 = vrot.lane.b32.xlu0 %v516, 4
        %v820 = vpop.permute.xlu0 %819
        %821 = vrot.lane.b32.xlu0 %v517, 4
        %v822 = vpop.permute.xlu0 %821
        %823 = vrot.lane.b32.xlu0 %v518, 4
        %v824 = vpop.permute.xlu0 %823
        %825 = vrot.lane.b32.xlu0 %v519, 4
        %v826 = vpop.permute.xlu0 %825
        %827 = vrot.lane.b32.xlu0 %v520, 4
        %v828 = vpop.permute.xlu0 %827
        %829 = vrot.lane.b32.xlu0 %v521, 4
        %v830 = vpop.permute.xlu0 %829
        %831 = vrot.lane.b32.xlu0 %v522, 4
        %v832 = vpop.permute.xlu0 %831
        %833 = vrot.lane.b32.xlu0 %v523, 4
        %v834 = vpop.permute.xlu0 %833
        %835 = vrot.lane.b32.xlu0 %v524, 4
        %v836 = vpop.permute.xlu0 %835
        %837 = vrot.lane.b32.xlu0 %v525, 4
        %v838 = vpop.permute.xlu0 %837
        %839 = vrot.lane.b32.xlu0 %v526, 4
        %v840 = vpop.permute.xlu0 %839
        %841 = vrot.lane.b32.xlu0 %v527, 4
        %v842 = vpop.permute.xlu0 %841
        %843 = vrot.lane.b32.xlu0 %v528, 4
        %v844 = vpop.permute.xlu0 %843
        %845 = vrot.lane.b32.xlu0 %v529, 4
        %v846 = vpop.permute.xlu0 %845
        %847 = vrot.lane.b32.xlu0 %v530, 4
        %v848 = vpop.permute.xlu0 %847
        %849 = vrot.lane.b32.xlu0 %v531, 4
        %v850 = vpop.permute.xlu0 %849
        %851 = vrot.lane.b32.xlu0 %v532, 4
        %v852 = vpop.permute.xlu0 %851
        %853 = vrot.lane.b32.xlu0 %v533, 4
        %v854 = vpop.permute.xlu0 %853
        %919 = vrot.lane.b32.xlu0 %v534, 8
        %v920 = vpop.permute.xlu0 %919
        %921 = vrot.lane.b32.xlu0 %v535, 8
        %v922 = vpop.permute.xlu0 %921
        %923 = vrot.lane.b32.xlu0 %v536, 8
        %v924 = vpop.permute.xlu0 %923
        %925 = vrot.lane.b32.xlu0 %v537, 8
        %v926 = vpop.permute.xlu0 %925
        %927 = vrot.lane.b32.xlu0 %v538, 8
        %v928 = vpop.permute.xlu0 %927
        %929 = vrot.lane.b32.xlu0 %v539, 8
        %v930 = vpop.permute.xlu0 %929
        %931 = vrot.lane.b32.xlu0 %v540, 8
        %v932 = vpop.permute.xlu0 %931
        %933 = vrot.lane.b32.xlu0 %v541, 8
        %v934 = vpop.permute.xlu0 %933
        %935 = vrot.lane.b32.xlu0 %v542, 8
        %v936 = vpop.permute.xlu0 %935
        %937 = vrot.lane.b32.xlu0 %v543, 8
        %v938 = vpop.permute.xlu0 %937
        %939 = vrot.lane.b32.xlu0 %v544, 8
        %v940 = vpop.permute.xlu0 %939
        %941 = vrot.lane.b32.xlu0 %v545, 8
        %v942 = vpop.permute.xlu0 %941
        %943 = vrot.lane.b32.xlu0 %v546, 8
        %v944 = vpop.permute.xlu0 %943
        %945 = vrot.lane.b32.xlu0 %v547, 8
        %v946 = vpop.permute.xlu0 %945
        %947 = vrot.lane.b32.xlu0 %v548, 8
        %v948 = vpop.permute.xlu0 %947
        %949 = vrot.lane.b32.xlu0 %v549, 8
        %v950 = vpop.permute.xlu0 %949
        %951 = vrot.lane.b32.xlu0 %v550, 8
        %v952 = vpop.permute.xlu0 %951
        %953 = vrot.lane.b32.xlu0 %v551, 8
        %v954 = vpop.permute.xlu0 %953
        %955 = vrot.lane.b32.xlu0 %v552, 8
        %v956 = vpop.permute.xlu0 %955
        %957 = vrot.lane.b32.xlu0 %v553, 8
        %v958 = vpop.permute.xlu0 %957
        %959 = vrot.lane.b32.xlu0 %v554, 8
        %v960 = vpop.permute.xlu0 %959
        %961 = vrot.lane.b32.xlu0 %v555, 8
        %v962 = vpop.permute.xlu0 %961
        %963 = vrot.lane.b32.xlu0 %v556, 8
        %v964 = vpop.permute.xlu0 %963
        %965 = vrot.lane.b32.xlu0 %v557, 8
        %v966 = vpop.permute.xlu0 %965
        %967 = vrot.lane.b32.xlu0 %v558, 8
        %v968 = vpop.permute.xlu0 %967
        %969 = vrot.lane.b32.xlu0 %v559, 8
        %v970 = vpop.permute.xlu0 %969
        %971 = vrot.lane.b32.xlu0 %v560, 8
        %v972 = vpop.permute.xlu0 %971
        %973 = vrot.lane.b32.xlu0 %v561, 8
        %v974 = vpop.permute.xlu0 %973
        %975 = vrot.lane.b32.xlu0 %v562, 8
        %v976 = vpop.permute.xlu0 %975
        %977 = vrot.lane.b32.xlu0 %v563, 8
        %v978 = vpop.permute.xlu0 %977
        %979 = vrot.lane.b32.xlu0 %v564, 8
        %v980 = vpop.permute.xlu0 %979
        %981 = vrot.lane.b32.xlu0 %v565, 8
        %v982 = vpop.permute.xlu0 %981
        %1047 = vrot.lane.b32.xlu0 %v566, 12
        %v1048 = vpop.permute.xlu0 %1047
        %1049 = vrot.lane.b32.xlu0 %v567, 12
        %v1050 = vpop.permute.xlu0 %1049
        %1051 = vrot.lane.b32.xlu0 %v568, 12
        %v1052 = vpop.permute.xlu0 %1051
        %1053 = vrot.lane.b32.xlu0 %v569, 12
        %v1054 = vpop.permute.xlu0 %1053
        %1055 = vrot.lane.b32.xlu0 %v570, 12
        %v1056 = vpop.permute.xlu0 %1055
        %1057 = vrot.lane.b32.xlu0 %v571, 12
        %v1058 = vpop.permute.xlu0 %1057
        %1059 = vrot.lane.b32.xlu0 %v572, 12
        %v1060 = vpop.permute.xlu0 %1059
        %1061 = vrot.lane.b32.xlu0 %v573, 12
        %v1062 = vpop.permute.xlu0 %1061
        %1063 = vrot.lane.b32.xlu0 %v574, 12
        %v1064 = vpop.permute.xlu0 %1063
        %1065 = vrot.lane.b32.xlu0 %v575, 12
        %v1066 = vpop.permute.xlu0 %1065
        %1067 = vrot.lane.b32.xlu0 %v576, 12
        %v1068 = vpop.permute.xlu0 %1067
        %1069 = vrot.lane.b32.xlu0 %v577, 12
        %v1070 = vpop.permute.xlu0 %1069
        %1071 = vrot.lane.b32.xlu0 %v578, 12
        %v1072 = vpop.permute.xlu0 %1071
        %1073 = vrot.lane.b32.xlu0 %v579, 12
        %v1074 = vpop.permute.xlu0 %1073
        %1075 = vrot.lane.b32.xlu0 %v580, 12
        %v1076 = vpop.permute.xlu0 %1075
        %1077 = vrot.lane.b32.xlu0 %v581, 12
        %v1078 = vpop.permute.xlu0 %1077
        %1079 = vrot.lane.b32.xlu0 %v582, 12
        %v1080 = vpop.permute.xlu0 %1079
        %1081 = vrot.lane.b32.xlu0 %v583, 12
        %v1082 = vpop.permute.xlu0 %1081
        %1083 = vrot.lane.b32.xlu0 %v584, 12
        %v1084 = vpop.permute.xlu0 %1083
        %1085 = vrot.lane.b32.xlu0 %v585, 12
        %v1086 = vpop.permute.xlu0 %1085
        %1087 = vrot.lane.b32.xlu0 %v586, 12
        %v1088 = vpop.permute.xlu0 %1087
        %1089 = vrot.lane.b32.xlu0 %v587, 12
        %v1090 = vpop.permute.xlu0 %1089
        %1091 = vrot.lane.b32.xlu0 %v588, 12
        %v1092 = vpop.permute.xlu0 %1091
        %1093 = vrot.lane.b32.xlu0 %v589, 12
        %v1094 = vpop.permute.xlu0 %1093
        %1095 = vrot.lane.b32.xlu0 %v590, 12
        %v1096 = vpop.permute.xlu0 %1095
        %1097 = vrot.lane.b32.xlu0 %v591, 12
        %v1098 = vpop.permute.xlu0 %1097
        %1099 = vrot.lane.b32.xlu0 %v592, 12
        %v1100 = vpop.permute.xlu0 %1099
        %1101 = vrot.lane.b32.xlu0 %v593, 12
        %v1102 = vpop.permute.xlu0 %1101
        %1103 = vrot.lane.b32.xlu0 %v594, 12
        %v1104 = vpop.permute.xlu0 %1103
        %1105 = vrot.lane.b32.xlu0 %v595, 12
        %v1106 = vpop.permute.xlu0 %1105
        %1107 = vrot.lane.b32.xlu0 %v596, 12
        %v1108 = vpop.permute.xlu0 %1107
        %1109 = vrot.lane.b32.xlu0 %v597, 12
        %v1110 = vpop.permute.xlu0 %1109
        %1175 = vrot.lane.b32.xlu0 %v598, 16
        %v1176 = vpop.permute.xlu0 %1175
        %1177 = vrot.lane.b32.xlu0 %v599, 16
        %v1178 = vpop.permute.xlu0 %1177
        %1179 = vrot.lane.b32.xlu0 %v600, 16
        %v1180 = vpop.permute.xlu0 %1179
        %1181 = vrot.lane.b32.xlu0 %v601, 16
        %v1182 = vpop.permute.xlu0 %1181
        %1183 = vrot.lane.b32.xlu0 %v602, 16
        %v1184 = vpop.permute.xlu0 %1183
        %1185 = vrot.lane.b32.xlu0 %v603, 16
        %v1186 = vpop.permute.xlu0 %1185
        %1187 = vrot.lane.b32.xlu0 %v604, 16
        %v1188 = vpop.permute.xlu0 %1187
        %1189 = vrot.lane.b32.xlu0 %v605, 16
        %v1190 = vpop.permute.xlu0 %1189
        %1191 = vrot.lane.b32.xlu0 %v606, 16
        %v1192 = vpop.permute.xlu0 %1191
        %1193 = vrot.lane.b32.xlu0 %v607, 16
        %v1194 = vpop.permute.xlu0 %1193
        %1195 = vrot.lane.b32.xlu0 %v608, 16
        %v1196 = vpop.permute.xlu0 %1195
        %1197 = vrot.lane.b32.xlu0 %v609, 16
        %v1198 = vpop.permute.xlu0 %1197
        %1199 = vrot.lane.b32.xlu0 %v610, 16
        %v1200 = vpop.permute.xlu0 %1199
        %1201 = vrot.lane.b32.xlu0 %v611, 16
        %v1202 = vpop.permute.xlu0 %1201
        %1203 = vrot.lane.b32.xlu0 %v612, 16
        %v1204 = vpop.permute.xlu0 %1203
        %1205 = vrot.lane.b32.xlu0 %v613, 16
        %v1206 = vpop.permute.xlu0 %1205
        %1207 = vrot.lane.b32.xlu0 %v614, 16
        %v1208 = vpop.permute.xlu0 %1207
        %1209 = vrot.lane.b32.xlu0 %v615, 16
        %v1210 = vpop.permute.xlu0 %1209
        %1211 = vrot.lane.b32.xlu0 %v616, 16
        %v1212 = vpop.permute.xlu0 %1211
        %1213 = vrot.lane.b32.xlu0 %v617, 16
        %v1214 = vpop.permute.xlu0 %1213
        %1215 = vrot.lane.b32.xlu0 %v618, 16
        %v1216 = vpop.permute.xlu0 %1215
        %1217 = vrot.lane.b32.xlu0 %v619, 16
        %v1218 = vpop.permute.xlu0 %1217
        %1219 = vrot.lane.b32.xlu0 %v620, 16
        %v1220 = vpop.permute.xlu0 %1219
        %1221 = vrot.lane.b32.xlu0 %v621, 16
        %v1222 = vpop.permute.xlu0 %1221
        %1223 = vrot.lane.b32.xlu0 %v622, 16
        %v1224 = vpop.permute.xlu0 %1223
        %1225 = vrot.lane.b32.xlu0 %v623, 16
        %v1226 = vpop.permute.xlu0 %1225
        %1227 = vrot.lane.b32.xlu0 %v624, 16
        %v1228 = vpop.permute.xlu0 %1227
        %1229 = vrot.lane.b32.xlu0 %v625, 16
        %v1230 = vpop.permute.xlu0 %1229
        %1231 = vrot.lane.b32.xlu0 %v626, 16
        %v1232 = vpop.permute.xlu0 %1231
        %1233 = vrot.lane.b32.xlu0 %v627, 16
        %v1234 = vpop.permute.xlu0 %1233
        %1235 = vrot.lane.b32.xlu0 %v628, 16
        %v1236 = vpop.permute.xlu0 %1235
        %1237 = vrot.lane.b32.xlu0 %v629, 16
        %v1238 = vpop.permute.xlu0 %1237
        %1303 = vrot.lane.b32.xlu0 %v630, 20
        %v1304 = vpop.permute.xlu0 %1303
        %1305 = vrot.lane.b32.xlu0 %v631, 20
        %v1306 = vpop.permute.xlu0 %1305
        %1307 = vrot.lane.b32.xlu0 %v632, 20
        %v1308 = vpop.permute.xlu0 %1307
        %1309 = vrot.lane.b32.xlu0 %v633, 20
        %v1310 = vpop.permute.xlu0 %1309
        %1311 = vrot.lane.b32.xlu0 %v634, 20
        %v1312 = vpop.permute.xlu0 %1311
        %1313 = vrot.lane.b32.xlu0 %v635, 20
        %v1314 = vpop.permute.xlu0 %1313
        %1315 = vrot.lane.b32.xlu0 %v636, 20
        %v1316 = vpop.permute.xlu0 %1315
        %1317 = vrot.lane.b32.xlu0 %v637, 20
        %v1318 = vpop.permute.xlu0 %1317
        %1319 = vrot.lane.b32.xlu0 %v638, 20
        %v1320 = vpop.permute.xlu0 %1319
        %1321 = vrot.lane.b32.xlu0 %v639, 20
        %v1322 = vpop.permute.xlu0 %1321
        %1323 = vrot.lane.b32.xlu0 %v640, 20
        %v1324 = vpop.permute.xlu0 %1323
        %1325 = vrot.lane.b32.xlu0 %v641, 20
        %v1326 = vpop.permute.xlu0 %1325
        %1327 = vrot.lane.b32.xlu0 %v642, 20
        %v1328 = vpop.permute.xlu0 %1327
        %1329 = vrot.lane.b32.xlu0 %v643, 20
        %v1330 = vpop.permute.xlu0 %1329
        %1331 = vrot.lane.b32.xlu0 %v644, 20
        %v1332 = vpop.permute.xlu0 %1331
        %1333 = vrot.lane.b32.xlu0 %v645, 20
        %v1334 = vpop.permute.xlu0 %1333
        %1335 = vrot.lane.b32.xlu0 %v646, 20
        %v1336 = vpop.permute.xlu0 %1335
        %1337 = vrot.lane.b32.xlu0 %v647, 20
        %v1338 = vpop.permute.xlu0 %1337
        %1339 = vrot.lane.b32.xlu0 %v648, 20
        %v1340 = vpop.permute.xlu0 %1339
        %1341 = vrot.lane.b32.xlu0 %v649, 20
        %v1342 = vpop.permute.xlu0 %1341
        %1343 = vrot.lane.b32.xlu0 %v650, 20
        %v1344 = vpop.permute.xlu0 %1343
        %1345 = vrot.lane.b32.xlu0 %v651, 20
        %v1346 = vpop.permute.xlu0 %1345
        %1347 = vrot.lane.b32.xlu0 %v652, 20
        %v1348 = vpop.permute.xlu0 %1347
        %1349 = vrot.lane.b32.xlu0 %v653, 20
        %v1350 = vpop.permute.xlu0 %1349
        %1351 = vrot.lane.b32.xlu0 %v654, 20
        %v1352 = vpop.permute.xlu0 %1351
        %1353 = vrot.lane.b32.xlu0 %v655, 20
        %v1354 = vpop.permute.xlu0 %1353
        %1355 = vrot.lane.b32.xlu0 %v656, 20
        %v1356 = vpop.permute.xlu0 %1355
        %1357 = vrot.lane.b32.xlu0 %v657, 20
        %v1358 = vpop.permute.xlu0 %1357
        %1359 = vrot.lane.b32.xlu0 %v658, 20
        %v1360 = vpop.permute.xlu0 %1359
        %1361 = vrot.lane.b32.xlu0 %v659, 20
        %v1362 = vpop.permute.xlu0 %1361
        %1363 = vrot.lane.b32.xlu0 %v660, 20
        %v1364 = vpop.permute.xlu0 %1363
        %1365 = vrot.lane.b32.xlu0 %v661, 20
        %v1366 = vpop.permute.xlu0 %1365
        %1431 = vrot.lane.b32.xlu0 %v663, 24
        %v1432 = vpop.permute.xlu0 %1431
        %1433 = vrot.lane.b32.xlu0 %v664, 24
        %v1434 = vpop.permute.xlu0 %1433
        %1435 = vrot.lane.b32.xlu0 %v665, 24
        %v1436 = vpop.permute.xlu0 %1435
        %1437 = vrot.lane.b32.xlu0 %v666, 24
        %v1438 = vpop.permute.xlu0 %1437
        %1439 = vrot.lane.b32.xlu0 %v667, 24
        %v1440 = vpop.permute.xlu0 %1439
        %1441 = vrot.lane.b32.xlu0 %v668, 24
        %v1442 = vpop.permute.xlu0 %1441
        %1443 = vrot.lane.b32.xlu0 %v669, 24
        %v1444 = vpop.permute.xlu0 %1443
        %1445 = vrot.lane.b32.xlu0 %v670, 24
        %v1446 = vpop.permute.xlu0 %1445
        %1447 = vrot.lane.b32.xlu0 %v671, 24
        %v1448 = vpop.permute.xlu0 %1447
        %1449 = vrot.lane.b32.xlu0 %v672, 24
        %v1450 = vpop.permute.xlu0 %1449
        %1451 = vrot.lane.b32.xlu0 %v673, 24
        %v1452 = vpop.permute.xlu0 %1451
        %1453 = vrot.lane.b32.xlu0 %v674, 24
        %v1454 = vpop.permute.xlu0 %1453
        %1455 = vrot.lane.b32.xlu0 %v675, 24
        %v1456 = vpop.permute.xlu0 %1455
        %1457 = vrot.lane.b32.xlu0 %v676, 24
        %v1458 = vpop.permute.xlu0 %1457
        %1459 = vrot.lane.b32.xlu0 %v677, 24
        %v1460 = vpop.permute.xlu0 %1459
        %1461 = vrot.lane.b32.xlu0 %v678, 24
        %v1462 = vpop.permute.xlu0 %1461
        %1463 = vrot.lane.b32.xlu0 %v679, 24
        %v1464 = vpop.permute.xlu0 %1463
        %1465 = vrot.lane.b32.xlu0 %v680, 24
        %v1466 = vpop.permute.xlu0 %1465
        %1467 = vrot.lane.b32.xlu0 %v681, 24
        %v1468 = vpop.permute.xlu0 %1467
        %1469 = vrot.lane.b32.xlu0 %v682, 24
        %v1470 = vpop.permute.xlu0 %1469
        %1471 = vrot.lane.b32.xlu0 %v683, 24
        %v1472 = vpop.permute.xlu0 %1471
        %1473 = vrot.lane.b32.xlu0 %v684, 24
        %v1474 = vpop.permute.xlu0 %1473
        %1475 = vrot.lane.b32.xlu0 %v685, 24
        %v1476 = vpop.permute.xlu0 %1475
        %1477 = vrot.lane.b32.xlu0 %v686, 24
        %v1478 = vpop.permute.xlu0 %1477
        %1479 = vrot.lane.b32.xlu0 %v687, 24
        %v1480 = vpop.permute.xlu0 %1479
        %1481 = vrot.lane.b32.xlu0 %v688, 24
        %v1482 = vpop.permute.xlu0 %1481
        %1483 = vrot.lane.b32.xlu0 %v689, 24
        %v1484 = vpop.permute.xlu0 %1483
        %1485 = vrot.lane.b32.xlu0 %v690, 24
        %v1486 = vpop.permute.xlu0 %1485
        %1487 = vrot.lane.b32.xlu0 %v691, 24
        %v1488 = vpop.permute.xlu0 %1487
        %1489 = vrot.lane.b32.xlu0 %v692, 24
        %v1490 = vpop.permute.xlu0 %1489
        %1491 = vrot.lane.b32.xlu0 %v693, 24
        %v1492 = vpop.permute.xlu0 %1491
        %1493 = vrot.lane.b32.xlu0 %v694, 24
        %v1494 = vpop.permute.xlu0 %1493
        %1559 = vrot.lane.b32.xlu0 %v695, 28
        %v1560 = vpop.permute.xlu0 %1559
        %1561 = vrot.lane.b32.xlu0 %v696, 28
        %v1562 = vpop.permute.xlu0 %1561
        %1563 = vrot.lane.b32.xlu0 %v697, 28
        %v1564 = vpop.permute.xlu0 %1563
        %1565 = vrot.lane.b32.xlu0 %v698, 28
        %v1566 = vpop.permute.xlu0 %1565
        %1567 = vrot.lane.b32.xlu0 %v699, 28
        %v1568 = vpop.permute.xlu0 %1567
        %1569 = vrot.lane.b32.xlu0 %v700, 28
        %v1570 = vpop.permute.xlu0 %1569
        %1571 = vrot.lane.b32.xlu0 %v701, 28
        %v1572 = vpop.permute.xlu0 %1571
        %1573 = vrot.lane.b32.xlu0 %v702, 28
        %v1574 = vpop.permute.xlu0 %1573
        %1575 = vrot.lane.b32.xlu0 %v703, 28
        %v1576 = vpop.permute.xlu0 %1575
        %1577 = vrot.lane.b32.xlu0 %v704, 28
        %v1578 = vpop.permute.xlu0 %1577
        %1579 = vrot.lane.b32.xlu0 %v705, 28
        %v1580 = vpop.permute.xlu0 %1579
        %1581 = vrot.lane.b32.xlu0 %v706, 28
        %v1582 = vpop.permute.xlu0 %1581
        %1583 = vrot.lane.b32.xlu0 %v707, 28
        %v1584 = vpop.permute.xlu0 %1583
        %1585 = vrot.lane.b32.xlu0 %v708, 28
        %v1586 = vpop.permute.xlu0 %1585
        %1587 = vrot.lane.b32.xlu0 %v709, 28
        %v1588 = vpop.permute.xlu0 %1587
        %1589 = vrot.lane.b32.xlu0 %v710, 28
        %v1590 = vpop.permute.xlu0 %1589
        %1591 = vrot.lane.b32.xlu0 %v711, 28
        %v1592 = vpop.permute.xlu0 %1591
        %1593 = vrot.lane.b32.xlu0 %v712, 28
        %v1594 = vpop.permute.xlu0 %1593
        %1595 = vrot.lane.b32.xlu0 %v713, 28
        %v1596 = vpop.permute.xlu0 %1595
        %1597 = vrot.lane.b32.xlu0 %v714, 28
        %v1598 = vpop.permute.xlu0 %1597
        %1599 = vrot.lane.b32.xlu0 %v715, 28
        %v1600 = vpop.permute.xlu0 %1599
        %1601 = vrot.lane.b32.xlu0 %v716, 28
        %v1602 = vpop.permute.xlu0 %1601
        %1603 = vrot.lane.b32.xlu0 %v717, 28
        %v1604 = vpop.permute.xlu0 %1603
        %1605 = vrot.lane.b32.xlu0 %v718, 28
        %v1606 = vpop.permute.xlu0 %1605
        %1607 = vrot.lane.b32.xlu0 %v719, 28
        %v1608 = vpop.permute.xlu0 %1607
        %1609 = vrot.lane.b32.xlu0 %v720, 28
        %v1610 = vpop.permute.xlu0 %1609
        %1611 = vrot.lane.b32.xlu0 %v721, 28
        %v1612 = vpop.permute.xlu0 %1611
        %1613 = vrot.lane.b32.xlu0 %v722, 28
        %v1614 = vpop.permute.xlu0 %1613
        %1615 = vrot.lane.b32.xlu0 %v723, 28
        %v1616 = vpop.permute.xlu0 %1615
        %1617 = vrot.lane.b32.xlu0 %v724, 28
        %v1618 = vpop.permute.xlu0 %1617
        %1619 = vrot.lane.b32.xlu0 %v725, 28
        %v1620 = vpop.permute.xlu0 %1619
        %1621 = vrot.lane.b32.xlu0 %v726, 28
        %v1622 = vpop.permute.xlu0 %1621
        %1687 = vrot.lane.b32.xlu0 %v727, 32
        %v1688 = vpop.permute.xlu0 %1687
        %1689 = vrot.lane.b32.xlu0 %v728, 32
        %v1690 = vpop.permute.xlu0 %1689
        %1691 = vrot.lane.b32.xlu0 %v729, 32
        %v1692 = vpop.permute.xlu0 %1691
        %1693 = vrot.lane.b32.xlu0 %v730, 32
        %v1694 = vpop.permute.xlu0 %1693
        %1695 = vrot.lane.b32.xlu0 %v731, 32
        %v1696 = vpop.permute.xlu0 %1695
        %1697 = vrot.lane.b32.xlu0 %v732, 32
        %v1698 = vpop.permute.xlu0 %1697
        %1699 = vrot.lane.b32.xlu0 %v733, 32
        %v1700 = vpop.permute.xlu0 %1699
        %1701 = vrot.lane.b32.xlu0 %v734, 32
        %v1702 = vpop.permute.xlu0 %1701
        %1703 = vrot.lane.b32.xlu0 %v735, 32
        %v1704 = vpop.permute.xlu0 %1703
        %1705 = vrot.lane.b32.xlu0 %v736, 32
        %v1706 = vpop.permute.xlu0 %1705
        %1707 = vrot.lane.b32.xlu0 %v737, 32
        %v1708 = vpop.permute.xlu0 %1707
        %1709 = vrot.lane.b32.xlu0 %v738, 32
        %v1710 = vpop.permute.xlu0 %1709
        %1711 = vrot.lane.b32.xlu0 %v739, 32
        %v1712 = vpop.permute.xlu0 %1711
        %1713 = vrot.lane.b32.xlu0 %v740, 32
        %v1714 = vpop.permute.xlu0 %1713
        %1715 = vrot.lane.b32.xlu0 %v741, 32
        %v1716 = vpop.permute.xlu0 %1715
        %1717 = vrot.lane.b32.xlu0 %v742, 32
        %v1718 = vpop.permute.xlu0 %1717
        %1719 = vrot.lane.b32.xlu0 %v743, 32
        %v1720 = vpop.permute.xlu0 %1719
        %1721 = vrot.lane.b32.xlu0 %v744, 32
        %v1722 = vpop.permute.xlu0 %1721
        %1723 = vrot.lane.b32.xlu0 %v745, 32
        %v1724 = vpop.permute.xlu0 %1723
        %1725 = vrot.lane.b32.xlu0 %v746, 32
        %v1726 = vpop.permute.xlu0 %1725
        %1727 = vrot.lane.b32.xlu0 %v747, 32
        %v1728 = vpop.permute.xlu0 %1727
        %1729 = vrot.lane.b32.xlu0 %v748, 32
        %v1730 = vpop.permute.xlu0 %1729
        %1731 = vrot.lane.b32.xlu0 %v749, 32
        %v1732 = vpop.permute.xlu0 %1731
        %1733 = vrot.lane.b32.xlu0 %v750, 32
        %v1734 = vpop.permute.xlu0 %1733
        %1735 = vrot.lane.b32.xlu0 %v751, 32
        %v1736 = vpop.permute.xlu0 %1735
        %1737 = vrot.lane.b32.xlu0 %v752, 32
        %v1738 = vpop.permute.xlu0 %1737
        %1739 = vrot.lane.b32.xlu0 %v753, 32
        %v1740 = vpop.permute.xlu0 %1739
        %1741 = vrot.lane.b32.xlu0 %v754, 32
        %v1742 = vpop.permute.xlu0 %1741
        %1743 = vrot.lane.b32.xlu0 %v755, 32
        %v1744 = vpop.permute.xlu0 %1743
        %1745 = vrot.lane.b32.xlu0 %v756, 32
        %v1746 = vpop.permute.xlu0 %1745
        %1747 = vrot.lane.b32.xlu0 %v757, 32
        %v1748 = vpop.permute.xlu0 %1747
        %1749 = vrot.lane.b32.xlu0 %v758, 32
        %v1750 = vpop.permute.xlu0 %1749
        %v1783 = vsel %vm349, %v470, %v792
        %v1784 = vsel %vm349, %v471, %v794
        %v1785 = vsel %vm349, %v472, %v796
        %v1786 = vsel %vm349, %v473, %v798
        %v1787 = vsel %vm349, %v474, %v800
        %v1788 = vsel %vm349, %v475, %v802
        %v1789 = vsel %vm349, %v476, %v804
        %v1790 = vsel %vm349, %v477, %v806
        %v1791 = vsel %vm349, %v478, %v808
        %v1792 = vsel %vm349, %v479, %v810
        %v1793 = vsel %vm349, %v480, %v812
        %v1794 = vsel %vm349, %v481, %v814
        %v1795 = vsel %vm349, %v482, %v816
        %v1796 = vsel %vm349, %v483, %v818
        %v1797 = vsel %vm349, %v484, %v820
        %v1798 = vsel %vm349, %v485, %v822
        %v1799 = vsel %vm349, %v486, %v824
        %v1800 = vsel %vm349, %v487, %v826
        %v1801 = vsel %vm349, %v488, %v828
        %v1802 = vsel %vm349, %v489, %v830
        %v1803 = vsel %vm349, %v490, %v832
        %v1804 = vsel %vm349, %v491, %v834
        %v1805 = vsel %vm349, %v492, %v836
        %v1806 = vsel %vm349, %v493, %v838
        %v1807 = vsel %vm349, %v494, %v840
        %v1808 = vsel %vm349, %v495, %v842
        %v1809 = vsel %vm349, %v496, %v844
        %v1810 = vsel %vm349, %v497, %v846
        %v1811 = vsel %vm349, %v498, %v848
        %v1812 = vsel %vm349, %v499, %v850
        %v1813 = vsel %vm349, %v500, %v852
        %v1814 = vsel %vm349, %v501, %v854
        %vm1815 = vcmask 64512
        %v1816 = vsel %vm1815, %v1783, %v920
        %v1817 = vsel %vm1815, %v1784, %v922
        %v1818 = vsel %vm1815, %v1785, %v924
        %v1819 = vsel %vm1815, %v1786, %v926
        %v1820 = vsel %vm1815, %v1787, %v928
        %v1821 = vsel %vm1815, %v1788, %v930
        %v1822 = vsel %vm1815, %v1789, %v932
        %v1823 = vsel %vm1815, %v1790, %v934
        %v1824 = vsel %vm1815, %v1791, %v936
        %v1825 = vsel %vm1815, %v1792, %v938
        %v1826 = vsel %vm1815, %v1793, %v940
        %v1827 = vsel %vm1815, %v1794, %v942
        %v1828 = vsel %vm1815, %v1795, %v944
        %v1829 = vsel %vm1815, %v1796, %v946
        %v1830 = vsel %vm1815, %v1797, %v948
        %v1831 = vsel %vm1815, %v1798, %v950
        %v1832 = vsel %vm1815, %v1799, %v952
        %v1833 = vsel %vm1815, %v1800, %v954
        %v1834 = vsel %vm1815, %v1801, %v956
        %v1835 = vsel %vm1815, %v1802, %v958
        %v1836 = vsel %vm1815, %v1803, %v960
        %v1837 = vsel %vm1815, %v1804, %v962
        %v1838 = vsel %vm1815, %v1805, %v964
        %v1839 = vsel %vm1815, %v1806, %v966
        %v1840 = vsel %vm1815, %v1807, %v968
        %v1841 = vsel %vm1815, %v1808, %v970
        %v1842 = vsel %vm1815, %v1809, %v972
        %v1843 = vsel %vm1815, %v1810, %v974
        %v1844 = vsel %vm1815, %v1811, %v976
        %v1845 = vsel %vm1815, %v1812, %v978
        %v1846 = vsel %vm1815, %v1813, %v980
        %v1847 = vsel %vm1815, %v1814, %v982
        %vm1848 = vcmask 97280
        %v1849 = vsel %vm1848, %v1816, %v1048
        %v1850 = vsel %vm1848, %v1817, %v1050
        %v1851 = vsel %vm1848, %v1818, %v1052
        %v1852 = vsel %vm1848, %v1819, %v1054
        %v1853 = vsel %vm1848, %v1820, %v1056
        %v1854 = vsel %vm1848, %v1821, %v1058
        %v1855 = vsel %vm1848, %v1822, %v1060
        %v1856 = vsel %vm1848, %v1823, %v1062
        %v1857 = vsel %vm1848, %v1824, %v1064
        %v1858 = vsel %vm1848, %v1825, %v1066
        %v1859 = vsel %vm1848, %v1826, %v1068
        %v1860 = vsel %vm1848, %v1827, %v1070
        %v1861 = vsel %vm1848, %v1828, %v1072
        %v1862 = vsel %vm1848, %v1829, %v1074
        %v1863 = vsel %vm1848, %v1830, %v1076
        %v1864 = vsel %vm1848, %v1831, %v1078
        %v1865 = vsel %vm1848, %v1832, %v1080
        %v1866 = vsel %vm1848, %v1833, %v1082
        %v1867 = vsel %vm1848, %v1834, %v1084
        %v1868 = vsel %vm1848, %v1835, %v1086
        %v1869 = vsel %vm1848, %v1836, %v1088
        %v1870 = vsel %vm1848, %v1837, %v1090
        %v1871 = vsel %vm1848, %v1838, %v1092
        %v1872 = vsel %vm1848, %v1839, %v1094
        %v1873 = vsel %vm1848, %v1840, %v1096
        %v1874 = vsel %vm1848, %v1841, %v1098
        %v1875 = vsel %vm1848, %v1842, %v1100
        %v1876 = vsel %vm1848, %v1843, %v1102
        %v1877 = vsel %vm1848, %v1844, %v1104
        %v1878 = vsel %vm1848, %v1845, %v1106
        %v1879 = vsel %vm1848, %v1846, %v1108
        %v1880 = vsel %vm1848, %v1847, %v1110
        %vm1881 = vcmask 130048
        %v1882 = vsel %vm1881, %v1849, %v1176
        %v1883 = vsel %vm1881, %v1850, %v1178
        %v1884 = vsel %vm1881, %v1851, %v1180
        %v1885 = vsel %vm1881, %v1852, %v1182
        %v1886 = vsel %vm1881, %v1853, %v1184
        %v1887 = vsel %vm1881, %v1854, %v1186
        %v1888 = vsel %vm1881, %v1855, %v1188
        %v1889 = vsel %vm1881, %v1856, %v1190
        %v1890 = vsel %vm1881, %v1857, %v1192
        %v1891 = vsel %vm1881, %v1858, %v1194
        %v1892 = vsel %vm1881, %v1859, %v1196
        %v1893 = vsel %vm1881, %v1860, %v1198
        %v1894 = vsel %vm1881, %v1861, %v1200
        %v1895 = vsel %vm1881, %v1862, %v1202
        %v1896 = vsel %vm1881, %v1863, %v1204
        %v1897 = vsel %vm1881, %v1864, %v1206
        %v1898 = vsel %vm1881, %v1865, %v1208
        %v1899 = vsel %vm1881, %v1866, %v1210
        %v1900 = vsel %vm1881, %v1867, %v1212
        %v1901 = vsel %vm1881, %v1868, %v1214
        %v1902 = vsel %vm1881, %v1869, %v1216
        %v1903 = vsel %vm1881, %v1870, %v1218
        %v1904 = vsel %vm1881, %v1871, %v1220
        %v1905 = vsel %vm1881, %v1872, %v1222
        %v1906 = vsel %vm1881, %v1873, %v1224
        %v1907 = vsel %vm1881, %v1874, %v1226
        %v1908 = vsel %vm1881, %v1875, %v1228
        %v1909 = vsel %vm1881, %v1876, %v1230
        %v1910 = vsel %vm1881, %v1877, %v1232
        %v1911 = vsel %vm1881, %v1878, %v1234
        %v1912 = vsel %vm1881, %v1879, %v1236
        %v1913 = vsel %vm1881, %v1880, %v1238
        %vm1914 = vcmask 162816
        %v1915 = vsel %vm1914, %v1882, %v1304
        %v1916 = vsel %vm1914, %v1883, %v1306
        %v1917 = vsel %vm1914, %v1884, %v1308
        %v1918 = vsel %vm1914, %v1885, %v1310
        %v1919 = vsel %vm1914, %v1886, %v1312
        %v1920 = vsel %vm1914, %v1887, %v1314
        %v1921 = vsel %vm1914, %v1888, %v1316
        %v1922 = vsel %vm1914, %v1889, %v1318
        %v1923 = vsel %vm1914, %v1890, %v1320
        %v1924 = vsel %vm1914, %v1891, %v1322
        %v1925 = vsel %vm1914, %v1892, %v1324
        %v1926 = vsel %vm1914, %v1893, %v1326
        %v1927 = vsel %vm1914, %v1894, %v1328
        %v1928 = vsel %vm1914, %v1895, %v1330
        %v1929 = vsel %vm1914, %v1896, %v1332
        %v1930 = vsel %vm1914, %v1897, %v1334
        %v1931 = vsel %vm1914, %v1898, %v1336
        %v1932 = vsel %vm1914, %v1899, %v1338
        %v1933 = vsel %vm1914, %v1900, %v1340
        %v1934 = vsel %vm1914, %v1901, %v1342
        %v1935 = vsel %vm1914, %v1902, %v1344
        %v1936 = vsel %vm1914, %v1903, %v1346
        %v1937 = vsel %vm1914, %v1904, %v1348
        %v1938 = vsel %vm1914, %v1905, %v1350
        %v1939 = vsel %vm1914, %v1906, %v1352
        %v1940 = vsel %vm1914, %v1907, %v1354
        %v1941 = vsel %vm1914, %v1908, %v1356
        %v1942 = vsel %vm1914, %v1909, %v1358
        %v1943 = vsel %vm1914, %v1910, %v1360
        %v1944 = vsel %vm1914, %v1911, %v1362
        %v1945 = vsel %vm1914, %v1912, %v1364
        %v1946 = vsel %vm1914, %v1913, %v1366
        %vm1947 = vcmask 195584
        %v1948 = vsel %vm1947, %v1915, %v1432
        %v1949 = vsel %vm1947, %v1916, %v1434
        %v1950 = vsel %vm1947, %v1917, %v1436
        %v1951 = vsel %vm1947, %v1918, %v1438
        %v1952 = vsel %vm1947, %v1919, %v1440
        %v1953 = vsel %vm1947, %v1920, %v1442
        %v1954 = vsel %vm1947, %v1921, %v1444
        %v1955 = vsel %vm1947, %v1922, %v1446
        %v1956 = vsel %vm1947, %v1923, %v1448
        %v1957 = vsel %vm1947, %v1924, %v1450
        %v1958 = vsel %vm1947, %v1925, %v1452
        %v1959 = vsel %vm1947, %v1926, %v1454
        %v1960 = vsel %vm1947, %v1927, %v1456
        %v1961 = vsel %vm1947, %v1928, %v1458
        %v1962 = vsel %vm1947, %v1929, %v1460
        %v1963 = vsel %vm1947, %v1930, %v1462
        %v1964 = vsel %vm1947, %v1931, %v1464
        %v1965 = vsel %vm1947, %v1932, %v1466
        %v1966 = vsel %vm1947, %v1933, %v1468
        %v1967 = vsel %vm1947, %v1934, %v1470
        %v1968 = vsel %vm1947, %v1935, %v1472
        %v1969 = vsel %vm1947, %v1936, %v1474
        %v1970 = vsel %vm1947, %v1937, %v1476
        %v1971 = vsel %vm1947, %v1938, %v1478
        %v1972 = vsel %vm1947, %v1939, %v1480
        %v1973 = vsel %vm1947, %v1940, %v1482
        %v1974 = vsel %vm1947, %v1941, %v1484
        %v1975 = vsel %vm1947, %v1942, %v1486
        %v1976 = vsel %vm1947, %v1943, %v1488
        %v1977 = vsel %vm1947, %v1944, %v1490
        %v1978 = vsel %vm1947, %v1945, %v1492
        %v1979 = vsel %vm1947, %v1946, %v1494
        %vm1980 = vcmask 228352
        %v1981 = vsel %vm1980, %v1948, %v1560
        %v1982 = vsel %vm1980, %v1949, %v1562
        %v1983 = vsel %vm1980, %v1950, %v1564
        %v1984 = vsel %vm1980, %v1951, %v1566
        %v1985 = vsel %vm1980, %v1952, %v1568
        %v1986 = vsel %vm1980, %v1953, %v1570
        %v1987 = vsel %vm1980, %v1954, %v1572
        %v1988 = vsel %vm1980, %v1955, %v1574
        %v1989 = vsel %vm1980, %v1956, %v1576
        %v1990 = vsel %vm1980, %v1957, %v1578
        %v1991 = vsel %vm1980, %v1958, %v1580
        %v1992 = vsel %vm1980, %v1959, %v1582
        %v1993 = vsel %vm1980, %v1960, %v1584
        %v1994 = vsel %vm1980, %v1961, %v1586
        %v1995 = vsel %vm1980, %v1962, %v1588
        %v1996 = vsel %vm1980, %v1963, %v1590
        %v1997 = vsel %vm1980, %v1964, %v1592
        %v1998 = vsel %vm1980, %v1965, %v1594
        %v1999 = vsel %vm1980, %v1966, %v1596
        %v2000 = vsel %vm1980, %v1967, %v1598
        %v2001 = vsel %vm1980, %v1968, %v1600
        %v2002 = vsel %vm1980, %v1969, %v1602
        %v2003 = vsel %vm1980, %v1970, %v1604
        %v2004 = vsel %vm1980, %v1971, %v1606
        %v2005 = vsel %vm1980, %v1972, %v1608
        %v2006 = vsel %vm1980, %v1973, %v1610
        %v2007 = vsel %vm1980, %v1974, %v1612
        %v2008 = vsel %vm1980, %v1975, %v1614
        %v2009 = vsel %vm1980, %v1976, %v1616
        %v2010 = vsel %vm1980, %v1977, %v1618
        %v2011 = vsel %vm1980, %v1978, %v1620
        %v2012 = vsel %vm1980, %v1979, %v1622
        %vm2013 = vcmask 261120
        %v2014 = vsel %vm2013, %v1981, %v1688
        %v2015 = vsel %vm2013, %v1982, %v1690
        %v2016 = vsel %vm2013, %v1983, %v1692
        %v2017 = vsel %vm2013, %v1984, %v1694
        %v2018 = vsel %vm2013, %v1985, %v1696
        %v2019 = vsel %vm2013, %v1986, %v1698
        %v2020 = vsel %vm2013, %v1987, %v1700
        %v2021 = vsel %vm2013, %v1988, %v1702
        %v2022 = vsel %vm2013, %v1989, %v1704
        %v2023 = vsel %vm2013, %v1990, %v1706
        %v2024 = vsel %vm2013, %v1991, %v1708
        %v2025 = vsel %vm2013, %v1992, %v1710
        %v2026 = vsel %vm2013, %v1993, %v1712
        %v2027 = vsel %vm2013, %v1994, %v1714
        %v2028 = vsel %vm2013, %v1995, %v1716
        %v2029 = vsel %vm2013, %v1996, %v1718
        %v2030 = vsel %vm2013, %v1997, %v1720
        %v2031 = vsel %vm2013, %v1998, %v1722
        %v2032 = vsel %vm2013, %v1999, %v1724
        %v2033 = vsel %vm2013, %v2000, %v1726
        %v2034 = vsel %vm2013, %v2001, %v1728
        %v2035 = vsel %vm2013, %v2002, %v1730
        %v2036 = vsel %vm2013, %v2003, %v1732
        %v2037 = vsel %vm2013, %v2004, %v1734
        %v2038 = vsel %vm2013, %v2005, %v1736
        %v2039 = vsel %vm2013, %v2006, %v1738
        %v2040 = vsel %vm2013, %v2007, %v1740
        %v2041 = vsel %vm2013, %v2008, %v1742
        %v2042 = vsel %vm2013, %v2009, %v1744
        %v2043 = vsel %vm2013, %v2010, %v1746
        %v2044 = vsel %vm2013, %v2011, %v1748
        %v2045 = vsel %vm2013, %v2012, %v1750
        %v2046 = vld [vmem:[%s1] sm:$0xff]
        %v2047 = vld [vmem:[%s1 + $0x8] sm:$0xff]
        %v2048 = vld [vmem:[%s1 + $0x10] sm:$0xff]
        %v2049 = vld [vmem:[%s1 + $0x18] sm:$0xff]
        %v2050 = vld [vmem:[%s1 + $0x20] sm:$0xf]
        %v2051 = vld [vmem:[%s2] sm:$0x1]
        %v2053 = vlaneseq
        %v2054 = vshrl.u32 %v2053, 7
        %v2055 = vsub.s32 0, %v2054
        %v2056 = vrot.slane %v2051, %v2055
        %vm2058 = vcmask 293888
        %v2060 = vsel %vm2058, %v2014, 0
        %v2063 = vsel %vm2058, %v2015, 0
        %v2066 = vsel %vm2058, %v2016, 0
        %v2069 = vsel %vm2058, %v2017, 0
        %v2072 = vsel %vm2058, %v2018, 0
        %v2075 = vsel %vm2058, %v2019, 0
        %v2078 = vsel %vm2058, %v2020, 0
        %v2081 = vsel %vm2058, %v2021, 0
        %v2084 = vsel %vm2058, %v2022, 0
        %v2087 = vsel %vm2058, %v2023, 0
        %v2090 = vsel %vm2058, %v2024, 0
        %v2093 = vsel %vm2058, %v2025, 0
        %v2096 = vsel %vm2058, %v2026, 0
        %v2099 = vsel %vm2058, %v2027, 0
        %v2102 = vsel %vm2058, %v2028, 0
        %v2105 = vsel %vm2058, %v2029, 0
        %v2108 = vsel %vm2058, %v2030, 0
        %v2111 = vsel %vm2058, %v2031, 0
        %v2114 = vsel %vm2058, %v2032, 0
        %v2117 = vsel %vm2058, %v2033, 0
        %v2120 = vsel %vm2058, %v2034, 0
        %v2123 = vsel %vm2058, %v2035, 0
        %v2126 = vsel %vm2058, %v2036, 0
        %v2129 = vsel %vm2058, %v2037, 0
        %v2132 = vsel %vm2058, %v2038, 0
        %v2135 = vsel %vm2058, %v2039, 0
        %v2138 = vsel %vm2058, %v2040, 0
        %v2141 = vsel %vm2058, %v2041, 0
        %v2144 = vsel %vm2058, %v2042, 0
        %v2147 = vsel %vm2058, %v2043, 0
        %v2150 = vsel %vm2058, %v2044, 0
        %v2153 = vsel %vm2058, %v2045, 0
        %vm2155 = vcmask 1043456
        %v2157 = vsel %vm2155, %v2050, 0
        %2159 = vmatprep.subr.mxu0 0.0
        %2160 = vmatpush1.msra.mxu0 %v2046
        %2161 = vmatprep.subr.mxu0 0.0
        %2162 = vmatpush1.msra.mxu0 %v2047
        %2163 = vmatprep.subr.mxu0 0.0
        %2164 = vmatpush1.msra.mxu0 %v2048
        %2165 = vmatprep.subr.mxu0 0.0
        %2166 = vmatpush1.msra.mxu0 %v2049
        %2167 = vmatprep.subr.mxu0 0.0
        %2168 = vmatpush1.msra.mxu0 %v2157
        %2169 = vmatprep.subr.mxu0 0.0
        %2170 = vmatpush1.msra.mxu0 0.0
        %2171 = vmatprep.subr.mxu0 0.0
        %2172 = vmatpush1.msra.mxu0 0.0
        %2173 = vmatprep.subr.mxu0 0.0
        %2174 = vmatpush1.msra.mxu0 0.0
        %2175 = vmatprep.subr.mxu0 0.0
        %2176 = vmatpush1.msra.mxu0 0.0
        %2177 = vmatprep.subr.mxu0 0.0
        %2178 = vmatpush1.msra.mxu0 0.0
        %2179 = vmatprep.subr.mxu0 0.0
        %2180 = vmatpush1.msra.mxu0 0.0
        %2181 = vmatprep.subr.mxu0 0.0
        %2182 = vmatpush1.msra.mxu0 0.0
        %2183 = vmatprep.subr.mxu0 0.0
        %2184 = vmatpush1.msra.mxu0 0.0
        %2185 = vmatprep.subr.mxu0 0.0
        %2186 = vmatpush1.msra.mxu0 0.0
        %2187 = vmatprep.subr.mxu0 0.0
        %2188 = vmatpush1.msra.mxu0 0.0
        %2189 = vmatprep.subr.mxu0 0.0
        %2190 = vmatpush1.msra.mxu0 0.0
        %2191 = vmatprep.subr.mxu0 0.0
        %2192 = vmatpush1.msra.mxu0 0.0
        %2193 = vmatprep.subr.mxu0 0.0
        %2194 = vmatpush1.msra.mxu0 0.0
        %2195 = vmatprep.subr.mxu0 0.0
        %2196 = vmatpush1.msra.mxu0 0.0
        %2197 = vmatprep.subr.mxu0 0.0
        %2198 = vmatpush1.msra.mxu0 0.0
        %2199 = vmatprep.subr.mxu0 0.0
        %2200 = vmatpush1.msra.mxu0 0.0
        %2201 = vmatprep.subr.mxu0 0.0
        %2202 = vmatpush1.msra.mxu0 0.0
        %2203 = vmatprep.subr.mxu0 0.0
        %2204 = vmatpush1.msra.mxu0 0.0
        %2205 = vmatprep.subr.mxu0 0.0
        %2206 = vmatpush1.msra.mxu0 0.0
        %2207 = vmatprep.subr.mxu0 0.0
        %2208 = vmatpush1.msra.mxu0 0.0
        %2209 = vmatprep.subr.mxu0 0.0
        %2210 = vmatpush1.msra.mxu0 0.0
        %2211 = vmatprep.subr.mxu0 0.0
        %2212 = vmatpush1.msra.mxu0 0.0
        %2213 = vmatprep.subr.mxu0 0.0
        %2214 = vmatpush1.msra.mxu0 0.0
        %2215 = vmatprep.subr.mxu0 0.0
        %2216 = vmatpush1.msra.mxu0 0.0
        %2217 = vmatprep.subr.mxu0 0.0
        %2218 = vmatpush1.msra.mxu0 0.0
        %2219 = vmatprep.subr.mxu0 0.0
        %2220 = vmatpush1.msra.mxu0 0.0
        %2221 = vmatprep.subr.mxu0 0.0
        %2222 = vmatpush1.msra.mxu0 0.0
        %2223 = vmatprep.mubr.f32.mxu0 0.0
        %2224 = vmatmul.mubr.f32.gmra.mrb[0].mxu0 %v2060
        %v2225 = vpop.f32.mrb[0].mxu0
        %v2226 = vadd.f32 %v2056, %v2225
        %v2227 = vpop.f32.mrb[0].mxu0
        %2228 = vmatprep.mubr.f32.mxu0 0.0
        %2229 = vmatmul.mubr.f32.gmra.mrb[0].mxu0 %v2063
        %v2230 = vpop.f32.mrb[0].mxu0
        %v2231 = vadd.f32 %v2056, %v2230
        %v2232 = vpop.f32.mrb[0].mxu0
        %2233 = vmatprep.mubr.f32.mxu0 0.0
        %2234 = vmatmul.mubr.f32.gmra.mrb[0].mxu0 %v2066
        %v2235 = vpop.f32.mrb[0].mxu0
        %v2236 = vadd.f32 %v2056, %v2235
        %v2237 = vpop.f32.mrb[0].mxu0
        %2238 = vmatprep.mubr.f32.mxu0 0.0
        %2239 = vmatmul.mubr.f32.gmra.mrb[0].mxu0 %v2069
        %v2240 = vpop.f32.mrb[0].mxu0
        %v2241 = vadd.f32 %v2056, %v2240
        %v2242 = vpop.f32.mrb[0].mxu0
        %2243 = vmatprep.mubr.f32.mxu0 0.0
        %2244 = vmatmul.mubr.f32.gmra.mrb[0].mxu0 %v2072
        %v2245 = vpop.f32.mrb[0].mxu0
        %v2246 = vadd.f32 %v2056, %v2245
        %v2247 = vpop.f32.mrb[0].mxu0
        %2248 = vmatprep.mubr.f32.mxu0 0.0
        %2249 = vmatmul.mubr.f32.gmra.mrb[0].mxu0 %v2075
        %v2250 = vpop.f32.mrb[0].mxu0
        %v2251 = vadd.f32 %v2056, %v2250
        %v2252 = vpop.f32.mrb[0].mxu0
        %2253 = vmatprep.mubr.f32.mxu0 0.0
        %2254 = vmatmul.mubr.f32.gmra.mrb[0].mxu0 %v2078
        %v2255 = vpop.f32.mrb[0].mxu0
        %v2256 = vadd.f32 %v2056, %v2255
        %v2257 = vpop.f32.mrb[0].mxu0
        %2258 = vmatprep.mubr.f32.mxu0 0.0
        %2259 = vmatmul.mubr.f32.gmra.mrb[0].mxu0 %v2081
        %v2260 = vpop.f32.mrb[0].mxu0
        %v2261 = vadd.f32 %v2056, %v2260
        %v2262 = vpop.f32.mrb[0].mxu0
        %2263 = vmatprep.mubr.f32.mxu0 0.0
        %2264 = vmatmul.mubr.f32.gmra.mrb[0].mxu0 %v2084
        %v2265 = vpop.f32.mrb[0].mxu0
        %v2266 = vadd.f32 %v2056, %v2265
        %v2267 = vpop.f32.mrb[0].mxu0
        %2268 = vmatprep.mubr.f32.mxu0 0.0
        %2269 = vmatmul.mubr.f32.gmra.mrb[0].mxu0 %v2087
        %v2270 = vpop.f32.mrb[0].mxu0
        %v2271 = vadd.f32 %v2056, %v2270
        %v2272 = vpop.f32.mrb[0].mxu0
        %2273 = vmatprep.mubr.f32.mxu0 0.0
        %2274 = vmatmul.mubr.f32.gmra.mrb[0].mxu0 %v2090
        %v2275 = vpop.f32.mrb[0].mxu0
        %v2276 = vadd.f32 %v2056, %v2275
        %v2277 = vpop.f32.mrb[0].mxu0
        %2278 = vmatprep.mubr.f32.mxu0 0.0
        %2279 = vmatmul.mubr.f32.gmra.mrb[0].mxu0 %v2093
        %v2280 = vpop.f32.mrb[0].mxu0
        %v2281 = vadd.f32 %v2056, %v2280
        %v2282 = vpop.f32.mrb[0].mxu0
        %2283 = vmatprep.mubr.f32.mxu0 0.0
        %2284 = vmatmul.mubr.f32.gmra.mrb[0].mxu0 %v2096
        %v2285 = vpop.f32.mrb[0].mxu0
        %v2286 = vadd.f32 %v2056, %v2285
        %v2287 = vpop.f32.mrb[0].mxu0
        %2288 = vmatprep.mubr.f32.mxu0 0.0
        %2289 = vmatmul.mubr.f32.gmra.mrb[0].mxu0 %v2099
        %v2290 = vpop.f32.mrb[0].mxu0
        %v2291 = vadd.f32 %v2056, %v2290
        %v2292 = vpop.f32.mrb[0].mxu0
        %2293 = vmatprep.mubr.f32.mxu0 0.0
        %2294 = vmatmul.mubr.f32.gmra.mrb[0].mxu0 %v2102
        %v2295 = vpop.f32.mrb[0].mxu0
        %v2296 = vadd.f32 %v2056, %v2295
        %v2297 = vpop.f32.mrb[0].mxu0
        %2298 = vmatprep.mubr.f32.mxu0 0.0
        %2299 = vmatmul.mubr.f32.gmra.mrb[0].mxu0 %v2105
        %v2300 = vpop.f32.mrb[0].mxu0
        %v2301 = vadd.f32 %v2056, %v2300
        %v2302 = vpop.f32.mrb[0].mxu0
        %2303 = vmatprep.mubr.f32.mxu0 0.0
        %2304 = vmatmul.mubr.f32.gmra.mrb[0].mxu0 %v2108
        %v2305 = vpop.f32.mrb[0].mxu0
        %v2306 = vadd.f32 %v2056, %v2305
        %v2307 = vpop.f32.mrb[0].mxu0
        %2308 = vmatprep.mubr.f32.mxu0 0.0
        %2309 = vmatmul.mubr.f32.gmra.mrb[0].mxu0 %v2111
        %v2310 = vpop.f32.mrb[0].mxu0
        %v2311 = vadd.f32 %v2056, %v2310
        %v2312 = vpop.f32.mrb[0].mxu0
        %2313 = vmatprep.mubr.f32.mxu0 0.0
        %2314 = vmatmul.mubr.f32.gmra.mrb[0].mxu0 %v2114
        %v2315 = vpop.f32.mrb[0].mxu0
        %v2316 = vadd.f32 %v2056, %v2315
        %v2317 = vpop.f32.mrb[0].mxu0
        %2318 = vmatprep.mubr.f32.mxu0 0.0
        %2319 = vmatmul.mubr.f32.gmra.mrb[0].mxu0 %v2117
        %v2320 = vpop.f32.mrb[0].mxu0
        %v2321 = vadd.f32 %v2056, %v2320
        %v2322 = vpop.f32.mrb[0].mxu0
        %2323 = vmatprep.mubr.f32.mxu0 0.0
        %2324 = vmatmul.mubr.f32.gmra.mrb[0].mxu0 %v2120
        %v2325 = vpop.f32.mrb[0].mxu0
        %v2326 = vadd.f32 %v2056, %v2325
        %v2327 = vpop.f32.mrb[0].mxu0
        %2328 = vmatprep.mubr.f32.mxu0 0.0
        %2329 = vmatmul.mubr.f32.gmra.mrb[0].mxu0 %v2123
        %v2330 = vpop.f32.mrb[0].mxu0
        %v2331 = vadd.f32 %v2056, %v2330
        %v2332 = vpop.f32.mrb[0].mxu0
        %2333 = vmatprep.mubr.f32.mxu0 0.0
        %2334 = vmatmul.mubr.f32.gmra.mrb[0].mxu0 %v2126
        %v2335 = vpop.f32.mrb[0].mxu0
        %v2336 = vadd.f32 %v2056, %v2335
        %v2337 = vpop.f32.mrb[0].mxu0
        %2338 = vmatprep.mubr.f32.mxu0 0.0
        %2339 = vmatmul.mubr.f32.gmra.mrb[0].mxu0 %v2129
        %v2340 = vpop.f32.mrb[0].mxu0
        %v2341 = vadd.f32 %v2056, %v2340
        %v2342 = vpop.f32.mrb[0].mxu0
        %2343 = vmatprep.mubr.f32.mxu0 0.0
        %2344 = vmatmul.mubr.f32.gmra.mrb[0].mxu0 %v2132
        %v2345 = vpop.f32.mrb[0].mxu0
        %v2346 = vadd.f32 %v2056, %v2345
        %v2347 = vpop.f32.mrb[0].mxu0
        %2348 = vmatprep.mubr.f32.mxu0 0.0
        %2349 = vmatmul.mubr.f32.gmra.mrb[0].mxu0 %v2135
        %v2350 = vpop.f32.mrb[0].mxu0
        %v2351 = vadd.f32 %v2056, %v2350
        %v2352 = vpop.f32.mrb[0].mxu0
        %2353 = vmatprep.mubr.f32.mxu0 0.0
        %2354 = vmatmul.mubr.f32.gmra.mrb[0].mxu0 %v2138
        %v2355 = vpop.f32.mrb[0].mxu0
        %v2356 = vadd.f32 %v2056, %v2355
        %v2357 = vpop.f32.mrb[0].mxu0
        %2358 = vmatprep.mubr.f32.mxu0 0.0
        %2359 = vmatmul.mubr.f32.gmra.mrb[0].mxu0 %v2141
        %v2360 = vpop.f32.mrb[0].mxu0
        %v2361 = vadd.f32 %v2056, %v2360
        %v2362 = vpop.f32.mrb[0].mxu0
        %2363 = vmatprep.mubr.f32.mxu0 0.0
        %2364 = vmatmul.mubr.f32.gmra.mrb[0].mxu0 %v2144
        %v2365 = vpop.f32.mrb[0].mxu0
        %v2366 = vadd.f32 %v2056, %v2365
        %v2367 = vpop.f32.mrb[0].mxu0
        %2368 = vmatprep.mubr.f32.mxu0 0.0
        %2369 = vmatmul.mubr.f32.gmra.mrb[0].mxu0 %v2147
        %v2370 = vpop.f32.mrb[0].mxu0
        %v2371 = vadd.f32 %v2056, %v2370
        %v2372 = vpop.f32.mrb[0].mxu0
        %2373 = vmatprep.mubr.f32.mxu0 0.0
        %2374 = vmatmul.mubr.f32.gmra.mrb[0].mxu0 %v2150
        %v2375 = vpop.f32.mrb[0].mxu0
        %v2376 = vadd.f32 %v2056, %v2375
        %v2377 = vpop.f32.mrb[0].mxu0
        %2378 = vmatprep.mubr.f32.mxu0 0.0
        %2379 = vmatmul.mubr.f32.gmra.mrb[0].mxu0 %v2153
        %v2380 = vpop.f32.mrb[0].mxu0
        %v2381 = vadd.f32 %v2056, %v2380
        %v2382 = vpop.f32.mrb[0].mxu0
        %2383 = vdwg.mxu0
        %vm2384 = vcmp.ge.f32.partialorder %v2226, 0.0
        %vm2385 = vcmp.ge.f32.partialorder %v2231, 0.0
        %vm2386 = vcmp.ge.f32.partialorder %v2236, 0.0
        %vm2387 = vcmp.ge.f32.partialorder %v2241, 0.0
        %vm2388 = vcmp.ge.f32.partialorder %v2246, 0.0
        %vm2389 = vcmp.ge.f32.partialorder %v2251, 0.0
        %vm2390 = vcmp.ge.f32.partialorder %v2256, 0.0
        %vm2391 = vcmp.ge.f32.partialorder %v2261, 0.0
        %vm2392 = vcmp.ge.f32.partialorder %v2266, 0.0
        %vm2393 = vcmp.ge.f32.partialorder %v2271, 0.0
        %vm2394 = vcmp.ge.f32.partialorder %v2276, 0.0
        %vm2395 = vcmp.ge.f32.partialorder %v2281, 0.0
        %vm2396 = vcmp.ge.f32.partialorder %v2286, 0.0
        %vm2397 = vcmp.ge.f32.partialorder %v2291, 0.0
        %vm2398 = vcmp.ge.f32.partialorder %v2296, 0.0
        %vm2399 = vcmp.ge.f32.partialorder %v2301, 0.0
        %vm2400 = vcmp.ge.f32.partialorder %v2306, 0.0
        %vm2401 = vcmp.ge.f32.partialorder %v2311, 0.0
        %vm2402 = vcmp.ge.f32.partialorder %v2316, 0.0
        %vm2403 = vcmp.ge.f32.partialorder %v2321, 0.0
        %vm2404 = vcmp.ge.f32.partialorder %v2326, 0.0
        %vm2405 = vcmp.ge.f32.partialorder %v2331, 0.0
        %vm2406 = vcmp.ge.f32.partialorder %v2336, 0.0
        %vm2407 = vcmp.ge.f32.partialorder %v2341, 0.0
        %vm2408 = vcmp.ge.f32.partialorder %v2346, 0.0
        %vm2409 = vcmp.ge.f32.partialorder %v2351, 0.0
        %vm2410 = vcmp.ge.f32.partialorder %v2356, 0.0
        %vm2411 = vcmp.ge.f32.partialorder %v2361, 0.0
        %vm2412 = vcmp.ge.f32.partialorder %v2366, 0.0
        %vm2413 = vcmp.ge.f32.partialorder %v2371, 0.0
        %vm2414 = vcmp.ge.f32.partialorder %v2376, 0.0
        %vm2415 = vcmp.ge.f32.partialorder %v2381, 0.0
        %v2416 = vmul.f32 %v2226, 0.01
        %v2417 = vmul.f32 %v2231, 0.01
        %v2418 = vmul.f32 %v2236, 0.01
        %v2419 = vmul.f32 %v2241, 0.01
        %v2420 = vmul.f32 %v2246, 0.01
        %v2421 = vmul.f32 %v2251, 0.01
        %v2422 = vmul.f32 %v2256, 0.01
        %v2423 = vmul.f32 %v2261, 0.01
        %v2424 = vmul.f32 %v2266, 0.01
        %v2425 = vmul.f32 %v2271, 0.01
        %v2426 = vmul.f32 %v2276, 0.01
        %v2427 = vmul.f32 %v2281, 0.01
        %v2428 = vmul.f32 %v2286, 0.01
        %v2429 = vmul.f32 %v2291, 0.01
        %v2430 = vmul.f32 %v2296, 0.01
        %v2431 = vmul.f32 %v2301, 0.01
        %v2432 = vmul.f32 %v2306, 0.01
        %v2433 = vmul.f32 %v2311, 0.01
        %v2434 = vmul.f32 %v2316, 0.01
        %v2435 = vmul.f32 %v2321, 0.01
        %v2436 = vmul.f32 %v2326, 0.01
        %v2437 = vmul.f32 %v2331, 0.01
        %v2438 = vmul.f32 %v2336, 0.01
        %v2439 = vmul.f32 %v2341, 0.01
        %v2440 = vmul.f32 %v2346, 0.01
        %v2441 = vmul.f32 %v2351, 0.01
        %v2442 = vmul.f32 %v2356, 0.01
        %v2443 = vmul.f32 %v2361, 0.01
        %v2444 = vmul.f32 %v2366, 0.01
        %v2445 = vmul.f32 %v2371, 0.01
        %v2446 = vmul.f32 %v2376, 0.01
        %v2447 = vmul.f32 %v2381, 0.01
        %v2448 = vsel %vm2384, %v2226, %v2416
        %v2449 = vsel %vm2385, %v2231, %v2417
        %v2450 = vsel %vm2386, %v2236, %v2418
        %v2451 = vsel %vm2387, %v2241, %v2419
        %v2452 = vsel %vm2388, %v2246, %v2420
        %v2453 = vsel %vm2389, %v2251, %v2421
        %v2454 = vsel %vm2390, %v2256, %v2422
        %v2455 = vsel %vm2391, %v2261, %v2423
        %v2456 = vsel %vm2392, %v2266, %v2424
        %v2457 = vsel %vm2393, %v2271, %v2425
        %v2458 = vsel %vm2394, %v2276, %v2426
        %v2459 = vsel %vm2395, %v2281, %v2427
        %v2460 = vsel %vm2396, %v2286, %v2428
        %v2461 = vsel %vm2397, %v2291, %v2429
        %v2462 = vsel %vm2398, %v2296, %v2430
        %v2463 = vsel %vm2399, %v2301, %v2431
        %v2464 = vsel %vm2400, %v2306, %v2432
        %v2465 = vsel %vm2401, %v2311, %v2433
        %v2466 = vsel %vm2402, %v2316, %v2434
        %v2467 = vsel %vm2403, %v2321, %v2435
        %v2468 = vsel %vm2404, %v2326, %v2436
        %v2469 = vsel %vm2405, %v2331, %v2437
        %v2470 = vsel %vm2406, %v2336, %v2438
        %v2471 = vsel %vm2407, %v2341, %v2439
        %v2472 = vsel %vm2408, %v2346, %v2440
        %v2473 = vsel %vm2409, %v2351, %v2441
        %v2474 = vsel %vm2410, %v2356, %v2442
        %v2475 = vsel %vm2411, %v2361, %v2443
        %v2476 = vsel %vm2412, %v2366, %v2444
        %v2477 = vsel %vm2413, %v2371, %v2445
        %v2478 = vsel %vm2414, %v2376, %v2446
        %v2479 = vsel %vm2415, %v2381, %v2447
        %2480 = vst.msk [vmem:[#allocation3] sm:$0xff] %vm1815, 0.0
        %2481 = vst.msk [vmem:[#allocation3 + $0x8] sm:$0xff] %vm1815, 0.0
        %vm2482 = vcmask 60416
        %2483 = vst.msk [vmem:[#allocation3 + $0x10] sm:$0xf] %vm2482, 0.0
        %2484 = vst.msk [vmem:[#allocation3 + $0x18] sm:$0xff] %vm1815, 0.0
        %2485 = vst.msk [vmem:[#allocation3 + $0x20] sm:$0xff] %vm1815, 0.0
        %2486 = vst.msk [vmem:[#allocation3 + $0x28] sm:$0xf] %vm2482, 0.0
        %2487 = vst.msk [vmem:[#allocation3 + $0x30] sm:$0xff] %vm1815, 0.0
        %2488 = vst.msk [vmem:[#allocation3 + $0x38] sm:$0xff] %vm1815, 0.0
        %2489 = vst.msk [vmem:[#allocation3 + $0x40] sm:$0xf] %vm2482, 0.0
        %2490 = vst.msk [vmem:[#allocation3 + $0x48] sm:$0xff] %vm1815, 0.0
        %2491 = vst.msk [vmem:[#allocation3 + $0x50] sm:$0xff] %vm1815, 0.0
        %2492 = vst.msk [vmem:[#allocation3 + $0x58] sm:$0xf] %vm2482, 0.0
        %2493 = vst.msk [vmem:[#allocation3 + $0x60] sm:$0xff] %vm1815, 0.0
        %2494 = vst.msk [vmem:[#allocation3 + $0x68] sm:$0xff] %vm1815, 0.0
        %2495 = vst.msk [vmem:[#allocation3 + $0x70] sm:$0xf] %vm2482, 0.0
        %2496 = vst.msk [vmem:[#allocation3 + $0x78] sm:$0xff] %vm1815, 0.0
        %2497 = vst.msk [vmem:[#allocation3 + $0x80] sm:$0xff] %vm1815, 0.0
        %2498 = vst.msk [vmem:[#allocation3 + $0x88] sm:$0xf] %vm2482, 0.0
        %2499 = vst.msk [vmem:[#allocation3 + $0x90] sm:$0xff] %vm1815, 0.0
        %2500 = vst.msk [vmem:[#allocation3 + $0x98] sm:$0xff] %vm1815, 0.0
        %2501 = vst.msk [vmem:[#allocation3 + $0xa0] sm:$0xf] %vm2482, 0.0
        %2502 = vst.msk [vmem:[#allocation3 + $0xa8] sm:$0xff] %vm1815, 0.0
        %2503 = vst.msk [vmem:[#allocation3 + $0xb0] sm:$0xff] %vm1815, 0.0
        %2504 = vst.msk [vmem:[#allocation3 + $0xb8] sm:$0xf] %vm2482, 0.0
        %2505 = vst.msk [vmem:[#allocation3 + $0xc0] sm:$0xff] %vm1815, 0.0
        %2506 = vst.msk [vmem:[#allocation3 + $0xc8] sm:$0xff] %vm1815, 0.0
        %2507 = vst.msk [vmem:[#allocation3 + $0xd0] sm:$0xf] %vm2482, 0.0
        %2508 = vst.msk [vmem:[#allocation3 + $0xd8] sm:$0xff] %vm1815, 0.0
        %2509 = vst.msk [vmem:[#allocation3 + $0xe0] sm:$0xff] %vm1815, 0.0
        %2510 = vst.msk [vmem:[#allocation3 + $0xe8] sm:$0xf] %vm2482, 0.0
        %2511 = vst.msk [vmem:[#allocation3 + $0xf0] sm:$0xff] %vm1815, 0.0
        %2512 = vst.msk [vmem:[#allocation3 + $0xf8] sm:$0xff] %vm1815, 0.0
        %2513 = vst.msk [vmem:[#allocation3 + $0x100] sm:$0xf] %vm2482, 0.0
        %2514 = vst.msk [vmem:[#allocation3 + $0x108] sm:$0xff] %vm1815, 0.0
        %2515 = vst.msk [vmem:[#allocation3 + $0x110] sm:$0xff] %vm1815, 0.0
        %2516 = vst.msk [vmem:[#allocation3 + $0x118] sm:$0xf] %vm2482, 0.0
        %2517 = vst.msk [vmem:[#allocation3 + $0x120] sm:$0xff] %vm1815, 0.0
        %2518 = vst.msk [vmem:[#allocation3 + $0x128] sm:$0xff] %vm1815, 0.0
        %2519 = vst.msk [vmem:[#allocation3 + $0x130] sm:$0xf] %vm2482, 0.0
        %2520 = vst.msk [vmem:[#allocation3 + $0x138] sm:$0xff] %vm1815, 0.0
        %2521 = vst.msk [vmem:[#allocation3 + $0x140] sm:$0xff] %vm1815, 0.0
        %2522 = vst.msk [vmem:[#allocation3 + $0x148] sm:$0xf] %vm2482, 0.0
        %2523 = vst.msk [vmem:[#allocation3 + $0x150] sm:$0xff] %vm1815, 0.0
        %2524 = vst.msk [vmem:[#allocation3 + $0x158] sm:$0xff] %vm1815, 0.0
        %2525 = vst.msk [vmem:[#allocation3 + $0x160] sm:$0xf] %vm2482, 0.0
        %2526 = vst.msk [vmem:[#allocation3 + $0x168] sm:$0xff] %vm1815, 0.0
        %2527 = vst.msk [vmem:[#allocation3 + $0x170] sm:$0xff] %vm1815, 0.0
        %2528 = vst.msk [vmem:[#allocation3 + $0x178] sm:$0xf] %vm2482, 0.0
        %2529 = vst.msk [vmem:[#allocation3 + $0x180] sm:$0xff] %vm1815, 0.0
        %2530 = vst.msk [vmem:[#allocation3 + $0x188] sm:$0xff] %vm1815, 0.0
        %2531 = vst.msk [vmem:[#allocation3 + $0x190] sm:$0xf] %vm2482, 0.0
        %2532 = vst.msk [vmem:[#allocation3 + $0x198] sm:$0xff] %vm1815, 0.0
        %2533 = vst.msk [vmem:[#allocation3 + $0x1a0] sm:$0xff] %vm1815, 0.0
        %2534 = vst.msk [vmem:[#allocation3 + $0x1a8] sm:$0xf] %vm2482, 0.0
        %2535 = vst.msk [vmem:[#allocation3 + $0x1b0] sm:$0xff] %vm1815, 0.0
        %2536 = vst.msk [vmem:[#allocation3 + $0x1b8] sm:$0xff] %vm1815, 0.0
        %2537 = vst.msk [vmem:[#allocation3 + $0x1c0] sm:$0xf] %vm2482, 0.0
        %2538 = vst.msk [vmem:[#allocation3 + $0x1c8] sm:$0xff] %vm1815, 0.0
        %2539 = vst.msk [vmem:[#allocation3 + $0x1d0] sm:$0xff] %vm1815, 0.0
        %2540 = vst.msk [vmem:[#allocation3 + $0x1d8] sm:$0xf] %vm2482, 0.0
        %s2541 = scalar_lea.vmem [#allocation3], 48
        %2542 = vst.msk [vmem:[%s2541 + $0x2] sm:$0xff] %vm1815, %v2448
        %2543 = vst.msk [vmem:[%s2541 + $0xa] sm:$0xff] %vm1815, %v2449
        %2544 = vst.msk [vmem:[%s2541 + $0x1a] sm:$0xff] %vm1815, %v2450
        %2545 = vst.msk [vmem:[%s2541 + $0x22] sm:$0xff] %vm1815, %v2451
        %2546 = vst.msk [vmem:[%s2541 + $0x32] sm:$0xff] %vm1815, %v2452
        %2547 = vst.msk [vmem:[%s2541 + $0x3a] sm:$0xff] %vm1815, %v2453
        %2548 = vst.msk [vmem:[%s2541 + $0x4a] sm:$0xff] %vm1815, %v2454
        %2549 = vst.msk [vmem:[%s2541 + $0x52] sm:$0xff] %vm1815, %v2455
        %2550 = vst.msk [vmem:[%s2541 + $0x62] sm:$0xff] %vm1815, %v2456
        %2551 = vst.msk [vmem:[%s2541 + $0x6a] sm:$0xff] %vm1815, %v2457
        %2552 = vst.msk [vmem:[%s2541 + $0x7a] sm:$0xff] %vm1815, %v2458
        %2553 = vst.msk [vmem:[%s2541 + $0x82] sm:$0xff] %vm1815, %v2459
        %2554 = vst.msk [vmem:[%s2541 + $0x92] sm:$0xff] %vm1815, %v2460
        %2555 = vst.msk [vmem:[%s2541 + $0x9a] sm:$0xff] %vm1815, %v2461
        %2556 = vst.msk [vmem:[%s2541 + $0xaa] sm:$0xff] %vm1815, %v2462
        %2557 = vst.msk [vmem:[%s2541 + $0xb2] sm:$0xff] %vm1815, %v2463
        %2558 = vst.msk [vmem:[%s2541 + $0xc2] sm:$0xff] %vm1815, %v2464
        %2559 = vst.msk [vmem:[%s2541 + $0xca] sm:$0xff] %vm1815, %v2465
        %2560 = vst.msk [vmem:[%s2541 + $0xda] sm:$0xff] %vm1815, %v2466
        %2561 = vst.msk [vmem:[%s2541 + $0xe2] sm:$0xff] %vm1815, %v2467
        %2562 = vst.msk [vmem:[%s2541 + $0xf2] sm:$0xff] %vm1815, %v2468
        %2563 = vst.msk [vmem:[%s2541 + $0xfa] sm:$0xff] %vm1815, %v2469
        %2564 = vst.msk [vmem:[%s2541 + $0x10a] sm:$0xff] %vm1815, %v2470
        %2565 = vst.msk [vmem:[%s2541 + $0x112] sm:$0xff] %vm1815, %v2471
        %2566 = vst.msk [vmem:[%s2541 + $0x122] sm:$0xff] %vm1815, %v2472
        %2567 = vst.msk [vmem:[%s2541 + $0x12a] sm:$0xff] %vm1815, %v2473
        %2568 = vst.msk [vmem:[%s2541 + $0x13a] sm:$0xff] %vm1815, %v2474
        %2569 = vst.msk [vmem:[%s2541 + $0x142] sm:$0xff] %vm1815, %v2475
        %2570 = vst.msk [vmem:[%s2541 + $0x152] sm:$0xff] %vm1815, %v2476
        %2571 = vst.msk [vmem:[%s2541 + $0x15a] sm:$0xff] %vm1815, %v2477
        %2572 = vst.msk [vmem:[%s2541 + $0x16a] sm:$0xff] %vm1815, %v2478
        %2573 = vst.msk [vmem:[%s2541 + $0x172] sm:$0xff] %vm1815, %v2479
        %v2574 = vld [vmem:[#allocation3] ss:$2 sm:$0xff]
        %s2575 = scalar_lea.vmem [#allocation3], 48
        %v2576 = vld [vmem:[%s2575] ss:$2 sm:$0xff]
        %s2577 = scalar_lea.vmem [#allocation3], 96
        %v2578 = vld [vmem:[%s2577] ss:$2 sm:$0xff]
        %s2579 = scalar_lea.vmem [#allocation3], 144
        %v2580 = vld [vmem:[%s2579] ss:$2 sm:$0xff]
        %s2581 = scalar_lea.vmem [#allocation3], 192
        %v2582 = vld [vmem:[%s2581] ss:$2 sm:$0xff]
        %s2583 = scalar_lea.vmem [#allocation3], 240
        %v2584 = vld [vmem:[%s2583] ss:$2 sm:$0xff]
        %s2585 = scalar_lea.vmem [#allocation3], 288
        %v2586 = vld [vmem:[%s2585] ss:$2 sm:$0xff]
        %s2587 = scalar_lea.vmem [#allocation3], 336
        %v2588 = vld [vmem:[%s2587] ss:$2 sm:$0xff]
        %s2589 = scalar_lea.vmem [#allocation3], 1
        %v2590 = vld [vmem:[%s2589] ss:$2 sm:$0xff]
        %s2591 = scalar_lea.vmem [#allocation3], 49
        %v2592 = vld [vmem:[%s2591] ss:$2 sm:$0xff]
        %s2593 = scalar_lea.vmem [#allocation3], 97
        %v2594 = vld [vmem:[%s2593] ss:$2 sm:$0xff]
        %s2595 = scalar_lea.vmem [#allocation3], 145
        %v2596 = vld [vmem:[%s2595] ss:$2 sm:$0xff]
        %s2597 = scalar_lea.vmem [#allocation3], 193
        %v2598 = vld [vmem:[%s2597] ss:$2 sm:$0xff]
        %s2599 = scalar_lea.vmem [#allocation3], 241
        %v2600 = vld [vmem:[%s2599] ss:$2 sm:$0xff]
        %s2601 = scalar_lea.vmem [#allocation3], 289
        %v2602 = vld [vmem:[%s2601] ss:$2 sm:$0xff]
        %s2603 = scalar_lea.vmem [#allocation3], 337
        %v2604 = vld [vmem:[%s2603] ss:$2 sm:$0xff]
        %s2605 = scalar_lea.vmem [#allocation3], 2
        %v2606 = vld [vmem:[%s2605] ss:$2 sm:$0xff]
        %s2607 = scalar_lea.vmem [#allocation3], 50
        %v2608 = vld [vmem:[%s2607] ss:$2 sm:$0xff]
        %s2609 = scalar_lea.vmem [#allocation3], 98
        %v2610 = vld [vmem:[%s2609] ss:$2 sm:$0xff]
        %s2611 = scalar_lea.vmem [#allocation3], 146
        %v2612 = vld [vmem:[%s2611] ss:$2 sm:$0xff]
        %s2613 = scalar_lea.vmem [#allocation3], 194
        %v2614 = vld [vmem:[%s2613] ss:$2 sm:$0xff]
        %s2615 = scalar_lea.vmem [#allocation3], 242
        %v2616 = vld [vmem:[%s2615] ss:$2 sm:$0xff]
        %s2617 = scalar_lea.vmem [#allocation3], 290
        %v2618 = vld [vmem:[%s2617] ss:$2 sm:$0xff]
        %s2619 = scalar_lea.vmem [#allocation3], 338
        %v2620 = vld [vmem:[%s2619] ss:$2 sm:$0xff]
        %s2621 = scalar_lea.vmem [#allocation3], 3
        %v2622 = vld [vmem:[%s2621] ss:$2 sm:$0xff]
        %s2623 = scalar_lea.vmem [#allocation3], 51
        %v2624 = vld [vmem:[%s2623] ss:$2 sm:$0xff]
        %s2625 = scalar_lea.vmem [#allocation3], 99
        %v2626 = vld [vmem:[%s2625] ss:$2 sm:$0xff]
        %s2627 = scalar_lea.vmem [#allocation3], 147
        %v2628 = vld [vmem:[%s2627] ss:$2 sm:$0xff]
        %s2629 = scalar_lea.vmem [#allocation3], 195
        %v2630 = vld [vmem:[%s2629] ss:$2 sm:$0xff]
        %s2631 = scalar_lea.vmem [#allocation3], 243
        %v2632 = vld [vmem:[%s2631] ss:$2 sm:$0xff]
        %s2633 = scalar_lea.vmem [#allocation3], 291
        %v2634 = vld [vmem:[%s2633] ss:$2 sm:$0xff]
        %s2635 = scalar_lea.vmem [#allocation3], 339
        %v2636 = vld [vmem:[%s2635] ss:$2 sm:$0xff]
        %s2637 = scalar_lea.vmem [#allocation3], 4
        %v2638 = vld [vmem:[%s2637] ss:$2 sm:$0xff]
        %s2639 = scalar_lea.vmem [#allocation3], 52
        %v2640 = vld [vmem:[%s2639] ss:$2 sm:$0xff]
        %s2641 = scalar_lea.vmem [#allocation3], 100
        %v2642 = vld [vmem:[%s2641] ss:$2 sm:$0xff]
        %s2643 = scalar_lea.vmem [#allocation3], 148
        %v2644 = vld [vmem:[%s2643] ss:$2 sm:$0xff]
        %s2645 = scalar_lea.vmem [#allocation3], 196
        %v2646 = vld [vmem:[%s2645] ss:$2 sm:$0xff]
        %s2647 = scalar_lea.vmem [#allocation3], 244
        %v2648 = vld [vmem:[%s2647] ss:$2 sm:$0xff]
        %s2649 = scalar_lea.vmem [#allocation3], 292
        %v2650 = vld [vmem:[%s2649] ss:$2 sm:$0xff]
        %s2651 = scalar_lea.vmem [#allocation3], 340
        %v2652 = vld [vmem:[%s2651] ss:$2 sm:$0xff]
        %s2653 = scalar_lea.vmem [#allocation3], 24
        %v2654 = vld [vmem:[%s2653] ss:$2 sm:$0xff]
        %s2655 = scalar_lea.vmem %s2653, 48 [#allocation3]
        %v2656 = vld [vmem:[%s2655] ss:$2 sm:$0xff]
        %s2657 = scalar_lea.vmem %s2653, 96 [#allocation3]
        %v2658 = vld [vmem:[%s2657] ss:$2 sm:$0xff]
        %s2659 = scalar_lea.vmem %s2653, 144 [#allocation3]
        %v2660 = vld [vmem:[%s2659] ss:$2 sm:$0xff]
        %s2661 = scalar_lea.vmem %s2653, 192 [#allocation3]
        %v2662 = vld [vmem:[%s2661] ss:$2 sm:$0xff]
        %s2663 = scalar_lea.vmem %s2653, 240 [#allocation3]
        %v2664 = vld [vmem:[%s2663] ss:$2 sm:$0xff]
        %s2665 = scalar_lea.vmem %s2653, 288 [#allocation3]
        %v2666 = vld [vmem:[%s2665] ss:$2 sm:$0xff]
        %s2667 = scalar_lea.vmem %s2653, 336 [#allocation3]
        %v2668 = vld [vmem:[%s2667] ss:$2 sm:$0xff]
        %s2669 = scalar_lea.vmem %s2653, 1 [#allocation3]
        %v2670 = vld [vmem:[%s2669] ss:$2 sm:$0xff]
        %s2671 = scalar_lea.vmem %s2653, 49 [#allocation3]
        %v2672 = vld [vmem:[%s2671] ss:$2 sm:$0xff]
        %s2673 = scalar_lea.vmem %s2653, 97 [#allocation3]
        %v2674 = vld [vmem:[%s2673] ss:$2 sm:$0xff]
        %s2675 = scalar_lea.vmem %s2653, 145 [#allocation3]
        %v2676 = vld [vmem:[%s2675] ss:$2 sm:$0xff]
        %s2677 = scalar_lea.vmem %s2653, 193 [#allocation3]
        %v2678 = vld [vmem:[%s2677] ss:$2 sm:$0xff]
        %s2679 = scalar_lea.vmem %s2653, 241 [#allocation3]
        %v2680 = vld [vmem:[%s2679] ss:$2 sm:$0xff]
        %s2681 = scalar_lea.vmem %s2653, 289 [#allocation3]
        %v2682 = vld [vmem:[%s2681] ss:$2 sm:$0xff]
        %s2683 = scalar_lea.vmem %s2653, 337 [#allocation3]
        %v2684 = vld [vmem:[%s2683] ss:$2 sm:$0xff]
        %s2685 = scalar_lea.vmem %s2653, 2 [#allocation3]
        %v2686 = vld [vmem:[%s2685] ss:$2 sm:$0xff]
        %s2687 = scalar_lea.vmem %s2653, 50 [#allocation3]
        %v2688 = vld [vmem:[%s2687] ss:$2 sm:$0xff]
        %s2689 = scalar_lea.vmem %s2653, 98 [#allocation3]
        %v2690 = vld [vmem:[%s2689] ss:$2 sm:$0xff]
        %s2691 = scalar_lea.vmem %s2653, 146 [#allocation3]
        %v2692 = vld [vmem:[%s2691] ss:$2 sm:$0xff]
        %s2693 = scalar_lea.vmem %s2653, 194 [#allocation3]
        %v2694 = vld [vmem:[%s2693] ss:$2 sm:$0xff]
        %s2695 = scalar_lea.vmem %s2653, 242 [#allocation3]
        %v2696 = vld [vmem:[%s2695] ss:$2 sm:$0xff]
        %s2697 = scalar_lea.vmem %s2653, 290 [#allocation3]
        %v2698 = vld [vmem:[%s2697] ss:$2 sm:$0xff]
        %s2699 = scalar_lea.vmem %s2653, 338 [#allocation3]
        %v2700 = vld [vmem:[%s2699] ss:$2 sm:$0xff]
        %s2701 = scalar_lea.vmem %s2653, 3 [#allocation3]
        %v2702 = vld [vmem:[%s2701] ss:$2 sm:$0xff]
        %s2703 = scalar_lea.vmem %s2653, 51 [#allocation3]
        %v2704 = vld [vmem:[%s2703] ss:$2 sm:$0xff]
        %s2705 = scalar_lea.vmem %s2653, 99 [#allocation3]
        %v2706 = vld [vmem:[%s2705] ss:$2 sm:$0xff]
        %s2707 = scalar_lea.vmem %s2653, 147 [#allocation3]
        %v2708 = vld [vmem:[%s2707] ss:$2 sm:$0xff]
        %s2709 = scalar_lea.vmem %s2653, 195 [#allocation3]
        %v2710 = vld [vmem:[%s2709] ss:$2 sm:$0xff]
        %s2711 = scalar_lea.vmem %s2653, 243 [#allocation3]
        %v2712 = vld [vmem:[%s2711] ss:$2 sm:$0xff]
        %s2713 = scalar_lea.vmem %s2653, 291 [#allocation3]
        %v2714 = vld [vmem:[%s2713] ss:$2 sm:$0xff]
        %s2715 = scalar_lea.vmem %s2653, 339 [#allocation3]
        %v2716 = vld [vmem:[%s2715] ss:$2 sm:$0xff]
        %s2717 = scalar_lea.vmem %s2653, 4 [#allocation3]
        %v2718 = vld [vmem:[%s2717] ss:$2 sm:$0xff]
        %s2719 = scalar_lea.vmem %s2653, 52 [#allocation3]
        %v2720 = vld [vmem:[%s2719] ss:$2 sm:$0xff]
        %s2721 = scalar_lea.vmem %s2653, 100 [#allocation3]
        %v2722 = vld [vmem:[%s2721] ss:$2 sm:$0xff]
        %s2723 = scalar_lea.vmem %s2653, 148 [#allocation3]
        %v2724 = vld [vmem:[%s2723] ss:$2 sm:$0xff]
        %s2725 = scalar_lea.vmem %s2653, 196 [#allocation3]
        %v2726 = vld [vmem:[%s2725] ss:$2 sm:$0xff]
        %s2727 = scalar_lea.vmem %s2653, 244 [#allocation3]
        %v2728 = vld [vmem:[%s2727] ss:$2 sm:$0xff]
        %s2729 = scalar_lea.vmem %s2653, 292 [#allocation3]
        %v2730 = vld [vmem:[%s2729] ss:$2 sm:$0xff]
        %s2731 = scalar_lea.vmem %s2653, 340 [#allocation3]
        %v2732 = vld [vmem:[%s2731] ss:$2 sm:$0xff]
        %v2733 = vld [vmem:[%s2541] ss:$2 sm:$0xff]
        %s2734 = scalar_lea.vmem %s2541, 48 [#allocation3]
        %v2735 = vld [vmem:[%s2734] ss:$2 sm:$0xff]
        %s2736 = scalar_lea.vmem %s2541, 96 [#allocation3]
        %v2737 = vld [vmem:[%s2736] ss:$2 sm:$0xff]
        %s2738 = scalar_lea.vmem %s2541, 144 [#allocation3]
        %v2739 = vld [vmem:[%s2738] ss:$2 sm:$0xff]
        %s2740 = scalar_lea.vmem %s2541, 192 [#allocation3]
        %v2741 = vld [vmem:[%s2740] ss:$2 sm:$0xff]
        %s2742 = scalar_lea.vmem %s2541, 240 [#allocation3]
        %v2743 = vld [vmem:[%s2742] ss:$2 sm:$0xff]
        %s2744 = scalar_lea.vmem %s2541, 288 [#allocation3]
        %v2745 = vld [vmem:[%s2744] ss:$2 sm:$0xff]
        %s2746 = scalar_lea.vmem %s2541, 336 [#allocation3]
        %v2747 = vld [vmem:[%s2746] ss:$2 sm:$0xff]
        %s2748 = scalar_lea.vmem %s2541, 1 [#allocation3]
        %v2749 = vld [vmem:[%s2748] ss:$2 sm:$0xff]
        %s2750 = scalar_lea.vmem %s2541, 49 [#allocation3]
        %v2751 = vld [vmem:[%s2750] ss:$2 sm:$0xff]
        %s2752 = scalar_lea.vmem %s2541, 97 [#allocation3]
        %v2753 = vld [vmem:[%s2752] ss:$2 sm:$0xff]
        %s2754 = scalar_lea.vmem %s2541, 145 [#allocation3]
        %v2755 = vld [vmem:[%s2754] ss:$2 sm:$0xff]
        %s2756 = scalar_lea.vmem %s2541, 193 [#allocation3]
        %v2757 = vld [vmem:[%s2756] ss:$2 sm:$0xff]
        %s2758 = scalar_lea.vmem %s2541, 241 [#allocation3]
        %v2759 = vld [vmem:[%s2758] ss:$2 sm:$0xff]
        %s2760 = scalar_lea.vmem %s2541, 289 [#allocation3]
        %v2761 = vld [vmem:[%s2760] ss:$2 sm:$0xff]
        %s2762 = scalar_lea.vmem %s2541, 337 [#allocation3]
        %v2763 = vld [vmem:[%s2762] ss:$2 sm:$0xff]
        %s2764 = scalar_lea.vmem %s2541, 2 [#allocation3]
        %v2765 = vld [vmem:[%s2764] ss:$2 sm:$0xff]
        %s2766 = scalar_lea.vmem %s2541, 50 [#allocation3]
        %v2767 = vld [vmem:[%s2766] ss:$2 sm:$0xff]
        %s2768 = scalar_lea.vmem %s2541, 98 [#allocation3]
        %v2769 = vld [vmem:[%s2768] ss:$2 sm:$0xff]
        %s2770 = scalar_lea.vmem %s2541, 146 [#allocation3]
        %v2771 = vld [vmem:[%s2770] ss:$2 sm:$0xff]
        %s2772 = scalar_lea.vmem %s2541, 194 [#allocation3]
        %v2773 = vld [vmem:[%s2772] ss:$2 sm:$0xff]
        %s2774 = scalar_lea.vmem %s2541, 242 [#allocation3]
        %v2775 = vld [vmem:[%s2774] ss:$2 sm:$0xff]
        %s2776 = scalar_lea.vmem %s2541, 290 [#allocation3]
        %v2777 = vld [vmem:[%s2776] ss:$2 sm:$0xff]
        %s2778 = scalar_lea.vmem %s2541, 338 [#allocation3]
        %v2779 = vld [vmem:[%s2778] ss:$2 sm:$0xff]
        %s2780 = scalar_lea.vmem %s2541, 3 [#allocation3]
        %v2781 = vld [vmem:[%s2780] ss:$2 sm:$0xff]
        %s2782 = scalar_lea.vmem %s2541, 51 [#allocation3]
        %v2783 = vld [vmem:[%s2782] ss:$2 sm:$0xff]
        %s2784 = scalar_lea.vmem %s2541, 99 [#allocation3]
        %v2785 = vld [vmem:[%s2784] ss:$2 sm:$0xff]
        %s2786 = scalar_lea.vmem %s2541, 147 [#allocation3]
        %v2787 = vld [vmem:[%s2786] ss:$2 sm:$0xff]
        %s2788 = scalar_lea.vmem %s2541, 195 [#allocation3]
        %v2789 = vld [vmem:[%s2788] ss:$2 sm:$0xff]
        %s2790 = scalar_lea.vmem %s2541, 243 [#allocation3]
        %v2791 = vld [vmem:[%s2790] ss:$2 sm:$0xff]
        %s2792 = scalar_lea.vmem %s2541, 291 [#allocation3]
        %v2793 = vld [vmem:[%s2792] ss:$2 sm:$0xff]
        %s2794 = scalar_lea.vmem %s2541, 339 [#allocation3]
        %v2795 = vld [vmem:[%s2794] ss:$2 sm:$0xff]
        %s2796 = scalar_lea.vmem %s2541, 4 [#allocation3]
        %v2797 = vld [vmem:[%s2796] ss:$2 sm:$0xff]
        %s2798 = scalar_lea.vmem %s2541, 52 [#allocation3]
        %v2799 = vld [vmem:[%s2798] ss:$2 sm:$0xff]
        %s2800 = scalar_lea.vmem %s2541, 100 [#allocation3]
        %v2801 = vld [vmem:[%s2800] ss:$2 sm:$0xff]
        %s2802 = scalar_lea.vmem %s2541, 148 [#allocation3]
        %v2803 = vld [vmem:[%s2802] ss:$2 sm:$0xff]
        %s2804 = scalar_lea.vmem %s2541, 196 [#allocation3]
        %v2805 = vld [vmem:[%s2804] ss:$2 sm:$0xff]
        %s2806 = scalar_lea.vmem %s2541, 244 [#allocation3]
        %v2807 = vld [vmem:[%s2806] ss:$2 sm:$0xff]
        %s2808 = scalar_lea.vmem %s2541, 292 [#allocation3]
        %v2809 = vld [vmem:[%s2808] ss:$2 sm:$0xff]
        %s2810 = scalar_lea.vmem %s2541, 340 [#allocation3]
        %v2811 = vld [vmem:[%s2810] ss:$2 sm:$0xff]
        %s2812 = scalar_lea.vmem [#allocation3], 72
        %v2813 = vld [vmem:[%s2812] ss:$2 sm:$0xff]
        %s2814 = scalar_lea.vmem %s2812, 48 [#allocation3]
        %v2815 = vld [vmem:[%s2814] ss:$2 sm:$0xff]
        %s2816 = scalar_lea.vmem %s2812, 96 [#allocation3]
        %v2817 = vld [vmem:[%s2816] ss:$2 sm:$0xff]
        %s2818 = scalar_lea.vmem %s2812, 144 [#allocation3]
        %v2819 = vld [vmem:[%s2818] ss:$2 sm:$0xff]
        %s2820 = scalar_lea.vmem %s2812, 192 [#allocation3]
        %v2821 = vld [vmem:[%s2820] ss:$2 sm:$0xff]
        %s2822 = scalar_lea.vmem %s2812, 240 [#allocation3]
        %v2823 = vld [vmem:[%s2822] ss:$2 sm:$0xff]
        %s2824 = scalar_lea.vmem %s2812, 288 [#allocation3]
        %v2825 = vld [vmem:[%s2824] ss:$2 sm:$0xff]
        %s2826 = scalar_lea.vmem %s2812, 336 [#allocation3]
        %v2827 = vld [vmem:[%s2826] ss:$2 sm:$0xff]
        %s2828 = scalar_lea.vmem %s2812, 1 [#allocation3]
        %v2829 = vld [vmem:[%s2828] ss:$2 sm:$0xff]
        %s2830 = scalar_lea.vmem %s2812, 49 [#allocation3]
        %v2831 = vld [vmem:[%s2830] ss:$2 sm:$0xff]
        %s2832 = scalar_lea.vmem %s2812, 97 [#allocation3]
        %v2833 = vld [vmem:[%s2832] ss:$2 sm:$0xff]
        %s2834 = scalar_lea.vmem %s2812, 145 [#allocation3]
        %v2835 = vld [vmem:[%s2834] ss:$2 sm:$0xff]
        %s2836 = scalar_lea.vmem %s2812, 193 [#allocation3]
        %v2837 = vld [vmem:[%s2836] ss:$2 sm:$0xff]
        %s2838 = scalar_lea.vmem %s2812, 241 [#allocation3]
        %v2839 = vld [vmem:[%s2838] ss:$2 sm:$0xff]
        %s2840 = scalar_lea.vmem %s2812, 289 [#allocation3]
        %v2841 = vld [vmem:[%s2840] ss:$2 sm:$0xff]
        %s2842 = scalar_lea.vmem %s2812, 337 [#allocation3]
        %v2843 = vld [vmem:[%s2842] ss:$2 sm:$0xff]
        %s2844 = scalar_lea.vmem %s2812, 2 [#allocation3]
        %v2845 = vld [vmem:[%s2844] ss:$2 sm:$0xff]
        %s2846 = scalar_lea.vmem %s2812, 50 [#allocation3]
        %v2847 = vld [vmem:[%s2846] ss:$2 sm:$0xff]
        %s2848 = scalar_lea.vmem %s2812, 98 [#allocation3]
        %v2849 = vld [vmem:[%s2848] ss:$2 sm:$0xff]
        %s2850 = scalar_lea.vmem %s2812, 146 [#allocation3]
        %v2851 = vld [vmem:[%s2850] ss:$2 sm:$0xff]
        %s2852 = scalar_lea.vmem %s2812, 194 [#allocation3]
        %v2853 = vld [vmem:[%s2852] ss:$2 sm:$0xff]
        %s2854 = scalar_lea.vmem %s2812, 242 [#allocation3]
        %v2855 = vld [vmem:[%s2854] ss:$2 sm:$0xff]
        %s2856 = scalar_lea.vmem %s2812, 290 [#allocation3]
        %v2857 = vld [vmem:[%s2856] ss:$2 sm:$0xff]
        %s2858 = scalar_lea.vmem %s2812, 338 [#allocation3]
        %v2859 = vld [vmem:[%s2858] ss:$2 sm:$0xff]
        %s2860 = scalar_lea.vmem %s2812, 3 [#allocation3]
        %v2861 = vld [vmem:[%s2860] ss:$2 sm:$0xff]
        %s2862 = scalar_lea.vmem %s2812, 51 [#allocation3]
        %v2863 = vld [vmem:[%s2862] ss:$2 sm:$0xff]
        %s2864 = scalar_lea.vmem %s2812, 99 [#allocation3]
        %v2865 = vld [vmem:[%s2864] ss:$2 sm:$0xff]
        %s2866 = scalar_lea.vmem %s2812, 147 [#allocation3]
        %v2867 = vld [vmem:[%s2866] ss:$2 sm:$0xff]
        %s2868 = scalar_lea.vmem %s2812, 195 [#allocation3]
        %v2869 = vld [vmem:[%s2868] ss:$2 sm:$0xff]
        %s2870 = scalar_lea.vmem %s2812, 243 [#allocation3]
        %v2871 = vld [vmem:[%s2870] ss:$2 sm:$0xff]
        %s2872 = scalar_lea.vmem %s2812, 291 [#allocation3]
        %v2873 = vld [vmem:[%s2872] ss:$2 sm:$0xff]
        %s2874 = scalar_lea.vmem %s2812, 339 [#allocation3]
        %v2875 = vld [vmem:[%s2874] ss:$2 sm:$0xff]
        %s2876 = scalar_lea.vmem %s2812, 4 [#allocation3]
        %v2877 = vld [vmem:[%s2876] ss:$2 sm:$0xff]
        %s2878 = scalar_lea.vmem %s2812, 52 [#allocation3]
        %v2879 = vld [vmem:[%s2878] ss:$2 sm:$0xff]
        %s2880 = scalar_lea.vmem %s2812, 100 [#allocation3]
        %v2881 = vld [vmem:[%s2880] ss:$2 sm:$0xff]
        %s2882 = scalar_lea.vmem %s2812, 148 [#allocation3]
        %v2883 = vld [vmem:[%s2882] ss:$2 sm:$0xff]
        %s2884 = scalar_lea.vmem %s2812, 196 [#allocation3]
        %v2885 = vld [vmem:[%s2884] ss:$2 sm:$0xff]
        %s2886 = scalar_lea.vmem %s2812, 244 [#allocation3]
        %v2887 = vld [vmem:[%s2886] ss:$2 sm:$0xff]
        %s2888 = scalar_lea.vmem %s2812, 292 [#allocation3]
        %v2889 = vld [vmem:[%s2888] ss:$2 sm:$0xff]
        %s2890 = scalar_lea.vmem %s2812, 340 [#allocation3]
        %v2891 = vld [vmem:[%s2890] ss:$2 sm:$0xff]
        %s2892 = scalar_lea.vmem [#allocation3], 96
        %v2893 = vld [vmem:[%s2892] ss:$2 sm:$0xff]
        %s2894 = scalar_lea.vmem %s2892, 48 [#allocation3]
        %v2895 = vld [vmem:[%s2894] ss:$2 sm:$0xff]
        %s2896 = scalar_lea.vmem %s2892, 96 [#allocation3]
        %v2897 = vld [vmem:[%s2896] ss:$2 sm:$0xff]
        %s2898 = scalar_lea.vmem %s2892, 144 [#allocation3]
        %v2899 = vld [vmem:[%s2898] ss:$2 sm:$0xff]
        %s2900 = scalar_lea.vmem %s2892, 192 [#allocation3]
        %v2901 = vld [vmem:[%s2900] ss:$2 sm:$0xff]
        %s2902 = scalar_lea.vmem %s2892, 240 [#allocation3]
        %v2903 = vld [vmem:[%s2902] ss:$2 sm:$0xff]
        %s2904 = scalar_lea.vmem %s2892, 288 [#allocation3]
        %v2905 = vld [vmem:[%s2904] ss:$2 sm:$0xff]
        %s2906 = scalar_lea.vmem %s2892, 336 [#allocation3]
        %v2907 = vld [vmem:[%s2906] ss:$2 sm:$0xff]
        %s2908 = scalar_lea.vmem %s2892, 1 [#allocation3]
        %v2909 = vld [vmem:[%s2908] ss:$2 sm:$0xff]
        %s2910 = scalar_lea.vmem %s2892, 49 [#allocation3]
        %v2911 = vld [vmem:[%s2910] ss:$2 sm:$0xff]
        %s2912 = scalar_lea.vmem %s2892, 97 [#allocation3]
        %v2913 = vld [vmem:[%s2912] ss:$2 sm:$0xff]
        %s2914 = scalar_lea.vmem %s2892, 145 [#allocation3]
        %v2915 = vld [vmem:[%s2914] ss:$2 sm:$0xff]
        %s2916 = scalar_lea.vmem %s2892, 193 [#allocation3]
        %v2917 = vld [vmem:[%s2916] ss:$2 sm:$0xff]
        %s2918 = scalar_lea.vmem %s2892, 241 [#allocation3]
        %v2919 = vld [vmem:[%s2918] ss:$2 sm:$0xff]
        %s2920 = scalar_lea.vmem %s2892, 289 [#allocation3]
        %v2921 = vld [vmem:[%s2920] ss:$2 sm:$0xff]
        %s2922 = scalar_lea.vmem %s2892, 337 [#allocation3]
        %v2923 = vld [vmem:[%s2922] ss:$2 sm:$0xff]
        %s2924 = scalar_lea.vmem %s2892, 2 [#allocation3]
        %v2925 = vld [vmem:[%s2924] ss:$2 sm:$0xff]
        %s2926 = scalar_lea.vmem %s2892, 50 [#allocation3]
        %v2927 = vld [vmem:[%s2926] ss:$2 sm:$0xff]
        %s2928 = scalar_lea.vmem %s2892, 98 [#allocation3]
        %v2929 = vld [vmem:[%s2928] ss:$2 sm:$0xff]
        %s2930 = scalar_lea.vmem %s2892, 146 [#allocation3]
        %v2931 = vld [vmem:[%s2930] ss:$2 sm:$0xff]
        %s2932 = scalar_lea.vmem %s2892, 194 [#allocation3]
        %v2933 = vld [vmem:[%s2932] ss:$2 sm:$0xff]
        %s2934 = scalar_lea.vmem %s2892, 242 [#allocation3]
        %v2935 = vld [vmem:[%s2934] ss:$2 sm:$0xff]
        %s2936 = scalar_lea.vmem %s2892, 290 [#allocation3]
        %v2937 = vld [vmem:[%s2936] ss:$2 sm:$0xff]
        %s2938 = scalar_lea.vmem %s2892, 338 [#allocation3]
        %v2939 = vld [vmem:[%s2938] ss:$2 sm:$0xff]
        %s2940 = scalar_lea.vmem %s2892, 3 [#allocation3]
        %v2941 = vld [vmem:[%s2940] ss:$2 sm:$0xff]
        %s2942 = scalar_lea.vmem %s2892, 51 [#allocation3]
        %v2943 = vld [vmem:[%s2942] ss:$2 sm:$0xff]
        %s2944 = scalar_lea.vmem %s2892, 99 [#allocation3]
        %v2945 = vld [vmem:[%s2944] ss:$2 sm:$0xff]
        %s2946 = scalar_lea.vmem %s2892, 147 [#allocation3]
        %v2947 = vld [vmem:[%s2946] ss:$2 sm:$0xff]
        %s2948 = scalar_lea.vmem %s2892, 195 [#allocation3]
        %v2949 = vld [vmem:[%s2948] ss:$2 sm:$0xff]
        %s2950 = scalar_lea.vmem %s2892, 243 [#allocation3]
        %v2951 = vld [vmem:[%s2950] ss:$2 sm:$0xff]
        %s2952 = scalar_lea.vmem %s2892, 291 [#allocation3]
        %v2953 = vld [vmem:[%s2952] ss:$2 sm:$0xff]
        %s2954 = scalar_lea.vmem %s2892, 339 [#allocation3]
        %v2955 = vld [vmem:[%s2954] ss:$2 sm:$0xff]
        %s2956 = scalar_lea.vmem %s2892, 4 [#allocation3]
        %v2957 = vld [vmem:[%s2956] ss:$2 sm:$0xff]
        %s2958 = scalar_lea.vmem %s2892, 52 [#allocation3]
        %v2959 = vld [vmem:[%s2958] ss:$2 sm:$0xff]
        %s2960 = scalar_lea.vmem %s2892, 100 [#allocation3]
        %v2961 = vld [vmem:[%s2960] ss:$2 sm:$0xff]
        %s2962 = scalar_lea.vmem %s2892, 148 [#allocation3]
        %v2963 = vld [vmem:[%s2962] ss:$2 sm:$0xff]
        %s2964 = scalar_lea.vmem %s2892, 196 [#allocation3]
        %v2965 = vld [vmem:[%s2964] ss:$2 sm:$0xff]
        %s2966 = scalar_lea.vmem %s2892, 244 [#allocation3]
        %v2967 = vld [vmem:[%s2966] ss:$2 sm:$0xff]
        %s2968 = scalar_lea.vmem %s2892, 292 [#allocation3]
        %v2969 = vld [vmem:[%s2968] ss:$2 sm:$0xff]
        %s2970 = scalar_lea.vmem %s2892, 340 [#allocation3]
        %v2971 = vld [vmem:[%s2970] ss:$2 sm:$0xff]
        %2980 = vrot.lane.b32.xlu0 %v2590, 8
        %v2981 = vpop.permute.xlu0 %2980
        %2982 = vrot.lane.b32.xlu0 %v2592, 8
        %v2983 = vpop.permute.xlu0 %2982
        %2984 = vrot.lane.b32.xlu0 %v2594, 8
        %v2985 = vpop.permute.xlu0 %2984
        %2986 = vrot.lane.b32.xlu0 %v2596, 8
        %v2987 = vpop.permute.xlu0 %2986
        %2988 = vrot.lane.b32.xlu0 %v2598, 8
        %v2989 = vpop.permute.xlu0 %2988
        %2990 = vrot.lane.b32.xlu0 %v2600, 8
        %v2991 = vpop.permute.xlu0 %2990
        %2992 = vrot.lane.b32.xlu0 %v2602, 8
        %v2993 = vpop.permute.xlu0 %2992
        %2994 = vrot.lane.b32.xlu0 %v2604, 8
        %v2995 = vpop.permute.xlu0 %2994
        %3012 = vrot.lane.b32.xlu0 %v2606, 16
        %v3013 = vpop.permute.xlu0 %3012
        %3014 = vrot.lane.b32.xlu0 %v2608, 16
        %v3015 = vpop.permute.xlu0 %3014
        %3016 = vrot.lane.b32.xlu0 %v2610, 16
        %v3017 = vpop.permute.xlu0 %3016
        %3018 = vrot.lane.b32.xlu0 %v2612, 16
        %v3019 = vpop.permute.xlu0 %3018
        %3020 = vrot.lane.b32.xlu0 %v2614, 16
        %v3021 = vpop.permute.xlu0 %3020
        %3022 = vrot.lane.b32.xlu0 %v2616, 16
        %v3023 = vpop.permute.xlu0 %3022
        %3024 = vrot.lane.b32.xlu0 %v2618, 16
        %v3025 = vpop.permute.xlu0 %3024
        %3026 = vrot.lane.b32.xlu0 %v2620, 16
        %v3027 = vpop.permute.xlu0 %3026
        %3044 = vrot.lane.b32.xlu0 %v2622, 24
        %v3045 = vpop.permute.xlu0 %3044
        %3046 = vrot.lane.b32.xlu0 %v2624, 24
        %v3047 = vpop.permute.xlu0 %3046
        %3048 = vrot.lane.b32.xlu0 %v2626, 24
        %v3049 = vpop.permute.xlu0 %3048
        %3050 = vrot.lane.b32.xlu0 %v2628, 24
        %v3051 = vpop.permute.xlu0 %3050
        %3052 = vrot.lane.b32.xlu0 %v2630, 24
        %v3053 = vpop.permute.xlu0 %3052
        %3054 = vrot.lane.b32.xlu0 %v2632, 24
        %v3055 = vpop.permute.xlu0 %3054
        %3056 = vrot.lane.b32.xlu0 %v2634, 24
        %v3057 = vpop.permute.xlu0 %3056
        %3058 = vrot.lane.b32.xlu0 %v2636, 24
        %v3059 = vpop.permute.xlu0 %3058
        %3076 = vrot.lane.b32.xlu0 %v2638, 32
        %v3077 = vpop.permute.xlu0 %3076
        %3078 = vrot.lane.b32.xlu0 %v2640, 32
        %v3079 = vpop.permute.xlu0 %3078
        %3080 = vrot.lane.b32.xlu0 %v2642, 32
        %v3081 = vpop.permute.xlu0 %3080
        %3082 = vrot.lane.b32.xlu0 %v2644, 32
        %v3083 = vpop.permute.xlu0 %3082
        %3084 = vrot.lane.b32.xlu0 %v2646, 32
        %v3085 = vpop.permute.xlu0 %3084
        %3086 = vrot.lane.b32.xlu0 %v2648, 32
        %v3087 = vpop.permute.xlu0 %3086
        %3088 = vrot.lane.b32.xlu0 %v2650, 32
        %v3089 = vpop.permute.xlu0 %3088
        %3090 = vrot.lane.b32.xlu0 %v2652, 32
        %v3091 = vpop.permute.xlu0 %3090
        %3108 = vrot.lane.b32.xlu0 %v2654, 40
        %v3109 = vpop.permute.xlu0 %3108
        %3110 = vrot.lane.b32.xlu0 %v2656, 40
        %v3111 = vpop.permute.xlu0 %3110
        %3112 = vrot.lane.b32.xlu0 %v2658, 40
        %v3113 = vpop.permute.xlu0 %3112
        %3114 = vrot.lane.b32.xlu0 %v2660, 40
        %v3115 = vpop.permute.xlu0 %3114
        %3116 = vrot.lane.b32.xlu0 %v2662, 40
        %v3117 = vpop.permute.xlu0 %3116
        %3118 = vrot.lane.b32.xlu0 %v2664, 40
        %v3119 = vpop.permute.xlu0 %3118
        %3120 = vrot.lane.b32.xlu0 %v2666, 40
        %v3121 = vpop.permute.xlu0 %3120
        %3122 = vrot.lane.b32.xlu0 %v2668, 40
        %v3123 = vpop.permute.xlu0 %3122
        %3140 = vrot.lane.b32.xlu0 %v2670, 48
        %v3141 = vpop.permute.xlu0 %3140
        %3142 = vrot.lane.b32.xlu0 %v2672, 48
        %v3143 = vpop.permute.xlu0 %3142
        %3144 = vrot.lane.b32.xlu0 %v2674, 48
        %v3145 = vpop.permute.xlu0 %3144
        %3146 = vrot.lane.b32.xlu0 %v2676, 48
        %v3147 = vpop.permute.xlu0 %3146
        %3148 = vrot.lane.b32.xlu0 %v2678, 48
        %v3149 = vpop.permute.xlu0 %3148
        %3150 = vrot.lane.b32.xlu0 %v2680, 48
        %v3151 = vpop.permute.xlu0 %3150
        %3152 = vrot.lane.b32.xlu0 %v2682, 48
        %v3153 = vpop.permute.xlu0 %3152
        %3154 = vrot.lane.b32.xlu0 %v2684, 48
        %v3155 = vpop.permute.xlu0 %3154
        %3172 = vrot.lane.b32.xlu0 %v2686, 56
        %v3173 = vpop.permute.xlu0 %3172
        %3174 = vrot.lane.b32.xlu0 %v2688, 56
        %v3175 = vpop.permute.xlu0 %3174
        %3176 = vrot.lane.b32.xlu0 %v2690, 56
        %v3177 = vpop.permute.xlu0 %3176
        %3178 = vrot.lane.b32.xlu0 %v2692, 56
        %v3179 = vpop.permute.xlu0 %3178
        %3180 = vrot.lane.b32.xlu0 %v2694, 56
        %v3181 = vpop.permute.xlu0 %3180
        %3182 = vrot.lane.b32.xlu0 %v2696, 56
        %v3183 = vpop.permute.xlu0 %3182
        %3184 = vrot.lane.b32.xlu0 %v2698, 56
        %v3185 = vpop.permute.xlu0 %3184
        %3186 = vrot.lane.b32.xlu0 %v2700, 56
        %v3187 = vpop.permute.xlu0 %3186
        %3204 = vrot.lane.b32.xlu0 %v2702, 64
        %v3205 = vpop.permute.xlu0 %3204
        %3206 = vrot.lane.b32.xlu0 %v2704, 64
        %v3207 = vpop.permute.xlu0 %3206
        %3208 = vrot.lane.b32.xlu0 %v2706, 64
        %v3209 = vpop.permute.xlu0 %3208
        %3210 = vrot.lane.b32.xlu0 %v2708, 64
        %v3211 = vpop.permute.xlu0 %3210
        %3212 = vrot.lane.b32.xlu0 %v2710, 64
        %v3213 = vpop.permute.xlu0 %3212
        %3214 = vrot.lane.b32.xlu0 %v2712, 64
        %v3215 = vpop.permute.xlu0 %3214
        %3216 = vrot.lane.b32.xlu0 %v2714, 64
        %v3217 = vpop.permute.xlu0 %3216
        %3218 = vrot.lane.b32.xlu0 %v2716, 64
        %v3219 = vpop.permute.xlu0 %3218
        %3236 = vrot.lane.b32.xlu0 %v2718, 72
        %v3237 = vpop.permute.xlu0 %3236
        %3238 = vrot.lane.b32.xlu0 %v2720, 72
        %v3239 = vpop.permute.xlu0 %3238
        %3240 = vrot.lane.b32.xlu0 %v2722, 72
        %v3241 = vpop.permute.xlu0 %3240
        %3242 = vrot.lane.b32.xlu0 %v2724, 72
        %v3243 = vpop.permute.xlu0 %3242
        %3244 = vrot.lane.b32.xlu0 %v2726, 72
        %v3245 = vpop.permute.xlu0 %3244
        %3246 = vrot.lane.b32.xlu0 %v2728, 72
        %v3247 = vpop.permute.xlu0 %3246
        %3248 = vrot.lane.b32.xlu0 %v2730, 72
        %v3249 = vpop.permute.xlu0 %3248
        %3250 = vrot.lane.b32.xlu0 %v2732, 72
        %v3251 = vpop.permute.xlu0 %3250
        %3268 = vrot.lane.b32.xlu0 %v2733, 80
        %v3269 = vpop.permute.xlu0 %3268
        %3270 = vrot.lane.b32.xlu0 %v2735, 80
        %v3271 = vpop.permute.xlu0 %3270
        %3272 = vrot.lane.b32.xlu0 %v2737, 80
        %v3273 = vpop.permute.xlu0 %3272
        %3274 = vrot.lane.b32.xlu0 %v2739, 80
        %v3275 = vpop.permute.xlu0 %3274
        %3276 = vrot.lane.b32.xlu0 %v2741, 80
        %v3277 = vpop.permute.xlu0 %3276
        %3278 = vrot.lane.b32.xlu0 %v2743, 80
        %v3279 = vpop.permute.xlu0 %3278
        %3280 = vrot.lane.b32.xlu0 %v2745, 80
        %v3281 = vpop.permute.xlu0 %3280
        %3282 = vrot.lane.b32.xlu0 %v2747, 80
        %v3283 = vpop.permute.xlu0 %3282
        %3300 = vrot.lane.b32.xlu0 %v2749, 88
        %v3301 = vpop.permute.xlu0 %3300
        %3302 = vrot.lane.b32.xlu0 %v2751, 88
        %v3303 = vpop.permute.xlu0 %3302
        %3304 = vrot.lane.b32.xlu0 %v2753, 88
        %v3305 = vpop.permute.xlu0 %3304
        %3306 = vrot.lane.b32.xlu0 %v2755, 88
        %v3307 = vpop.permute.xlu0 %3306
        %3308 = vrot.lane.b32.xlu0 %v2757, 88
        %v3309 = vpop.permute.xlu0 %3308
        %3310 = vrot.lane.b32.xlu0 %v2759, 88
        %v3311 = vpop.permute.xlu0 %3310
        %3312 = vrot.lane.b32.xlu0 %v2761, 88
        %v3313 = vpop.permute.xlu0 %3312
        %3314 = vrot.lane.b32.xlu0 %v2763, 88
        %v3315 = vpop.permute.xlu0 %3314
        %3332 = vrot.lane.b32.xlu0 %v2765, 96
        %v3333 = vpop.permute.xlu0 %3332
        %3334 = vrot.lane.b32.xlu0 %v2767, 96
        %v3335 = vpop.permute.xlu0 %3334
        %3336 = vrot.lane.b32.xlu0 %v2769, 96
        %v3337 = vpop.permute.xlu0 %3336
        %3338 = vrot.lane.b32.xlu0 %v2771, 96
        %v3339 = vpop.permute.xlu0 %3338
        %3340 = vrot.lane.b32.xlu0 %v2773, 96
        %v3341 = vpop.permute.xlu0 %3340
        %3342 = vrot.lane.b32.xlu0 %v2775, 96
        %v3343 = vpop.permute.xlu0 %3342
        %3344 = vrot.lane.b32.xlu0 %v2777, 96
        %v3345 = vpop.permute.xlu0 %3344
        %3346 = vrot.lane.b32.xlu0 %v2779, 96
        %v3347 = vpop.permute.xlu0 %3346
        %3364 = vrot.lane.b32.xlu0 %v2781, 104
        %v3365 = vpop.permute.xlu0 %3364
        %3366 = vrot.lane.b32.xlu0 %v2783, 104
        %v3367 = vpop.permute.xlu0 %3366
        %3368 = vrot.lane.b32.xlu0 %v2785, 104
        %v3369 = vpop.permute.xlu0 %3368
        %3370 = vrot.lane.b32.xlu0 %v2787, 104
        %v3371 = vpop.permute.xlu0 %3370
        %3372 = vrot.lane.b32.xlu0 %v2789, 104
        %v3373 = vpop.permute.xlu0 %3372
        %3374 = vrot.lane.b32.xlu0 %v2791, 104
        %v3375 = vpop.permute.xlu0 %3374
        %3376 = vrot.lane.b32.xlu0 %v2793, 104
        %v3377 = vpop.permute.xlu0 %3376
        %3378 = vrot.lane.b32.xlu0 %v2795, 104
        %v3379 = vpop.permute.xlu0 %3378
        %3396 = vrot.lane.b32.xlu0 %v2797, 112
        %v3397 = vpop.permute.xlu0 %3396
        %3398 = vrot.lane.b32.xlu0 %v2799, 112
        %v3399 = vpop.permute.xlu0 %3398
        %3400 = vrot.lane.b32.xlu0 %v2801, 112
        %v3401 = vpop.permute.xlu0 %3400
        %3402 = vrot.lane.b32.xlu0 %v2803, 112
        %v3403 = vpop.permute.xlu0 %3402
        %3404 = vrot.lane.b32.xlu0 %v2805, 112
        %v3405 = vpop.permute.xlu0 %3404
        %3406 = vrot.lane.b32.xlu0 %v2807, 112
        %v3407 = vpop.permute.xlu0 %3406
        %3408 = vrot.lane.b32.xlu0 %v2809, 112
        %v3409 = vpop.permute.xlu0 %3408
        %3410 = vrot.lane.b32.xlu0 %v2811, 112
        %v3411 = vpop.permute.xlu0 %3410
        %3428 = vrot.lane.b32.xlu0 %v2813, 120
        %v3429 = vpop.permute.xlu0 %3428
        %3430 = vrot.lane.b32.xlu0 %v2815, 120
        %v3431 = vpop.permute.xlu0 %3430
        %3432 = vrot.lane.b32.xlu0 %v2817, 120
        %v3433 = vpop.permute.xlu0 %3432
        %3434 = vrot.lane.b32.xlu0 %v2819, 120
        %v3435 = vpop.permute.xlu0 %3434
        %3436 = vrot.lane.b32.xlu0 %v2821, 120
        %v3437 = vpop.permute.xlu0 %3436
        %3438 = vrot.lane.b32.xlu0 %v2823, 120
        %v3439 = vpop.permute.xlu0 %3438
        %3440 = vrot.lane.b32.xlu0 %v2825, 120
        %v3441 = vpop.permute.xlu0 %3440
        %3442 = vrot.lane.b32.xlu0 %v2827, 120
        %v3443 = vpop.permute.xlu0 %3442
        %v3452 = vsel %vm1815, %v2574, %v2981
        %v3453 = vsel %vm1815, %v2576, %v2983
        %v3454 = vsel %vm1815, %v2578, %v2985
        %v3455 = vsel %vm1815, %v2580, %v2987
        %v3456 = vsel %vm1815, %v2582, %v2989
        %v3457 = vsel %vm1815, %v2584, %v2991
        %v3458 = vsel %vm1815, %v2586, %v2993
        %v3459 = vsel %vm1815, %v2588, %v2995
        %v3460 = vsel %vm1881, %v3452, %v3013
        %v3461 = vsel %vm1881, %v3453, %v3015
        %v3462 = vsel %vm1881, %v3454, %v3017
        %v3463 = vsel %vm1881, %v3455, %v3019
        %v3464 = vsel %vm1881, %v3456, %v3021
        %v3465 = vsel %vm1881, %v3457, %v3023
        %v3466 = vsel %vm1881, %v3458, %v3025
        %v3467 = vsel %vm1881, %v3459, %v3027
        %v3468 = vsel %vm1947, %v3460, %v3045
        %v3469 = vsel %vm1947, %v3461, %v3047
        %v3470 = vsel %vm1947, %v3462, %v3049
        %v3471 = vsel %vm1947, %v3463, %v3051
        %v3472 = vsel %vm1947, %v3464, %v3053
        %v3473 = vsel %vm1947, %v3465, %v3055
        %v3474 = vsel %vm1947, %v3466, %v3057
        %v3475 = vsel %vm1947, %v3467, %v3059
        %v3476 = vsel %vm2013, %v3468, %v3077
        %v3477 = vsel %vm2013, %v3469, %v3079
        %v3478 = vsel %vm2013, %v3470, %v3081
        %v3479 = vsel %vm2013, %v3471, %v3083
        %v3480 = vsel %vm2013, %v3472, %v3085
        %v3481 = vsel %vm2013, %v3473, %v3087
        %v3482 = vsel %vm2013, %v3474, %v3089
        %v3483 = vsel %vm2013, %v3475, %v3091
        %vm3484 = vcmask 326656
        %v3485 = vsel %vm3484, %v3476, %v3109
        %v3486 = vsel %vm3484, %v3477, %v3111
        %v3487 = vsel %vm3484, %v3478, %v3113
        %v3488 = vsel %vm3484, %v3479, %v3115
        %v3489 = vsel %vm3484, %v3480, %v3117
        %v3490 = vsel %vm3484, %v3481, %v3119
        %v3491 = vsel %vm3484, %v3482, %v3121
        %v3492 = vsel %vm3484, %v3483, %v3123
        %vm3493 = vcmask 392192
        %v3494 = vsel %vm3493, %v3485, %v3141
        %v3495 = vsel %vm3493, %v3486, %v3143
        %v3496 = vsel %vm3493, %v3487, %v3145
        %v3497 = vsel %vm3493, %v3488, %v3147
        %v3498 = vsel %vm3493, %v3489, %v3149
        %v3499 = vsel %vm3493, %v3490, %v3151
        %v3500 = vsel %vm3493, %v3491, %v3153
        %v3501 = vsel %vm3493, %v3492, %v3155
        %vm3502 = vcmask 457728
        %v3503 = vsel %vm3502, %v3494, %v3173
        %v3504 = vsel %vm3502, %v3495, %v3175
        %v3505 = vsel %vm3502, %v3496, %v3177
        %v3506 = vsel %vm3502, %v3497, %v3179
        %v3507 = vsel %vm3502, %v3498, %v3181
        %v3508 = vsel %vm3502, %v3499, %v3183
        %v3509 = vsel %vm3502, %v3500, %v3185
        %v3510 = vsel %vm3502, %v3501, %v3187
        %vm3511 = vcmask 523264
        %v3512 = vsel %vm3511, %v3503, %v3205
        %v3513 = vsel %vm3511, %v3504, %v3207
        %v3514 = vsel %vm3511, %v3505, %v3209
        %v3515 = vsel %vm3511, %v3506, %v3211
        %v3516 = vsel %vm3511, %v3507, %v3213
        %v3517 = vsel %vm3511, %v3508, %v3215
        %v3518 = vsel %vm3511, %v3509, %v3217
        %v3519 = vsel %vm3511, %v3510, %v3219
        %vm3520 = vcmask 588800
        %v3521 = vsel %vm3520, %v3512, %v3237
        %v3522 = vsel %vm3520, %v3513, %v3239
        %v3523 = vsel %vm3520, %v3514, %v3241
        %v3524 = vsel %vm3520, %v3515, %v3243
        %v3525 = vsel %vm3520, %v3516, %v3245
        %v3526 = vsel %vm3520, %v3517, %v3247
        %v3527 = vsel %vm3520, %v3518, %v3249
        %v3528 = vsel %vm3520, %v3519, %v3251
        %vm3529 = vcmask 654336
        %v3530 = vsel %vm3529, %v3521, %v3269
        %v3531 = vsel %vm3529, %v3522, %v3271
        %v3532 = vsel %vm3529, %v3523, %v3273
        %v3533 = vsel %vm3529, %v3524, %v3275
        %v3534 = vsel %vm3529, %v3525, %v3277
        %v3535 = vsel %vm3529, %v3526, %v3279
        %v3536 = vsel %vm3529, %v3527, %v3281
        %v3537 = vsel %vm3529, %v3528, %v3283
        %vm3538 = vcmask 719872
        %v3539 = vsel %vm3538, %v3530, %v3301
        %v3540 = vsel %vm3538, %v3531, %v3303
        %v3541 = vsel %vm3538, %v3532, %v3305
        %v3542 = vsel %vm3538, %v3533, %v3307
        %v3543 = vsel %vm3538, %v3534, %v3309
        %v3544 = vsel %vm3538, %v3535, %v3311
        %v3545 = vsel %vm3538, %v3536, %v3313
        %v3546 = vsel %vm3538, %v3537, %v3315
        %vm3547 = vcmask 785408
        %v3548 = vsel %vm3547, %v3539, %v3333
        %v3549 = vsel %vm3547, %v3540, %v3335
        %v3550 = vsel %vm3547, %v3541, %v3337
        %v3551 = vsel %vm3547, %v3542, %v3339
        %v3552 = vsel %vm3547, %v3543, %v3341
        %v3553 = vsel %vm3547, %v3544, %v3343
        %v3554 = vsel %vm3547, %v3545, %v3345
        %v3555 = vsel %vm3547, %v3546, %v3347
        %vm3556 = vcmask 850944
        %v3557 = vsel %vm3556, %v3548, %v3365
        %v3558 = vsel %vm3556, %v3549, %v3367
        %v3559 = vsel %vm3556, %v3550, %v3369
        %v3560 = vsel %vm3556, %v3551, %v3371
        %v3561 = vsel %vm3556, %v3552, %v3373
        %v3562 = vsel %vm3556, %v3553, %v3375
        %v3563 = vsel %vm3556, %v3554, %v3377
        %v3564 = vsel %vm3556, %v3555, %v3379
        %vm3565 = vcmask 916480
        %v3566 = vsel %vm3565, %v3557, %v3397
        %v3567 = vsel %vm3565, %v3558, %v3399
        %v3568 = vsel %vm3565, %v3559, %v3401
        %v3569 = vsel %vm3565, %v3560, %v3403
        %v3570 = vsel %vm3565, %v3561, %v3405
        %v3571 = vsel %vm3565, %v3562, %v3407
        %v3572 = vsel %vm3565, %v3563, %v3409
        %v3573 = vsel %vm3565, %v3564, %v3411
        %vm3574 = vcmask 982016
        %v3575 = vsel %vm3574, %v3566, %v3429
        %v3576 = vsel %vm3574, %v3567, %v3431
        %v3577 = vsel %vm3574, %v3568, %v3433
        %v3578 = vsel %vm3574, %v3569, %v3435
        %v3579 = vsel %vm3574, %v3570, %v3437
        %v3580 = vsel %vm3574, %v3571, %v3439
        %v3581 = vsel %vm3574, %v3572, %v3441
        %v3582 = vsel %vm3574, %v3573, %v3443
        %3591 = vrot.lane.b32.xlu0 %v2845, 8
        %v3592 = vpop.permute.xlu0 %3591
        %3593 = vrot.lane.b32.xlu0 %v2847, 8
        %v3594 = vpop.permute.xlu0 %3593
        %3595 = vrot.lane.b32.xlu0 %v2849, 8
        %v3596 = vpop.permute.xlu0 %3595
        %3597 = vrot.lane.b32.xlu0 %v2851, 8
        %v3598 = vpop.permute.xlu0 %3597
        %3599 = vrot.lane.b32.xlu0 %v2853, 8
        %v3600 = vpop.permute.xlu0 %3599
        %3601 = vrot.lane.b32.xlu0 %v2855, 8
        %v3602 = vpop.permute.xlu0 %3601
        %3603 = vrot.lane.b32.xlu0 %v2857, 8
        %v3604 = vpop.permute.xlu0 %3603
        %3605 = vrot.lane.b32.xlu0 %v2859, 8
        %v3606 = vpop.permute.xlu0 %3605
        %3623 = vrot.lane.b32.xlu0 %v2861, 16
        %v3624 = vpop.permute.xlu0 %3623
        %3625 = vrot.lane.b32.xlu0 %v2863, 16
        %v3626 = vpop.permute.xlu0 %3625
        %3627 = vrot.lane.b32.xlu0 %v2865, 16
        %v3628 = vpop.permute.xlu0 %3627
        %3629 = vrot.lane.b32.xlu0 %v2867, 16
        %v3630 = vpop.permute.xlu0 %3629
        %3631 = vrot.lane.b32.xlu0 %v2869, 16
        %v3632 = vpop.permute.xlu0 %3631
        %3633 = vrot.lane.b32.xlu0 %v2871, 16
        %v3634 = vpop.permute.xlu0 %3633
        %3635 = vrot.lane.b32.xlu0 %v2873, 16
        %v3636 = vpop.permute.xlu0 %3635
        %3637 = vrot.lane.b32.xlu0 %v2875, 16
        %v3638 = vpop.permute.xlu0 %3637
        %3655 = vrot.lane.b32.xlu0 %v2877, 24
        %v3656 = vpop.permute.xlu0 %3655
        %3657 = vrot.lane.b32.xlu0 %v2879, 24
        %v3658 = vpop.permute.xlu0 %3657
        %3659 = vrot.lane.b32.xlu0 %v2881, 24
        %v3660 = vpop.permute.xlu0 %3659
        %3661 = vrot.lane.b32.xlu0 %v2883, 24
        %v3662 = vpop.permute.xlu0 %3661
        %3663 = vrot.lane.b32.xlu0 %v2885, 24
        %v3664 = vpop.permute.xlu0 %3663
        %3665 = vrot.lane.b32.xlu0 %v2887, 24
        %v3666 = vpop.permute.xlu0 %3665
        %3667 = vrot.lane.b32.xlu0 %v2889, 24
        %v3668 = vpop.permute.xlu0 %3667
        %3669 = vrot.lane.b32.xlu0 %v2891, 24
        %v3670 = vpop.permute.xlu0 %3669
        %3687 = vrot.lane.b32.xlu0 %v2893, 32
        %v3688 = vpop.permute.xlu0 %3687
        %3689 = vrot.lane.b32.xlu0 %v2895, 32
        %v3690 = vpop.permute.xlu0 %3689
        %3691 = vrot.lane.b32.xlu0 %v2897, 32
        %v3692 = vpop.permute.xlu0 %3691
        %3693 = vrot.lane.b32.xlu0 %v2899, 32
        %v3694 = vpop.permute.xlu0 %3693
        %3695 = vrot.lane.b32.xlu0 %v2901, 32
        %v3696 = vpop.permute.xlu0 %3695
        %3697 = vrot.lane.b32.xlu0 %v2903, 32
        %v3698 = vpop.permute.xlu0 %3697
        %3699 = vrot.lane.b32.xlu0 %v2905, 32
        %v3700 = vpop.permute.xlu0 %3699
        %3701 = vrot.lane.b32.xlu0 %v2907, 32
        %v3702 = vpop.permute.xlu0 %3701
        %3719 = vrot.lane.b32.xlu0 %v2909, 40
        %v3720 = vpop.permute.xlu0 %3719
        %3721 = vrot.lane.b32.xlu0 %v2911, 40
        %v3722 = vpop.permute.xlu0 %3721
        %3723 = vrot.lane.b32.xlu0 %v2913, 40
        %v3724 = vpop.permute.xlu0 %3723
        %3725 = vrot.lane.b32.xlu0 %v2915, 40
        %v3726 = vpop.permute.xlu0 %3725
        %3727 = vrot.lane.b32.xlu0 %v2917, 40
        %v3728 = vpop.permute.xlu0 %3727
        %3729 = vrot.lane.b32.xlu0 %v2919, 40
        %v3730 = vpop.permute.xlu0 %3729
        %3731 = vrot.lane.b32.xlu0 %v2921, 40
        %v3732 = vpop.permute.xlu0 %3731
        %3733 = vrot.lane.b32.xlu0 %v2923, 40
        %v3734 = vpop.permute.xlu0 %3733
        %3751 = vrot.lane.b32.xlu0 %v2925, 48
        %v3752 = vpop.permute.xlu0 %3751
        %3753 = vrot.lane.b32.xlu0 %v2927, 48
        %v3754 = vpop.permute.xlu0 %3753
        %3755 = vrot.lane.b32.xlu0 %v2929, 48
        %v3756 = vpop.permute.xlu0 %3755
        %3757 = vrot.lane.b32.xlu0 %v2931, 48
        %v3758 = vpop.permute.xlu0 %3757
        %3759 = vrot.lane.b32.xlu0 %v2933, 48
        %v3760 = vpop.permute.xlu0 %3759
        %3761 = vrot.lane.b32.xlu0 %v2935, 48
        %v3762 = vpop.permute.xlu0 %3761
        %3763 = vrot.lane.b32.xlu0 %v2937, 48
        %v3764 = vpop.permute.xlu0 %3763
        %3765 = vrot.lane.b32.xlu0 %v2939, 48
        %v3766 = vpop.permute.xlu0 %3765
        %3783 = vrot.lane.b32.xlu0 %v2941, 56
        %v3784 = vpop.permute.xlu0 %3783
        %3785 = vrot.lane.b32.xlu0 %v2943, 56
        %v3786 = vpop.permute.xlu0 %3785
        %3787 = vrot.lane.b32.xlu0 %v2945, 56
        %v3788 = vpop.permute.xlu0 %3787
        %3789 = vrot.lane.b32.xlu0 %v2947, 56
        %v3790 = vpop.permute.xlu0 %3789
        %3791 = vrot.lane.b32.xlu0 %v2949, 56
        %v3792 = vpop.permute.xlu0 %3791
        %3793 = vrot.lane.b32.xlu0 %v2951, 56
        %v3794 = vpop.permute.xlu0 %3793
        %3795 = vrot.lane.b32.xlu0 %v2953, 56
        %v3796 = vpop.permute.xlu0 %3795
        %3797 = vrot.lane.b32.xlu0 %v2955, 56
        %v3798 = vpop.permute.xlu0 %3797
        %3815 = vrot.lane.b32.xlu0 %v2957, 64
        %v3816 = vpop.permute.xlu0 %3815
        %3817 = vrot.lane.b32.xlu0 %v2959, 64
        %v3818 = vpop.permute.xlu0 %3817
        %3819 = vrot.lane.b32.xlu0 %v2961, 64
        %v3820 = vpop.permute.xlu0 %3819
        %3821 = vrot.lane.b32.xlu0 %v2963, 64
        %v3822 = vpop.permute.xlu0 %3821
        %3823 = vrot.lane.b32.xlu0 %v2965, 64
        %v3824 = vpop.permute.xlu0 %3823
        %3825 = vrot.lane.b32.xlu0 %v2967, 64
        %v3826 = vpop.permute.xlu0 %3825
        %3827 = vrot.lane.b32.xlu0 %v2969, 64
        %v3828 = vpop.permute.xlu0 %3827
        %3829 = vrot.lane.b32.xlu0 %v2971, 64
        %v3830 = vpop.permute.xlu0 %3829
        %v3839 = vsel %vm1815, %v2829, %v3592
        %v3840 = vsel %vm1815, %v2831, %v3594
        %v3841 = vsel %vm1815, %v2833, %v3596
        %v3842 = vsel %vm1815, %v2835, %v3598
        %v3843 = vsel %vm1815, %v2837, %v3600
        %v3844 = vsel %vm1815, %v2839, %v3602
        %v3845 = vsel %vm1815, %v2841, %v3604
        %v3846 = vsel %vm1815, %v2843, %v3606
        %v3847 = vsel %vm1881, %v3839, %v3624
        %v3848 = vsel %vm1881, %v3840, %v3626
        %v3849 = vsel %vm1881, %v3841, %v3628
        %v3850 = vsel %vm1881, %v3842, %v3630
        %v3851 = vsel %vm1881, %v3843, %v3632
        %v3852 = vsel %vm1881, %v3844, %v3634
        %v3853 = vsel %vm1881, %v3845, %v3636
        %v3854 = vsel %vm1881, %v3846, %v3638
        %v3855 = vsel %vm1947, %v3847, %v3656
        %v3856 = vsel %vm1947, %v3848, %v3658
        %v3857 = vsel %vm1947, %v3849, %v3660
        %v3858 = vsel %vm1947, %v3850, %v3662
        %v3859 = vsel %vm1947, %v3851, %v3664
        %v3860 = vsel %vm1947, %v3852, %v3666
        %v3861 = vsel %vm1947, %v3853, %v3668
        %v3862 = vsel %vm1947, %v3854, %v3670
        %v3863 = vsel %vm2013, %v3855, %v3688
        %v3864 = vsel %vm2013, %v3856, %v3690
        %v3865 = vsel %vm2013, %v3857, %v3692
        %v3866 = vsel %vm2013, %v3858, %v3694
        %v3867 = vsel %vm2013, %v3859, %v3696
        %v3868 = vsel %vm2013, %v3860, %v3698
        %v3869 = vsel %vm2013, %v3861, %v3700
        %v3870 = vsel %vm2013, %v3862, %v3702
        %v3871 = vsel %vm3484, %v3863, %v3720
        %v3872 = vsel %vm3484, %v3864, %v3722
        %v3873 = vsel %vm3484, %v3865, %v3724
        %v3874 = vsel %vm3484, %v3866, %v3726
        %v3875 = vsel %vm3484, %v3867, %v3728
        %v3876 = vsel %vm3484, %v3868, %v3730
        %v3877 = vsel %vm3484, %v3869, %v3732
        %v3878 = vsel %vm3484, %v3870, %v3734
        %v3879 = vsel %vm3493, %v3871, %v3752
        %v3880 = vsel %vm3493, %v3872, %v3754
        %v3881 = vsel %vm3493, %v3873, %v3756
        %v3882 = vsel %vm3493, %v3874, %v3758
        %v3883 = vsel %vm3493, %v3875, %v3760
        %v3884 = vsel %vm3493, %v3876, %v3762
        %v3885 = vsel %vm3493, %v3877, %v3764
        %v3886 = vsel %vm3493, %v3878, %v3766
        %v3887 = vsel %vm3502, %v3879, %v3784
        %v3888 = vsel %vm3502, %v3880, %v3786
        %v3889 = vsel %vm3502, %v3881, %v3788
        %v3890 = vsel %vm3502, %v3882, %v3790
        %v3891 = vsel %vm3502, %v3883, %v3792
        %v3892 = vsel %vm3502, %v3884, %v3794
        %v3893 = vsel %vm3502, %v3885, %v3796
        %v3894 = vsel %vm3502, %v3886, %v3798
        %v3895 = vsel %vm3511, %v3887, %v3816
        %v3896 = vsel %vm3511, %v3888, %v3818
        %v3897 = vsel %vm3511, %v3889, %v3820
        %v3898 = vsel %vm3511, %v3890, %v3822
        %v3899 = vsel %vm3511, %v3891, %v3824
        %v3900 = vsel %vm3511, %v3892, %v3826
        %v3901 = vsel %vm3511, %v3893, %v3828
        %v3902 = vsel %vm3511, %v3894, %v3830
        %v3903 = vld [vmem:[%s3] sm:$0xff]
        %v3904 = vld [vmem:[%s3 + $0x8] sm:$0xff]
        %v3905 = vld [vmem:[%s3 + $0x10] sm:$0xff]
        %v3906 = vld [vmem:[%s3 + $0x18] sm:$0xff]
        %v3907 = vld [vmem:[%s3 + $0x20] sm:$0xff]
        %v3908 = vld [vmem:[%s3 + $0x28] sm:$0xff]
        %v3909 = vld [vmem:[%s3 + $0x30] sm:$0xff]
        %v3910 = vld [vmem:[%s3 + $0x38] sm:$0xff]
        %v3911 = vld [vmem:[%s3 + $0x40] sm:$0xff]
        %v3912 = vld [vmem:[%s3 + $0x48] sm:$0xff]
        %v3913 = vld [vmem:[%s3 + $0x50] sm:$0xff]
        %v3914 = vld [vmem:[%s3 + $0x58] sm:$0xff]
        %v3915 = vld [vmem:[%s3 + $0x60] sm:$0xff]
        %v3916 = vld [vmem:[%s3 + $0x68] sm:$0xff]
        %v3917 = vld [vmem:[%s3 + $0x70] sm:$0xff]
        %v3918 = vld [vmem:[%s3 + $0x78] sm:$0xff]
        %v3919 = vld [vmem:[%s3 + $0x80] sm:$0xff]
        %v3920 = vld [vmem:[%s3 + $0x88] sm:$0xff]
        %v3921 = vld [vmem:[%s3 + $0x90] sm:$0xff]
        %v3922 = vld [vmem:[%s3 + $0x98] sm:$0xff]
        %v3923 = vld [vmem:[%s3 + $0xa0] sm:$0xff]
        %v3924 = vld [vmem:[%s3 + $0xa8] sm:$0xff]
        %v3925 = vld [vmem:[%s3 + $0xb0] sm:$0xff]
        %v3926 = vld [vmem:[%s3 + $0xb8] sm:$0xff]
        %v3927 = vld [vmem:[%s3 + $0xc0] sm:$0xff]
        %v3928 = vld [vmem:[%s4] sm:$0x1]
        %v3930 = vlaneseq
        %v3931 = vshrl.u32 %v3930, 7
        %v3932 = vsub.s32 0, %v3931
        %v3933 = vrot.slane %v3928, %v3932
        %v3936 = vsel %vm3520, %v3895, 0
        %v3939 = vsel %vm3520, %v3896, 0
        %v3942 = vsel %vm3520, %v3897, 0
        %v3945 = vsel %vm3520, %v3898, 0
        %v3948 = vsel %vm3520, %v3899, 0
        %v3951 = vsel %vm3520, %v3900, 0
        %v3954 = vsel %vm3520, %v3901, 0
        %v3957 = vsel %vm3520, %v3902, 0
        %3959 = vmatprep.subr.mxu0 0.0
        %3960 = vmatpush1.msra.mxu0 %v3903
        %3961 = vmatprep.subr.mxu0 0.0
        %3962 = vmatpush1.msra.mxu0 %v3904
        %3963 = vmatprep.subr.mxu0 0.0
        %3964 = vmatpush1.msra.mxu0 %v3905
        %3965 = vmatprep.subr.mxu0 0.0
        %3966 = vmatpush1.msra.mxu0 %v3906
        %3967 = vmatprep.subr.mxu0 0.0
        %3968 = vmatpush1.msra.mxu0 %v3907
        %3969 = vmatprep.subr.mxu0 0.0
        %3970 = vmatpush1.msra.mxu0 %v3908
        %3971 = vmatprep.subr.mxu0 0.0
        %3972 = vmatpush1.msra.mxu0 %v3909
        %3973 = vmatprep.subr.mxu0 0.0
        %3974 = vmatpush1.msra.mxu0 %v3910
        %3975 = vmatprep.subr.mxu0 0.0
        %3976 = vmatpush1.msra.mxu0 %v3911
        %3977 = vmatprep.subr.mxu0 0.0
        %3978 = vmatpush1.msra.mxu0 %v3912
        %3979 = vmatprep.subr.mxu0 0.0
        %3980 = vmatpush1.msra.mxu0 %v3913
        %3981 = vmatprep.subr.mxu0 0.0
        %3982 = vmatpush1.msra.mxu0 %v3914
        %3983 = vmatprep.subr.mxu0 0.0
        %3984 = vmatpush1.msra.mxu0 %v3915
        %3985 = vmatprep.subr.mxu0 0.0
        %3986 = vmatpush1.msra.mxu0 %v3916
        %3987 = vmatprep.subr.mxu0 0.0
        %3988 = vmatpush1.msra.mxu0 %v3917
        %3989 = vmatprep.subr.mxu0 0.0
        %3990 = vmatpush1.msra.mxu0 %v3918
        %3991 = vmatprep.subr.mxu0 0.0
        %3992 = vmatpush1.msra.mxu0 %v3919
        %3993 = vmatprep.subr.mxu0 0.0
        %3994 = vmatpush1.msra.mxu0 %v3920
        %3995 = vmatprep.subr.mxu0 0.0
        %3996 = vmatpush1.msra.mxu0 %v3921
        %3997 = vmatprep.subr.mxu0 0.0
        %3998 = vmatpush1.msra.mxu0 %v3922
        %3999 = vmatprep.subr.mxu0 0.0
        %4000 = vmatpush1.msra.mxu0 %v3923
        %4001 = vmatprep.subr.mxu0 0.0
        %4002 = vmatpush1.msra.mxu0 %v3924
        %4003 = vmatprep.subr.mxu0 0.0
        %4004 = vmatpush1.msra.mxu0 %v3925
        %4005 = vmatprep.subr.mxu0 0.0
        %4006 = vmatpush1.msra.mxu0 %v3926
        %4007 = vmatprep.subr.mxu0 0.0
        %4008 = vmatpush1.msra.mxu0 %v3927
        %4009 = vmatprep.subr.mxu0 0.0
        %4010 = vmatpush1.msra.mxu0 0.0
        %4011 = vmatprep.subr.mxu0 0.0
        %4012 = vmatpush1.msra.mxu0 0.0
        %4013 = vmatprep.subr.mxu0 0.0
        %4014 = vmatpush1.msra.mxu0 0.0
        %4015 = vmatprep.subr.mxu0 0.0
        %4016 = vmatpush1.msra.mxu0 0.0
        %4017 = vmatprep.subr.mxu0 0.0
        %4018 = vmatpush1.msra.mxu0 0.0
        %4019 = vmatprep.subr.mxu0 0.0
        %4020 = vmatpush1.msra.mxu0 0.0
        %4021 = vmatprep.subr.mxu0 0.0
        %4022 = vmatpush1.msra.mxu0 0.0
        %4023 = vmatprep.mubr.f32.mxu0 %v3936
        %4024 = vmatmul.mubr.f32.gmra.mrb[0].mxu0 %v3575
        %v4025 = vpop.f32.mrb[0].mxu0
        %v4026 = vadd.f32 %v3933, %v4025
        %v4027 = vpop.f32.mrb[0].mxu0
        %4028 = vmatprep.mubr.f32.mxu0 %v3939
        %4029 = vmatmul.mubr.f32.gmra.mrb[0].mxu0 %v3576
        %v4030 = vpop.f32.mrb[0].mxu0
        %v4031 = vadd.f32 %v3933, %v4030
        %v4032 = vpop.f32.mrb[0].mxu0
        %4033 = vmatprep.mubr.f32.mxu0 %v3942
        %4034 = vmatmul.mubr.f32.gmra.mrb[0].mxu0 %v3577
        %v4035 = vpop.f32.mrb[0].mxu0
        %v4036 = vadd.f32 %v3933, %v4035
        %v4037 = vpop.f32.mrb[0].mxu0
        %4038 = vmatprep.mubr.f32.mxu0 %v3945
        %4039 = vmatmul.mubr.f32.gmra.mrb[0].mxu0 %v3578
        %v4040 = vpop.f32.mrb[0].mxu0
        %v4041 = vadd.f32 %v3933, %v4040
        %v4042 = vpop.f32.mrb[0].mxu0
        %4043 = vmatprep.mubr.f32.mxu0 %v3948
        %4044 = vmatmul.mubr.f32.gmra.mrb[0].mxu0 %v3579
        %v4045 = vpop.f32.mrb[0].mxu0
        %v4046 = vadd.f32 %v3933, %v4045
        %v4047 = vpop.f32.mrb[0].mxu0
        %4048 = vmatprep.mubr.f32.mxu0 %v3951
        %4049 = vmatmul.mubr.f32.gmra.mrb[0].mxu0 %v3580
        %v4050 = vpop.f32.mrb[0].mxu0
        %v4051 = vadd.f32 %v3933, %v4050
        %v4052 = vpop.f32.mrb[0].mxu0
        %4053 = vmatprep.mubr.f32.mxu0 %v3954
        %4054 = vmatmul.mubr.f32.gmra.mrb[0].mxu0 %v3581
        %v4055 = vpop.f32.mrb[0].mxu0
        %v4056 = vadd.f32 %v3933, %v4055
        %v4057 = vpop.f32.mrb[0].mxu0
        %4058 = vmatprep.mubr.f32.mxu0 %v3957
        %4059 = vmatmul.mubr.f32.gmra.mrb[0].mxu0 %v3582
        %v4060 = vpop.f32.mrb[0].mxu0
        %v4061 = vadd.f32 %v3933, %v4060
        %v4062 = vpop.f32.mrb[0].mxu0
        %4063 = vdwg.mxu0
        %4064 = vst.msk [vmem:[%s329] sm:$0xff] %vm1815, %v4026
        %4065 = vst.msk [vmem:[%s329 + $0x8] sm:$0xff] %vm1815, %v4031
        %4066 = vst.msk [vmem:[%s329 + $0x10] sm:$0xff] %vm1815, %v4036
        %4067 = vst.msk [vmem:[%s329 + $0x18] sm:$0xff] %vm1815, %v4041
        %4068 = vst.msk [vmem:[%s329 + $0x20] sm:$0xff] %vm1815, %v4046
        %4069 = vst.msk [vmem:[%s329 + $0x28] sm:$0xff] %vm1815, %v4051
        %4070 = vst.msk [vmem:[%s329 + $0x30] sm:$0xff] %vm1815, %v4056
        %4071 = vst.msk [vmem:[%s329 + $0x38] sm:$0xff] %vm1815, %v4061
        %v4072 = vsel %vm1815, %v4026, 0.0
        %v4073 = vsel %vm1815, %v4031, 0.0
        %v4074 = vadd.f32 %v4072, %v4073
        %v4075 = vsel %vm1815, %v4036, 0.0
        %v4076 = vadd.f32 %v4074, %v4075
        %v4077 = vsel %vm1815, %v4041, 0.0
        %v4078 = vadd.f32 %v4076, %v4077
        %v4079 = vsel %vm1815, %v4046, 0.0
        %v4080 = vadd.f32 %v4078, %v4079
        %v4081 = vsel %vm1815, %v4051, 0.0
        %v4082 = vadd.f32 %v4080, %v4081
        %v4083 = vsel %vm1815, %v4056, 0.0
        %v4084 = vadd.f32 %v4082, %v4083
        %v4085 = vsel %vm1815, %v4061, 0.0
        %v4086 = vadd.f32 %v4084, %v4085
        %v4087 = vrot.slane %v4086, 4
        %v4088 = vadd.f32 %v4086, %v4087
        %v4089 = vrot.slane %v4088, 2
        %v4090 = vadd.f32 %v4088, %v4089
        %v4091 = vrot.slane %v4090, 1
        %v4092 = vadd.f32 %v4090, %v4091
        %v4093 = vmul.f32 %v4026, %v4026
        %v4094 = vmul.f32 %v4031, %v4031
        %v4095 = vmul.f32 %v4036, %v4036
        %v4096 = vmul.f32 %v4041, %v4041
        %v4097 = vmul.f32 %v4046, %v4046
        %v4098 = vmul.f32 %v4051, %v4051
        %v4099 = vmul.f32 %v4056, %v4056
        %v4100 = vmul.f32 %v4061, %v4061
        %v4101 = vsel %vm1815, %v4093, 0.0
        %v4102 = vsel %vm1815, %v4094, 0.0
        %v4103 = vadd.f32 %v4101, %v4102
        %v4104 = vsel %vm1815, %v4095, 0.0
        %v4105 = vadd.f32 %v4103, %v4104
        %v4106 = vsel %vm1815, %v4096, 0.0
        %v4107 = vadd.f32 %v4105, %v4106
        %v4108 = vsel %vm1815, %v4097, 0.0
        %v4109 = vadd.f32 %v4107, %v4108
        %v4110 = vsel %vm1815, %v4098, 0.0
        %v4111 = vadd.f32 %v4109, %v4110
        %v4112 = vsel %vm1815, %v4099, 0.0
        %v4113 = vadd.f32 %v4111, %v4112
        %v4114 = vsel %vm1815, %v4100, 0.0
        %v4115 = vadd.f32 %v4113, %v4114
        %v4116 = vrot.slane %v4115, 4
        %v4117 = vadd.f32 %v4115, %v4116
        %v4118 = vrot.slane %v4117, 2
        %v4119 = vadd.f32 %v4117, %v4118
        %v4120 = vrot.slane %v4119, 1
        %v4121 = vadd.f32 %v4119, %v4120
        %vm4122 = vcmask 1040384
        %v4123 = vsel %vm4122, %v4092, %v4121
        %vm4124 = vcmask 58368
        %4125 = vst.msk [vmem:[%s343] sm:$0x3] %vm4124, %v4123
        %s4126 = scalar_lea.vmem %s437, 1 [#allocation2]
        %v4127 = vld [vmem:[%s4126] ss:$2 sm:$0xff]
        %s4128 = scalar_lea.vmem %s437, 49 [#allocation2]
        %v4129 = vld [vmem:[%s4128] ss:$2 sm:$0xff]
        %s4130 = scalar_lea.vmem %s437, 97 [#allocation2]
        %v4131 = vld [vmem:[%s4130] ss:$2 sm:$0xff]
        %s4132 = scalar_lea.vmem %s437, 145 [#allocation2]
        %v4133 = vld [vmem:[%s4132] ss:$2 sm:$0xff]
        %s4134 = scalar_lea.vmem %s437, 193 [#allocation2]
        %v4135 = vld [vmem:[%s4134] ss:$2 sm:$0xff]
        %s4136 = scalar_lea.vmem %s437, 241 [#allocation2]
        %v4137 = vld [vmem:[%s4136] ss:$2 sm:$0xff]
        %s4138 = scalar_lea.vmem %s437, 289 [#allocation2]
        %v4139 = vld [vmem:[%s4138] ss:$2 sm:$0xff]
        %s4140 = scalar_lea.vmem %s437, 337 [#allocation2]
        %v4141 = vld [vmem:[%s4140] ss:$2 sm:$0xff]
        %v4142 = vld [vmem:[%s5] sm:$0xf]
        %v4143 = vld [vmem:[%s6] sm:$0x1]
        %v4145 = vlaneseq
        %v4146 = vshrl.u32 %v4145, 7
        %v4147 = vsub.s32 0, %v4146
        %v4148 = vrot.slane %v4143, %v4147
        %v4151 = vsel %vm349, %v4127, 0
        %v4154 = vsel %vm349, %v4129, 0
        %v4157 = vsel %vm349, %v4131, 0
        %v4160 = vsel %vm349, %v4133, 0
        %v4163 = vsel %vm349, %v4135, 0
        %v4166 = vsel %vm349, %v4137, 0
        %v4169 = vsel %vm349, %v4139, 0
        %v4172 = vsel %vm349, %v4141, 0
        %v4175 = vsel %vm2155, %v4142, 0
        %4177 = vmatprep.subr.mxu0 0.0
        %4178 = vmatpush1.msra.mxu0 %v4175
        %4179 = vmatprep.subr.mxu0 0.0
        %4180 = vmatpush1.msra.mxu0 0.0
        %4181 = vmatprep.subr.mxu0 0.0
        %4182 = vmatpush1.msra.mxu0 0.0
        %4183 = vmatprep.subr.mxu0 0.0
        %4184 = vmatpush1.msra.mxu0 0.0
        %4185 = vmatprep.subr.mxu0 0.0
        %4186 = vmatpush1.msra.mxu0 0.0
        %4187 = vmatprep.subr.mxu0 0.0
        %4188 = vmatpush1.msra.mxu0 0.0
        %4189 = vmatprep.subr.mxu0 0.0
        %4190 = vmatpush1.msra.mxu0 0.0
        %4191 = vmatprep.subr.mxu0 0.0
        %4192 = vmatpush1.msra.mxu0 0.0
        %4193 = vmatprep.subr.mxu0 0.0
        %4194 = vmatpush1.msra.mxu0 0.0
        %4195 = vmatprep.subr.mxu0 0.0
        %4196 = vmatpush1.msra.mxu0 0.0
        %4197 = vmatprep.subr.mxu0 0.0
        %4198 = vmatpush1.msra.mxu0 0.0
        %4199 = vmatprep.subr.mxu0 0.0
        %4200 = vmatpush1.msra.mxu0 0.0
        %4201 = vmatprep.subr.mxu0 0.0
        %4202 = vmatpush1.msra.mxu0 0.0
        %4203 = vmatprep.subr.mxu0 0.0
        %4204 = vmatpush1.msra.mxu0 0.0
        %4205 = vmatprep.subr.mxu0 0.0
        %4206 = vmatpush1.msra.mxu0 0.0
        %4207 = vmatprep.subr.mxu0 0.0
        %4208 = vmatpush1.msra.mxu0 0.0
        %4209 = vmatprep.subr.mxu0 0.0
        %4210 = vmatpush1.msra.mxu0 0.0
        %4211 = vmatprep.subr.mxu0 0.0
        %4212 = vmatpush1.msra.mxu0 0.0
        %4213 = vmatprep.subr.mxu0 0.0
        %4214 = vmatpush1.msra.mxu0 0.0
        %4215 = vmatprep.subr.mxu0 0.0
        %4216 = vmatpush1.msra.mxu0 0.0
        %4217 = vmatprep.subr.mxu0 0.0
        %4218 = vmatpush1.msra.mxu0 0.0
        %4219 = vmatprep.subr.mxu0 0.0
        %4220 = vmatpush1.msra.mxu0 0.0
        %4221 = vmatprep.subr.mxu0 0.0
        %4222 = vmatpush1.msra.mxu0 0.0
        %4223 = vmatprep.subr.mxu0 0.0
        %4224 = vmatpush1.msra.mxu0 0.0
        %4225 = vmatprep.subr.mxu0 0.0
        %4226 = vmatpush1.msra.mxu0 0.0
        %4227 = vmatprep.subr.mxu0 0.0
        %4228 = vmatpush1.msra.mxu0 0.0
        %4229 = vmatprep.subr.mxu0 0.0
        %4230 = vmatpush1.msra.mxu0 0.0
        %4231 = vmatprep.subr.mxu0 0.0
        %4232 = vmatpush1.msra.mxu0 0.0
        %4233 = vmatprep.subr.mxu0 0.0
        %4234 = vmatpush1.msra.mxu0 0.0
        %4235 = vmatprep.subr.mxu0 0.0
        %4236 = vmatpush1.msra.mxu0 0.0
        %4237 = vmatprep.subr.mxu0 0.0
        %4238 = vmatpush1.msra.mxu0 0.0
        %4239 = vmatprep.subr.mxu0 0.0
        %4240 = vmatpush1.msra.mxu0 0.0
        %4241 = vmatprep.mubr.f32.mxu0 0.0
        %4242 = vmatmul.mubr.f32.gmra.mrb[0].mxu0 %v4151
        %v4243 = vpop.f32.mrb[0].mxu0
        %v4244 = vadd.f32 %v4148, %v4243
        %v4245 = vpop.f32.mrb[0].mxu0
        %4246 = vmatprep.mubr.f32.mxu0 0.0
        %4247 = vmatmul.mubr.f32.gmra.mrb[0].mxu0 %v4154
        %v4248 = vpop.f32.mrb[0].mxu0
        %v4249 = vadd.f32 %v4148, %v4248
        %v4250 = vpop.f32.mrb[0].mxu0
        %4251 = vmatprep.mubr.f32.mxu0 0.0
        %4252 = vmatmul.mubr.f32.gmra.mrb[0].mxu0 %v4157
        %v4253 = vpop.f32.mrb[0].mxu0
        %v4254 = vadd.f32 %v4148, %v4253
        %v4255 = vpop.f32.mrb[0].mxu0
        %4256 = vmatprep.mubr.f32.mxu0 0.0
        %4257 = vmatmul.mubr.f32.gmra.mrb[0].mxu0 %v4160
        %v4258 = vpop.f32.mrb[0].mxu0
        %v4259 = vadd.f32 %v4148, %v4258
        %v4260 = vpop.f32.mrb[0].mxu0
        %4261 = vmatprep.mubr.f32.mxu0 0.0
        %4262 = vmatmul.mubr.f32.gmra.mrb[0].mxu0 %v4163
        %v4263 = vpop.f32.mrb[0].mxu0
        %v4264 = vadd.f32 %v4148, %v4263
        %v4265 = vpop.f32.mrb[0].mxu0
        %4266 = vmatprep.mubr.f32.mxu0 0.0
        %4267 = vmatmul.mubr.f32.gmra.mrb[0].mxu0 %v4166
        %v4268 = vpop.f32.mrb[0].mxu0
        %v4269 = vadd.f32 %v4148, %v4268
        %v4270 = vpop.f32.mrb[0].mxu0
        %4271 = vmatprep.mubr.f32.mxu0 0.0
        %4272 = vmatmul.mubr.f32.gmra.mrb[0].mxu0 %v4169
        %v4273 = vpop.f32.mrb[0].mxu0
        %v4274 = vadd.f32 %v4148, %v4273
        %v4275 = vpop.f32.mrb[0].mxu0
        %4276 = vmatprep.mubr.f32.mxu0 0.0
        %4277 = vmatmul.mubr.f32.gmra.mrb[0].mxu0 %v4172
        %v4278 = vpop.f32.mrb[0].mxu0
        %v4279 = vadd.f32 %v4148, %v4278
        %v4280 = vpop.f32.mrb[0].mxu0
        %4281 = vdwg.mxu0
        %4282 = vst.msk [vmem:[%s336] sm:$0xff] %vm1815, %v4244
        %4283 = vst.msk [vmem:[%s336 + $0x8] sm:$0xff] %vm1815, %v4249
        %4284 = vst.msk [vmem:[%s336 + $0x10] sm:$0xff] %vm1815, %v4254
        %4285 = vst.msk [vmem:[%s336 + $0x18] sm:$0xff] %vm1815, %v4259
        %4286 = vst.msk [vmem:[%s336 + $0x20] sm:$0xff] %vm1815, %v4264
        %4287 = vst.msk [vmem:[%s336 + $0x28] sm:$0xff] %vm1815, %v4269
        %4288 = vst.msk [vmem:[%s336 + $0x30] sm:$0xff] %vm1815, %v4274
        %4289 = vst.msk [vmem:[%s336 + $0x38] sm:$0xff] %vm1815, %v4279
        %s4290 = sand.u32 %s187, 1
        %s4291 = scalar_lea.sflag [#allocation5], %s4290
        %s4292 = sand.u32 %s187, 1
        %s4293 = smul.addr %s4292, 64
        %s4294 = scalar_lea.vmem [#allocation4], %s4293
        %s4295 = sand.u32 %s27, 1
        %s4296 = scalar_lea.sflag [#allocation7], %s4295
        %s4297 = sand.u32 %s213, 1
        %s4298 = smul.addr %s4297, 64
        %s4299 = scalar_lea.vmem [#allocation6], %s4298
        %s4300 = sand.u32 %s27, 1
        %s4301 = scalar_lea.sflag [#allocation7], %s4300
        %s4302 = sand.u32 %s239, 1
        %s4303 = smul.addr %s4302, 2
        %s4304 = scalar_lea.vmem [#allocation8], %s4303
        // Predicated region
        $region49: #{tpu_custom_call.1} parent=47 // pred_check
          %p4305 = pneg %p197
        $region50: #{tpu_custom_call.1} parent=47 // pred_check_branch
          %4307 = sbr.rel (%p4305) target = $region52
        $region51: #{tpu_custom_call.1} parent=47 // pred_region
          %s4309 = ssub.s32 1024, 1024
          %4310 = vsyncadd %s4291, %s4309
          %s4311 = smul.addr %s27, 8
          %s4312 = smul.addr %s4311, 128
          %s4313 = scalar_lea.hbm %s7, %s4312
          %s4314 = sshll.u32 %s4294, 4
          %s4315 = int_to_ptr.vmem [resolvable:$true] %s4314
          %4320 = dma.vmem_to_hbm [thread:$0]  %s4315, 1024, %s4313, %s4291, 128, 128, 8
        $region52: #{tpu_custom_call.1} parent=47 // pred_fallthru
          _
        // Predicated region
        $region53: #{tpu_custom_call.1} parent=47 // pred_check
          %p4321 = pneg %p223
        $region54: #{tpu_custom_call.1} parent=47 // pred_check_branch
          %4323 = sbr.rel (%p4321) target = $region56
        $region55: #{tpu_custom_call.1} parent=47 // pred_region
          %s4325 = ssub.s32 1024, 1024
          %4326 = vsyncadd %s4296, %s4325
          %s4327 = smul.addr %s27, 8
          %s4328 = smul.addr %s4327, 128
          %s4329 = scalar_lea.hbm %s8, %s4328
          %s4330 = sshll.u32 %s4299, 4
          %s4331 = int_to_ptr.vmem [resolvable:$true] %s4330
          %4336 = dma.vmem_to_hbm [thread:$0]  %s4331, 1024, %s4329, %s4296, 128, 128, 8
        $region56: #{tpu_custom_call.1} parent=47 // pred_fallthru
          _
        // Predicated region
        $region57: #{tpu_custom_call.1} parent=47 // pred_check
          %p4337 = pneg %p249
        $region58: #{tpu_custom_call.1} parent=47 // pred_check_branch
          %4339 = sbr.rel (%p4337) target = $region60
        $region59: #{tpu_custom_call.1} parent=47 // pred_region
          %s4341 = ssub.s32 32, 32
          %4342 = vsyncadd %s4301, %s4341
          %s4343 = smul.addr %s27, 32
          %s4344 = scalar_lea.hbm %s9, %s4343
          %s4346 = sshll.u32 %s4304, 4
          %s4347 = int_to_ptr.vmem [resolvable:$true] %s4346
          %4349 = dma.vmem_to_hbm [thread:$0]  %s4347, 32, %s4344, %s4301
        $region60: #{tpu_custom_call.1} parent=47 // pred_fallthru
          _
      $region48: #{tpu_custom_call.1} parent=5 // pred_fallthru
        _
      %p4350 = scmp.le.s32.totalorder 2, %s22
      // Predicated region
      $region61: #{tpu_custom_call.1} parent=5 // pred_check
        %p4351 = pneg %p4350
      $region62: #{tpu_custom_call.1} parent=5 // pred_check_branch
        %4353 = sbr.rel (%p4351) target = $region64
      $region63: #{tpu_custom_call.1} parent=5 // pred_region
        %s4354 = ssub.s32 %s22, 2
        // Predicated region
        $region65: #{tpu_custom_call.1} parent=63 // pred_check
          %p4355 = pneg %p203
        $region66: #{tpu_custom_call.1} parent=63 // pred_check_branch
          %4357 = sbr.rel (%p4355) target = $region68
        $region67: #{tpu_custom_call.1} parent=63 // pred_region
          %s4358 = sand.u32 %s188, 1
          %s4359 = scalar_lea.sflag [#allocation5], %s4358
          %s4360 = sand.u32 %s188, 1
          %s4361 = smul.addr %s4360, 64
          %s4362 = scalar_lea.vmem [#allocation4], %s4361
          %4363 = dma.done %s4359, 1024
        $region68: #{tpu_custom_call.1} parent=63 // pred_fallthru
          _
        // Predicated region
        $region69: #{tpu_custom_call.1} parent=63 // pred_check
          %p4364 = pneg %p229
        $region70: #{tpu_custom_call.1} parent=63 // pred_check_branch
          %4366 = sbr.rel (%p4364) target = $region72
        $region71: #{tpu_custom_call.1} parent=63 // pred_region
          %s4367 = sand.u32 %s28, 1
          %s4368 = scalar_lea.sflag [#allocation7], %s4367
          %s4369 = sand.u32 %s214, 1
          %s4370 = smul.addr %s4369, 64
          %s4371 = scalar_lea.vmem [#allocation6], %s4370
          %4372 = dma.done %s4368, 1024
        $region72: #{tpu_custom_call.1} parent=63 // pred_fallthru
          _
        // Predicated region
        $region73: #{tpu_custom_call.1} parent=63 // pred_check
          %p4373 = pneg %p255
        $region74: #{tpu_custom_call.1} parent=63 // pred_check_branch
          %4375 = sbr.rel (%p4373) target = $region76
        $region75: #{tpu_custom_call.1} parent=63 // pred_region
          %s4376 = sand.u32 %s28, 1
          %s4377 = scalar_lea.sflag [#allocation7], %s4376
          %s4378 = sand.u32 %s240, 1
          %s4379 = smul.addr %s4378, 2
          %s4380 = scalar_lea.vmem [#allocation8], %s4379
          %4381 = dma.done %s4377, 32
        $region76: #{tpu_custom_call.1} parent=63 // pred_fallthru
          _
      $region64: #{tpu_custom_call.1} parent=5 // pred_fallthru
        _
    $region6: #{tpu_custom_call.1} parent=1 // loop_footer
      %s26 = sadd.s32 1, %s22
    $region7: #{tpu_custom_call.1} parent=1 // loop_footer_branch
      %21 = sbr.rel target = $region3
    $region8: #{tpu_custom_call.1} parent=1 // loop_exit
      _
    %4382 = vsyncpa [#allocation5], 1
    %s4383 = scalar_lea.sflag [#allocation5], 1
    %4384 = vsyncpa %s4383, 1
    %4385 = vsyncpa [#allocation7], 1
    %s4386 = scalar_lea.sflag [#allocation7], 1
    %4387 = vsyncpa %s4386, 1

</llo_original>
